<compile_context>
chip_gen: v6e
topology: v6e:2x2x1
jax: 0.10.0
libtpu: 0.0.40
codegen_flags: <defaults>
</compile_context>

<pallas_src>
import jax
import jax.numpy as jnp
from jax.experimental import pallas as pl
from jax.experimental.pallas import tpu as pltpu

# ---------------- static configuration ----------------
HIDDEN = 32
LAYERS = 3
NUM_CLASS = 8
EDGE_DIM = 7          # ogbg-ppa edge feature dim
T = 1.0               # temperature
GIN_EPS = 0.0         # learnable eps, initialized to 0
BN_EPS = 1e-5

N_NODES = 128
N_EDGES = 256
N_GRAPHS = 8

EDGE_DIM_PAD = 8                  # contraction dim 7 -> 8 (sublane aligned)
LH_PAD = 128                      # L*H = 96 -> 128 (lane-dense edge-encoder output)
OUT_PAD = 128                     # num_class 8 -> 128 (lane-dense logits store)


def net_kernel(x0_ref, gsrc_ref, sdst_ref, eattr_ref, pool_ref,
               we_ref, be_ref, w1_ref, b1_ref, w2_ref, b2_ref,
               wout_ref, bout_ref, out_ref):
    x = x0_ref[...]          # [N, H]   node embeddings (node_encoder output), f32
    g = gsrc_ref[...]        # [E, N]   one-hot source gather (bf16, exact)
    s = sdst_ref[...]        # [N, E]   one-hot destination scatter-add (bf16, exact)
    p = pool_ref[...]        # [B, N]   one-hot add-pooling (bf16, exact)

    # Edge encoder hoisted out of the layer loop: single [E, 8] @ [8, LH_PAD] matmul.
    e_all = jnp.dot(eattr_ref[...], we_ref[...],
                    preferred_element_type=jnp.float32) + be_ref[...]      # [E, LH_PAD]

    for l in range(LAYERS):  # static unroll
        e_emb = e_all[:, l * HIDDEN:(l + 1) * HIDDEN]                      # [E, H]
        # message: relu(x_src + edge_emb), summed at destination
        x_src = jnp.dot(g, x, preferred_element_type=jnp.float32)          # [E, H]
        msg = jnp.maximum(x_src + e_emb, 0.0)
        aggr = jnp.dot(s, msg, preferred_element_type=jnp.float32)         # [N, H]
        # GIN combine; the (1+eps) multiply is statically elided when eps == 0.
        h = x + aggr if GIN_EPS == 0.0 else (1.0 + GIN_EPS) * x + aggr
        # Linear -> (eval BatchNorm folded into W1/b1 at the wrapper) -> ReLU -> Linear
        h = jnp.dot(h, w1_ref[l], preferred_element_type=jnp.float32) + b1_ref[l]  # [N,2H]
        h = jnp.maximum(h, 0.0)
        x = jnp.dot(h, w2_ref[l], preferred_element_type=jnp.float32) + b2_ref[l]  # [N,H]

    # JK='last'; dropout is a no-op in eval mode. Add-pool then output linear
    # (1/T already folded into Wout/bout; logits lane-padded to OUT_PAD).
    hg = jnp.dot(p, x, preferred_element_type=jnp.float32)                 # [B, H]
    out_ref[...] = jnp.dot(hg, wout_ref[...],
                           preferred_element_type=jnp.float32) + bout_ref[...]


def net_forward(x0, gsrc, sdst, eattr, pool, params):
    L, H, C = LAYERS, HIDDEN, NUM_CLASS
    B = pool.shape[0]

    # ---- wrapper-level folds (zero in-kernel cost) ----
    # (1) eval-mode BatchNorm folded into the first MLP linear.
    scale = params["bng"] * jax.lax.rsqrt(params["bnv"] + BN_EPS)          # [L,1,2H]
    w1f = params["W1"] * scale                                             # [L,H,2H]
    b1f = (params["b1"] - params["bnm"]) * scale + params["bnb"]           # [L,1,2H]
    # (2) edge-encoder weights concatenated over layers; contraction 7 -> 8,
    #     output columns padded to a lane-dense 128.
    we_cat = jnp.transpose(params["We"], (1, 0, 2)).reshape(EDGE_DIM, L * H)
    we_cat = jnp.pad(we_cat, ((0, EDGE_DIM_PAD - EDGE_DIM), (0, LH_PAD - L * H)))
    be_cat = jnp.pad(params["be"].reshape(1, L * H), ((0, 0), (0, LH_PAD - L * H)))
    ea_pad = jnp.pad(eattr, ((0, 0), (0, EDGE_DIM_PAD - EDGE_DIM)))        # [E, 8]
    # (3) temperature folded into the output linear; logits padded lane-dense.
    wout = jnp.zeros((H, OUT_PAD), jnp.float32).at[:, :C].set(params["Wout"] / T)
    bout = jnp.zeros((1, OUT_PAD), jnp.float32).at[:, :C].set(params["bout"] / T)
    # (4) one-hot gather/scatter/pool matrices as bf16 (0/1 exactly representable).
    gsrc = gsrc.astype(jnp.bfloat16)
    sdst = sdst.astype(jnp.bfloat16)
    pool = pool.astype(jnp.bfloat16)

    ins = (x0, gsrc, sdst, ea_pad, pool, we_cat, be_cat, w1f, b1f,
           params["W2"], params["b2"], wout, bout)
    vmem = pl.BlockSpec(memory_space=pltpu.MemorySpace.VMEM)
    out_pad = pl.pallas_call(
        net_kernel,
        out_shape=jax.ShapeDtypeStruct((B, OUT_PAD), jnp.float32),
        in_specs=[vmem] * len(ins),
        out_specs=vmem,
    )(*ins)
    return out_pad[:, :C]


def net_ref(x0, gsrc, sdst, eattr, pool, params):
    """Pure-JAX reference of the ORIGINAL (unfused) forward pass."""
    x = x0
    for l in range(LAYERS):
        e_emb = eattr @ params["We"][l] + params["be"][l]
        msg = jax.nn.relu(gsrc @ x + e_emb)
        aggr = sdst @ msg
        h = (1.0 + GIN_EPS) * x + aggr
        h = h @ params["W1"][l] + params["b1"][l]
        h = (h - params["bnm"][l]) * jax.lax.rsqrt(params["bnv"][l] + BN_EPS) \
            * params["bng"][l] + params["bnb"][l]
        h = jax.nn.relu(h)
        x = h @ params["W2"][l] + params["b2"][l]
    hg = pool @ x
    return (hg @ params["Wout"] + params["bout"]) / T


if __name__ == "__main__":
    key = jax.random.PRNGKey(0)
    ks = jax.random.split(key, 12)
    H, L, C = HIDDEN, LAYERS, NUM_CLASS
    N, E, B = N_NODES, N_EDGES, N_GRAPHS

    # ---- graph data (synthetic, deterministic) ----
    # ogbg-ppa nodes are featureless: node index is always 0 -> Embedding(1, H).
    node_idx = jnp.zeros((N,), jnp.int32)
    emb_weight = 0.1 * jax.random.normal(ks[0], (1, H), jnp.float32)
    x0 = emb_weight[node_idx]                                   # node_encoder(x): [N, H]

    nodes_per_graph = N // B
    e_graph = jax.random.randint(ks[1], (E,), 0, B)             # keep edges intra-graph
    src = e_graph * nodes_per_graph + jax.random.randint(ks[2], (E,), 0, nodes_per_graph)
    dst = e_graph * nodes_per_graph + jax.random.randint(ks[3], (E,), 0, nodes_per_graph)
    edge_attr = jax.random.uniform(ks[4], (E, EDGE_DIM), jnp.float32)
    batch = jnp.repeat(jnp.arange(B, dtype=jnp.int32), nodes_per_graph)

    gsrc = jax.nn.one_hot(src, N, dtype=jnp.float32)            # [E, N]
    sdst = jax.nn.one_hot(dst, N, dtype=jnp.float32).T          # [N, E]
    pool = jax.nn.one_hot(batch, B, dtype=jnp.float32).T        # [B, N]  (add pooling)

    # ---- deterministic parameters (un-fused; folds happen in net_forward) ----
    params = {
        "We":   0.1 * jax.random.normal(ks[5], (L, EDGE_DIM, H), jnp.float32),
        "be":   0.01 * jax.random.normal(ks[6], (L, 1, H), jnp.float32),
        "W1":   0.1 * jax.random.normal(ks[7], (L, H, 2 * H), jnp.float32),
        "b1":   0.01 * jax.random.normal(ks[8], (L, 1, 2 * H), jnp.float32),
        "bng":  1.0 + 0.1 * jax.random.normal(ks[9], (L, 1, 2 * H), jnp.float32),
        "bnb":  0.01 * jax.random.normal(ks[10], (L, 1, 2 * H), jnp.float32),
        "bnm":  0.01 * jax.random.normal(ks[11], (L, 1, 2 * H), jnp.float32),
        "bnv":  jnp.ones((L, 1, 2 * H), jnp.float32),
        "W2":   0.1 * jax.random.normal(ks[5] + 1, (L, 2 * H, H), jnp.float32),
        "b2":   jnp.zeros((L, 1, H), jnp.float32),
        "Wout": 0.1 * jax.random.normal(ks[6] + 1, (H, C), jnp.float32),
        "bout": jnp.zeros((1, C), jnp.float32),
    }

    out = net_forward(x0, gsrc, sdst, edge_attr, pool, params)
    out = jax.block_until_ready(out)

    ref = net_ref(x0, gsrc, sdst, edge_attr, pool, params)
    assert out.shape == (B, C)
    assert jnp.allclose(out, ref, rtol=1e-3, atol=1e-3), "mismatch vs JAX reference"

    print("KERNEL_OK")
</pallas_src>

<mosaic_0001>
module attributes {stable_mosaic.version = 11 : i64} {
  func.func @net_kernel(%arg0: memref<128x32xf32, #tpu.memory_space<vmem>>, %arg1: memref<256x128xbf16, #tpu.memory_space<vmem>>, %arg2: memref<128x256xbf16, #tpu.memory_space<vmem>>, %arg3: memref<256x8xf32, #tpu.memory_space<vmem>>, %arg4: memref<8x128xbf16, #tpu.memory_space<vmem>>, %arg5: memref<8x128xf32, #tpu.memory_space<vmem>>, %arg6: memref<1x128xf32, #tpu.memory_space<vmem>>, %arg7: memref<3x32x64xf32, #tpu.memory_space<vmem>>, %arg8: memref<3x1x64xf32, #tpu.memory_space<vmem>>, %arg9: memref<3x64x32xf32, #tpu.memory_space<vmem>>, %arg10: memref<3x1x32xf32, #tpu.memory_space<vmem>>, %arg11: memref<32x128xf32, #tpu.memory_space<vmem>>, %arg12: memref<1x128xf32, #tpu.memory_space<vmem>>, %arg13: memref<8x128xf32, #tpu.memory_space<vmem>>) attributes {dimension_semantics = [], scalar_prefetch = 0 : i64, scratch_operands = 0 : i64, tpu.core_type = #tpu.core_type<tc>} {
    %c0 = arith.constant 0 : index
    %c0_0 = arith.constant 0 : index
    %0 = vector.load %arg0[%c0, %c0_0] : memref<128x32xf32, #tpu.memory_space<vmem>>, vector<128x32xf32>
    %c0_1 = arith.constant 0 : index
    %c0_2 = arith.constant 0 : index
    %1 = vector.load %arg1[%c0_1, %c0_2] : memref<256x128xbf16, #tpu.memory_space<vmem>>, vector<256x128xbf16>
    %c0_3 = arith.constant 0 : index
    %c0_4 = arith.constant 0 : index
    %2 = vector.load %arg2[%c0_3, %c0_4] : memref<128x256xbf16, #tpu.memory_space<vmem>>, vector<128x256xbf16>
    %c0_5 = arith.constant 0 : index
    %c0_6 = arith.constant 0 : index
    %3 = vector.load %arg4[%c0_5, %c0_6] : memref<8x128xbf16, #tpu.memory_space<vmem>>, vector<8x128xbf16>
    %c0_7 = arith.constant 0 : index
    %c0_8 = arith.constant 0 : index
    %4 = vector.load %arg3[%c0_7, %c0_8] : memref<256x8xf32, #tpu.memory_space<vmem>>, vector<256x8xf32>
    %c0_9 = arith.constant 0 : index
    %c0_10 = arith.constant 0 : index
    %5 = vector.load %arg5[%c0_9, %c0_10] : memref<8x128xf32, #tpu.memory_space<vmem>>, vector<8x128xf32>
    %cst = arith.constant dense<0.000000e+00> : vector<256x128xf32>
    %6 = tpu.matmul %4, %5, %cst {dimension_numbers = #tpu.dot_dimension_numbers<[1], [0], [0], [1], [0, 0, 1, 1], [], []>} : vector<256x8xf32>, vector<8x128xf32>, vector<256x128xf32> -> vector<256x128xf32>
    %c0_11 = arith.constant 0 : index
    %c0_12 = arith.constant 0 : index
    %7 = vector.load %arg6[%c0_11, %c0_12] : memref<1x128xf32, #tpu.memory_space<vmem>>, vector<1x128xf32>
    %8 = vector.broadcast %7 : vector<1x128xf32> to vector<256x128xf32>
    %9 = arith.addf %6, %8 : vector<256x128xf32>
    %10 = vector.extract_strided_slice %9 {offsets = [0, 0], sizes = [256, 32], strides = [1, 1]} : vector<256x128xf32> to vector<256x32xf32>
    %cst_13 = arith.constant dense<0.000000e+00> : vector<256x32xf32>
    %11 = tpu.matmul %1, %0, %cst_13 {dimension_numbers = #tpu.dot_dimension_numbers<[1], [0], [0], [1], [0, 0, 1, 1], [], []>} : vector<256x128xbf16>, vector<128x32xf32>, vector<256x32xf32> -> vector<256x32xf32>
    %12 = arith.addf %11, %10 : vector<256x32xf32>
    %cst_14 = arith.constant 0.000000e+00 : f32
    %13 = vector.broadcast %cst_14 : f32 to vector<256x32xf32>
    %14 = arith.maximumf %12, %13 : vector<256x32xf32>
    %cst_15 = arith.constant dense<0.000000e+00> : vector<128x32xf32>
    %15 = tpu.matmul %2, %14, %cst_15 {dimension_numbers = #tpu.dot_dimension_numbers<[1], [0], [0], [1], [0, 0, 1, 1], [], []>} : vector<128x256xbf16>, vector<256x32xf32>, vector<128x32xf32> -> vector<128x32xf32>
    %16 = arith.addf %0, %15 : vector<128x32xf32>
    %c0_16 = arith.constant 0 : index
    %c0_17 = arith.constant 0 : index
    %c0_18 = arith.constant 0 : index
    %17 = vector.load %arg7[%c0_16, %c0_17, %c0_18] : memref<3x32x64xf32, #tpu.memory_space<vmem>>, vector<1x32x64xf32>
    %18 = vector.shape_cast %17 : vector<1x32x64xf32> to vector<32x64xf32>
    %cst_19 = arith.constant dense<0.000000e+00> : vector<128x64xf32>
    %19 = tpu.matmul %16, %18, %cst_19 {dimension_numbers = #tpu.dot_dimension_numbers<[1], [0], [0], [1], [0, 0, 1, 1], [], []>} : vector<128x32xf32>, vector<32x64xf32>, vector<128x64xf32> -> vector<128x64xf32>
    %c0_20 = arith.constant 0 : index
    %c0_21 = arith.constant 0 : index
    %c0_22 = arith.constant 0 : index
    %20 = vector.load %arg8[%c0_20, %c0_21, %c0_22] : memref<3x1x64xf32, #tpu.memory_space<vmem>>, vector<1x1x64xf32>
    %21 = vector.shape_cast %20 : vector<1x1x64xf32> to vector<1x64xf32>
    %22 = vector.broadcast %21 : vector<1x64xf32> to vector<128x64xf32>
    %23 = arith.addf %19, %22 : vector<128x64xf32>
    %cst_23 = arith.constant 0.000000e+00 : f32
    %24 = vector.broadcast %cst_23 : f32 to vector<128x64xf32>
    %25 = arith.maximumf %23, %24 : vector<128x64xf32>
    %c0_24 = arith.constant 0 : index
    %c0_25 = arith.constant 0 : index
    %c0_26 = arith.constant 0 : index
    %26 = vector.load %arg9[%c0_24, %c0_25, %c0_26] : memref<3x64x32xf32, #tpu.memory_space<vmem>>, vector<1x64x32xf32>
    %27 = vector.shape_cast %26 : vector<1x64x32xf32> to vector<64x32xf32>
    %cst_27 = arith.constant dense<0.000000e+00> : vector<128x32xf32>
    %28 = tpu.matmul %25, %27, %cst_27 {dimension_numbers = #tpu.dot_dimension_numbers<[1], [0], [0], [1], [0, 0, 1, 1], [], []>} : vector<128x64xf32>, vector<64x32xf32>, vector<128x32xf32> -> vector<128x32xf32>
    %c0_28 = arith.constant 0 : index
    %c0_29 = arith.constant 0 : index
    %c0_30 = arith.constant 0 : index
    %29 = vector.load %arg10[%c0_28, %c0_29, %c0_30] : memref<3x1x32xf32, #tpu.memory_space<vmem>>, vector<1x1x32xf32>
    %30 = vector.shape_cast %29 : vector<1x1x32xf32> to vector<1x32xf32>
    %31 = vector.broadcast %30 : vector<1x32xf32> to vector<128x32xf32>
    %32 = arith.addf %28, %31 : vector<128x32xf32>
    %33 = vector.extract_strided_slice %9 {offsets = [0, 32], sizes = [256, 32], strides = [1, 1]} : vector<256x128xf32> to vector<256x32xf32>
    %cst_31 = arith.constant dense<0.000000e+00> : vector<256x32xf32>
    %34 = tpu.matmul %1, %32, %cst_31 {dimension_numbers = #tpu.dot_dimension_numbers<[1], [0], [0], [1], [0, 0, 1, 1], [], []>} : vector<256x128xbf16>, vector<128x32xf32>, vector<256x32xf32> -> vector<256x32xf32>
    %35 = arith.addf %34, %33 : vector<256x32xf32>
    %cst_32 = arith.constant 0.000000e+00 : f32
    %36 = vector.broadcast %cst_32 : f32 to vector<256x32xf32>
    %37 = arith.maximumf %35, %36 : vector<256x32xf32>
    %cst_33 = arith.constant dense<0.000000e+00> : vector<128x32xf32>
    %38 = tpu.matmul %2, %37, %cst_33 {dimension_numbers = #tpu.dot_dimension_numbers<[1], [0], [0], [1], [0, 0, 1, 1], [], []>} : vector<128x256xbf16>, vector<256x32xf32>, vector<128x32xf32> -> vector<128x32xf32>
    %39 = arith.addf %32, %38 : vector<128x32xf32>
    %c1 = arith.constant 1 : index
    %c0_34 = arith.constant 0 : index
    %c0_35 = arith.constant 0 : index
    %40 = vector.load %arg7[%c1, %c0_34, %c0_35] : memref<3x32x64xf32, #tpu.memory_space<vmem>>, vector<1x32x64xf32>
    %41 = vector.shape_cast %40 : vector<1x32x64xf32> to vector<32x64xf32>
    %cst_36 = arith.constant dense<0.000000e+00> : vector<128x64xf32>
    %42 = tpu.matmul %39, %41, %cst_36 {dimension_numbers = #tpu.dot_dimension_numbers<[1], [0], [0], [1], [0, 0, 1, 1], [], []>} : vector<128x32xf32>, vector<32x64xf32>, vector<128x64xf32> -> vector<128x64xf32>
    %c1_37 = arith.constant 1 : index
    %c0_38 = arith.constant 0 : index
    %c0_39 = arith.constant 0 : index
    %43 = vector.load %arg8[%c1_37, %c0_38, %c0_39] : memref<3x1x64xf32, #tpu.memory_space<vmem>>, vector<1x1x64xf32>
    %44 = vector.shape_cast %43 : vector<1x1x64xf32> to vector<1x64xf32>
    %45 = vector.broadcast %44 : vector<1x64xf32> to vector<128x64xf32>
    %46 = arith.addf %42, %45 : vector<128x64xf32>
    %cst_40 = arith.constant 0.000000e+00 : f32
    %47 = vector.broadcast %cst_40 : f32 to vector<128x64xf32>
    %48 = arith.maximumf %46, %47 : vector<128x64xf32>
    %c1_41 = arith.constant 1 : index
    %c0_42 = arith.constant 0 : index
    %c0_43 = arith.constant 0 : index
    %49 = vector.load %arg9[%c1_41, %c0_42, %c0_43] : memref<3x64x32xf32, #tpu.memory_space<vmem>>, vector<1x64x32xf32>
    %50 = vector.shape_cast %49 : vector<1x64x32xf32> to vector<64x32xf32>
    %cst_44 = arith.constant dense<0.000000e+00> : vector<128x32xf32>
    %51 = tpu.matmul %48, %50, %cst_44 {dimension_numbers = #tpu.dot_dimension_numbers<[1], [0], [0], [1], [0, 0, 1, 1], [], []>} : vector<128x64xf32>, vector<64x32xf32>, vector<128x32xf32> -> vector<128x32xf32>
    %c1_45 = arith.constant 1 : index
    %c0_46 = arith.constant 0 : index
    %c0_47 = arith.constant 0 : index
    %52 = vector.load %arg10[%c1_45, %c0_46, %c0_47] : memref<3x1x32xf32, #tpu.memory_space<vmem>>, vector<1x1x32xf32>
    %53 = vector.shape_cast %52 : vector<1x1x32xf32> to vector<1x32xf32>
    %54 = vector.broadcast %53 : vector<1x32xf32> to vector<128x32xf32>
    %55 = arith.addf %51, %54 : vector<128x32xf32>
    %56 = vector.extract_strided_slice %9 {offsets = [0, 64], sizes = [256, 32], strides = [1, 1]} : vector<256x128xf32> to vector<256x32xf32>
    %cst_48 = arith.constant dense<0.000000e+00> : vector<256x32xf32>
    %57 = tpu.matmul %1, %55, %cst_48 {dimension_numbers = #tpu.dot_dimension_numbers<[1], [0], [0], [1], [0, 0, 1, 1], [], []>} : vector<256x128xbf16>, vector<128x32xf32>, vector<256x32xf32> -> vector<256x32xf32>
    %58 = arith.addf %57, %56 : vector<256x32xf32>
    %cst_49 = arith.constant 0.000000e+00 : f32
    %59 = vector.broadcast %cst_49 : f32 to vector<256x32xf32>
    %60 = arith.maximumf %58, %59 : vector<256x32xf32>
    %cst_50 = arith.constant dense<0.000000e+00> : vector<128x32xf32>
    %61 = tpu.matmul %2, %60, %cst_50 {dimension_numbers = #tpu.dot_dimension_numbers<[1], [0], [0], [1], [0, 0, 1, 1], [], []>} : vector<128x256xbf16>, vector<256x32xf32>, vector<128x32xf32> -> vector<128x32xf32>
    %62 = arith.addf %55, %61 : vector<128x32xf32>
    %c2 = arith.constant 2 : index
    %c0_51 = arith.constant 0 : index
    %c0_52 = arith.constant 0 : index
    %63 = vector.load %arg7[%c2, %c0_51, %c0_52] : memref<3x32x64xf32, #tpu.memory_space<vmem>>, vector<1x32x64xf32>
    %64 = vector.shape_cast %63 : vector<1x32x64xf32> to vector<32x64xf32>
    %cst_53 = arith.constant dense<0.000000e+00> : vector<128x64xf32>
    %65 = tpu.matmul %62, %64, %cst_53 {dimension_numbers = #tpu.dot_dimension_numbers<[1], [0], [0], [1], [0, 0, 1, 1], [], []>} : vector<128x32xf32>, vector<32x64xf32>, vector<128x64xf32> -> vector<128x64xf32>
    %c2_54 = arith.constant 2 : index
    %c0_55 = arith.constant 0 : index
    %c0_56 = arith.constant 0 : index
    %66 = vector.load %arg8[%c2_54, %c0_55, %c0_56] : memref<3x1x64xf32, #tpu.memory_space<vmem>>, vector<1x1x64xf32>
    %67 = vector.shape_cast %66 : vector<1x1x64xf32> to vector<1x64xf32>
    %68 = vector.broadcast %67 : vector<1x64xf32> to vector<128x64xf32>
    %69 = arith.addf %65, %68 : vector<128x64xf32>
    %cst_57 = arith.constant 0.000000e+00 : f32
    %70 = vector.broadcast %cst_57 : f32 to vector<128x64xf32>
    %71 = arith.maximumf %69, %70 : vector<128x64xf32>
    %c2_58 = arith.constant 2 : index
    %c0_59 = arith.constant 0 : index
    %c0_60 = arith.constant 0 : index
    %72 = vector.load %arg9[%c2_58, %c0_59, %c0_60] : memref<3x64x32xf32, #tpu.memory_space<vmem>>, vector<1x64x32xf32>
    %73 = vector.shape_cast %72 : vector<1x64x32xf32> to vector<64x32xf32>
    %cst_61 = arith.constant dense<0.000000e+00> : vector<128x32xf32>
    %74 = tpu.matmul %71, %73, %cst_61 {dimension_numbers = #tpu.dot_dimension_numbers<[1], [0], [0], [1], [0, 0, 1, 1], [], []>} : vector<128x64xf32>, vector<64x32xf32>, vector<128x32xf32> -> vector<128x32xf32>
    %c2_62 = arith.constant 2 : index
    %c0_63 = arith.constant 0 : index
    %c0_64 = arith.constant 0 : index
    %75 = vector.load %arg10[%c2_62, %c0_63, %c0_64] : memref<3x1x32xf32, #tpu.memory_space<vmem>>, vector<1x1x32xf32>
    %76 = vector.shape_cast %75 : vector<1x1x32xf32> to vector<1x32xf32>
    %77 = vector.broadcast %76 : vector<1x32xf32> to vector<128x32xf32>
    %78 = arith.addf %74, %77 : vector<128x32xf32>
    %cst_65 = arith.constant dense<0.000000e+00> : vector<8x32xf32>
    %79 = tpu.matmul %3, %78, %cst_65 {dimension_numbers = #tpu.dot_dimension_numbers<[1], [0], [0], [1], [0, 0, 1, 1], [], []>} : vector<8x128xbf16>, vector<128x32xf32>, vector<8x32xf32> -> vector<8x32xf32>
    %c0_66 = arith.constant 0 : index
    %c0_67 = arith.constant 0 : index
    %80 = vector.load %arg11[%c0_66, %c0_67] : memref<32x128xf32, #tpu.memory_space<vmem>>, vector<32x128xf32>
    %cst_68 = arith.constant dense<0.000000e+00> : vector<8x128xf32>
    %81 = tpu.matmul %79, %80, %cst_68 {dimension_numbers = #tpu.dot_dimension_numbers<[1], [0], [0], [1], [0, 0, 1, 1], [], []>} : vector<8x32xf32>, vector<32x128xf32>, vector<8x128xf32> -> vector<8x128xf32>
    %c0_69 = arith.constant 0 : index
    %c0_70 = arith.constant 0 : index
    %82 = vector.load %arg12[%c0_69, %c0_70] : memref<1x128xf32, #tpu.memory_space<vmem>>, vector<1x128xf32>
    %83 = vector.broadcast %82 : vector<1x128xf32> to vector<8x128xf32>
    %84 = arith.addf %81, %83 : vector<8x128xf32>
    %c0_71 = arith.constant 0 : index
    %c0_72 = arith.constant 0 : index
    %85 = vector.load %arg13[%c0_71, %c0_72] : memref<8x128xf32, #tpu.memory_space<vmem>>, vector<8x128xf32>
    tpu.vector_store %arg13[%c0_71, %c0_72], %84 {strides = array<i32>} : memref<8x128xf32, #tpu.memory_space<vmem>>, vector<8x128xf32>,
    return
  }
}

</mosaic_0001>

<llo_original>
// kernel: tpu_custom_call.1
$region0: #{tpu_custom_call.1}
  #allocation0 [shape = 'u32[]', space=smem, size = 0x4, offset = 0x4, fixed_abs, tag = 'smem constant byte address 0x4 - core index']
  #allocation1 [shape = 'u32[144,128]{1,0:T(1,128)}', space=vmem, size = 0x12000, scoped, tag = 'internal scratch']
  %s0 = inlined_call_operand.vmem [shape: f32[128,32], index: 0, kind: input, shape index: {}]
  %s1 = inlined_call_operand.vmem [shape: bf16[256,128], index: 1, kind: input, shape index: {}]
  %s2 = inlined_call_operand.vmem [shape: bf16[128,256], index: 2, kind: input, shape index: {}]
  %s3 = inlined_call_operand.vmem [shape: f32[256,8], index: 3, kind: input, shape index: {}]
  %s4 = inlined_call_operand.vmem [shape: bf16[8,128], index: 4, kind: input, shape index: {}]
  %s5 = inlined_call_operand.vmem [shape: f32[8,128], index: 5, kind: input, shape index: {}]
  %s6 = inlined_call_operand.vmem [shape: f32[1,128], index: 6, kind: input, shape index: {}]
  %s7 = inlined_call_operand.vmem [shape: f32[3,32,64], index: 7, kind: input, shape index: {}]
  %s8 = inlined_call_operand.vmem [shape: f32[3,1,64], index: 8, kind: input, shape index: {}]
  %s9 = inlined_call_operand.vmem [shape: f32[3,64,32], index: 9, kind: input, shape index: {}]
  %s10 = inlined_call_operand.vmem [shape: f32[3,1,32], index: 10, kind: input, shape index: {}]
  %s11 = inlined_call_operand.vmem [shape: f32[32,128], index: 11, kind: input, shape index: {}]
  %s12 = inlined_call_operand.vmem [shape: f32[1,128], index: 12, kind: input, shape index: {}]
  %s13 = inlined_call_operand.hbm [shape: f32[8,128], index: 13, kind: output, shape index: {}]
  %s14 = sld [smem:[#allocation0]]
  $region62: #{tpu_custom_call.1} parent=0
    _
  %s16 = ssub.s32 1, %s14
  %s17 = scalar_select 0, %s16, %s14
  $region1: #{tpu_custom_call.1} parent=0
    #allocation2 [shape = 'u8[4096]{0}', space=vmem, size = 0x1000, scoped, tag = 'output window, operand 0, single buffered']
    #allocation3 [shape = 's32[1]{0}', space=sflag, size = 0x4, scoped, tag = 'scoped memory for tpu_custom_call.1']
    %18 = vsyncpa [#allocation3], 0
    // Predicated region
    $region2: #{tpu_custom_call.1} parent=1 // pred_check
      _
    $region3: #{tpu_custom_call.1} parent=1 // pred_check_branch
      %20 = sbr.rel (0) target = $region5
    $region4: #{tpu_custom_call.1} parent=1 // pred_region
      _
    $region5: #{tpu_custom_call.1} parent=1 // pred_fallthru
      _
    // Predicated region
    $region6: #{tpu_custom_call.1} parent=1 // pred_check
      _
    $region7: #{tpu_custom_call.1} parent=1 // pred_check_branch
      %22 = sbr.rel (0) target = $region9
    $region8: #{tpu_custom_call.1} parent=1 // pred_region
      _
    $region9: #{tpu_custom_call.1} parent=1 // pred_fallthru
      _
    // Predicated region
    $region10: #{tpu_custom_call.1} parent=1 // pred_check
      _
    $region11: #{tpu_custom_call.1} parent=1 // pred_check_branch
      %24 = sbr.rel (0) target = $region13
    $region12: #{tpu_custom_call.1} parent=1 // pred_region
      _
    $region13: #{tpu_custom_call.1} parent=1 // pred_fallthru
      _
    // Predicated region
    $region14: #{tpu_custom_call.1} parent=1 // pred_check
      _
    $region15: #{tpu_custom_call.1} parent=1 // pred_check_branch
      %26 = sbr.rel (0) target = $region17
    $region16: #{tpu_custom_call.1} parent=1 // pred_region
      _
    $region17: #{tpu_custom_call.1} parent=1 // pred_fallthru
      _
    // Predicated region
    $region18: #{tpu_custom_call.1} parent=1 // pred_check
      _
    $region19: #{tpu_custom_call.1} parent=1 // pred_check_branch
      %28 = sbr.rel (0) target = $region21
    $region20: #{tpu_custom_call.1} parent=1 // pred_region
      _
    $region21: #{tpu_custom_call.1} parent=1 // pred_fallthru
      _
    // Predicated region
    $region22: #{tpu_custom_call.1} parent=1 // pred_check
      _
    $region23: #{tpu_custom_call.1} parent=1 // pred_check_branch
      %30 = sbr.rel (0) target = $region25
    $region24: #{tpu_custom_call.1} parent=1 // pred_region
      _
    $region25: #{tpu_custom_call.1} parent=1 // pred_fallthru
      _
    // Predicated region
    $region26: #{tpu_custom_call.1} parent=1 // pred_check
      _
    $region27: #{tpu_custom_call.1} parent=1 // pred_check_branch
      %32 = sbr.rel (0) target = $region29
    $region28: #{tpu_custom_call.1} parent=1 // pred_region
      _
    $region29: #{tpu_custom_call.1} parent=1 // pred_fallthru
      _
    // Predicated region
    $region30: #{tpu_custom_call.1} parent=1 // pred_check
      _
    $region31: #{tpu_custom_call.1} parent=1 // pred_check_branch
      %34 = sbr.rel (0) target = $region33
    $region32: #{tpu_custom_call.1} parent=1 // pred_region
      _
    $region33: #{tpu_custom_call.1} parent=1 // pred_fallthru
      _
    // Predicated region
    $region34: #{tpu_custom_call.1} parent=1 // pred_check
      _
    $region35: #{tpu_custom_call.1} parent=1 // pred_check_branch
      %36 = sbr.rel (0) target = $region37
    $region36: #{tpu_custom_call.1} parent=1 // pred_region
      _
    $region37: #{tpu_custom_call.1} parent=1 // pred_fallthru
      _
    // Predicated region
    $region38: #{tpu_custom_call.1} parent=1 // pred_check
      _
    $region39: #{tpu_custom_call.1} parent=1 // pred_check_branch
      %38 = sbr.rel (0) target = $region41
    $region40: #{tpu_custom_call.1} parent=1 // pred_region
      _
    $region41: #{tpu_custom_call.1} parent=1 // pred_fallthru
      _
    // Predicated region
    $region42: #{tpu_custom_call.1} parent=1 // pred_check
      _
    $region43: #{tpu_custom_call.1} parent=1 // pred_check_branch
      %40 = sbr.rel (0) target = $region45
    $region44: #{tpu_custom_call.1} parent=1 // pred_region
      _
    $region45: #{tpu_custom_call.1} parent=1 // pred_fallthru
      _
    // Predicated region
    $region46: #{tpu_custom_call.1} parent=1 // pred_check
      _
    $region47: #{tpu_custom_call.1} parent=1 // pred_check_branch
      %42 = sbr.rel (0) target = $region49
    $region48: #{tpu_custom_call.1} parent=1 // pred_region
      _
    $region49: #{tpu_custom_call.1} parent=1 // pred_fallthru
      _
    // Predicated region
    $region50: #{tpu_custom_call.1} parent=1 // pred_check
      _
    $region51: #{tpu_custom_call.1} parent=1 // pred_check_branch
      %44 = sbr.rel (0) target = $region53
    $region52: #{tpu_custom_call.1} parent=1 // pred_region
      _
    $region53: #{tpu_custom_call.1} parent=1 // pred_fallthru
      _
    %v46 = vld [vmem:[%s0] sm:$0xff]
    %v47 = vld [vmem:[%s0 + $0x8] sm:$0xff]
    %v48 = vld [vmem:[%s0 + $0x10] sm:$0xff]
    %v49 = vld [vmem:[%s0 + $0x18] sm:$0xff]
    %v50 = vld [vmem:[%s0 + $0x20] sm:$0xff]
    %v51 = vld [vmem:[%s0 + $0x28] sm:$0xff]
    %v52 = vld [vmem:[%s0 + $0x30] sm:$0xff]
    %v53 = vld [vmem:[%s0 + $0x38] sm:$0xff]
    %v54 = vld [vmem:[%s0 + $0x40] sm:$0xff]
    %v55 = vld [vmem:[%s0 + $0x48] sm:$0xff]
    %v56 = vld [vmem:[%s0 + $0x50] sm:$0xff]
    %v57 = vld [vmem:[%s0 + $0x58] sm:$0xff]
    %v58 = vld [vmem:[%s0 + $0x60] sm:$0xff]
    %v59 = vld [vmem:[%s0 + $0x68] sm:$0xff]
    %v60 = vld [vmem:[%s0 + $0x70] sm:$0xff]
    %v61 = vld [vmem:[%s0 + $0x78] sm:$0xff]
    %v62 = vld [vmem:[%s1] sm:$0xf]
    %v63 = vld [vmem:[%s1 + $0x4] sm:$0xf]
    %v64 = vld [vmem:[%s1 + $0x8] sm:$0xf]
    %v65 = vld [vmem:[%s1 + $0xc] sm:$0xf]
    %v66 = vld [vmem:[%s1 + $0x10] sm:$0xf]
    %v67 = vld [vmem:[%s1 + $0x14] sm:$0xf]
    %v68 = vld [vmem:[%s1 + $0x18] sm:$0xf]
    %v69 = vld [vmem:[%s1 + $0x1c] sm:$0xf]
    %v70 = vld [vmem:[%s1 + $0x20] sm:$0xf]
    %v71 = vld [vmem:[%s1 + $0x24] sm:$0xf]
    %v72 = vld [vmem:[%s1 + $0x28] sm:$0xf]
    %v73 = vld [vmem:[%s1 + $0x2c] sm:$0xf]
    %v74 = vld [vmem:[%s1 + $0x30] sm:$0xf]
    %v75 = vld [vmem:[%s1 + $0x34] sm:$0xf]
    %v76 = vld [vmem:[%s1 + $0x38] sm:$0xf]
    %v77 = vld [vmem:[%s1 + $0x3c] sm:$0xf]
    %v78 = vld [vmem:[%s1 + $0x40] sm:$0xf]
    %v79 = vld [vmem:[%s1 + $0x44] sm:$0xf]
    %v80 = vld [vmem:[%s1 + $0x48] sm:$0xf]
    %v81 = vld [vmem:[%s1 + $0x4c] sm:$0xf]
    %v82 = vld [vmem:[%s1 + $0x50] sm:$0xf]
    %v83 = vld [vmem:[%s1 + $0x54] sm:$0xf]
    %v84 = vld [vmem:[%s1 + $0x58] sm:$0xf]
    %v85 = vld [vmem:[%s1 + $0x5c] sm:$0xf]
    %v86 = vld [vmem:[%s1 + $0x60] sm:$0xf]
    %v87 = vld [vmem:[%s1 + $0x64] sm:$0xf]
    %v88 = vld [vmem:[%s1 + $0x68] sm:$0xf]
    %v89 = vld [vmem:[%s1 + $0x6c] sm:$0xf]
    %v90 = vld [vmem:[%s1 + $0x70] sm:$0xf]
    %v91 = vld [vmem:[%s1 + $0x74] sm:$0xf]
    %v92 = vld [vmem:[%s1 + $0x78] sm:$0xf]
    %v93 = vld [vmem:[%s1 + $0x7c] sm:$0xf]
    %v94 = vld [vmem:[%s2] sm:$0xff]
    %v95 = vld [vmem:[%s2 + $0x8] sm:$0xff]
    %v96 = vld [vmem:[%s2 + $0x10] sm:$0xff]
    %v97 = vld [vmem:[%s2 + $0x18] sm:$0xff]
    %v98 = vld [vmem:[%s2 + $0x20] sm:$0xff]
    %v99 = vld [vmem:[%s2 + $0x28] sm:$0xff]
    %v100 = vld [vmem:[%s2 + $0x30] sm:$0xff]
    %v101 = vld [vmem:[%s2 + $0x38] sm:$0xff]
    %v102 = vld [vmem:[%s2 + $0x40] sm:$0xff]
    %v103 = vld [vmem:[%s2 + $0x48] sm:$0xff]
    %v104 = vld [vmem:[%s2 + $0x50] sm:$0xff]
    %v105 = vld [vmem:[%s2 + $0x58] sm:$0xff]
    %v106 = vld [vmem:[%s2 + $0x60] sm:$0xff]
    %v107 = vld [vmem:[%s2 + $0x68] sm:$0xff]
    %v108 = vld [vmem:[%s2 + $0x70] sm:$0xff]
    %v109 = vld [vmem:[%s2 + $0x78] sm:$0xff]
    %v110 = vld [vmem:[%s4] sm:$0xf]
    %v111 = vld [vmem:[%s3] sm:$0xff]
    %v112 = vld [vmem:[%s3 + $0x8] sm:$0xff]
    %v113 = vld [vmem:[%s3 + $0x10] sm:$0xff]
    %v114 = vld [vmem:[%s3 + $0x18] sm:$0xff]
    %v115 = vld [vmem:[%s3 + $0x20] sm:$0xff]
    %v116 = vld [vmem:[%s3 + $0x28] sm:$0xff]
    %v117 = vld [vmem:[%s3 + $0x30] sm:$0xff]
    %v118 = vld [vmem:[%s3 + $0x38] sm:$0xff]
    %v119 = vld [vmem:[%s3 + $0x40] sm:$0xff]
    %v120 = vld [vmem:[%s3 + $0x48] sm:$0xff]
    %v121 = vld [vmem:[%s3 + $0x50] sm:$0xff]
    %v122 = vld [vmem:[%s3 + $0x58] sm:$0xff]
    %v123 = vld [vmem:[%s3 + $0x60] sm:$0xff]
    %v124 = vld [vmem:[%s3 + $0x68] sm:$0xff]
    %v125 = vld [vmem:[%s3 + $0x70] sm:$0xff]
    %v126 = vld [vmem:[%s3 + $0x78] sm:$0xff]
    %v127 = vld [vmem:[%s3 + $0x80] sm:$0xff]
    %v128 = vld [vmem:[%s3 + $0x88] sm:$0xff]
    %v129 = vld [vmem:[%s3 + $0x90] sm:$0xff]
    %v130 = vld [vmem:[%s3 + $0x98] sm:$0xff]
    %v131 = vld [vmem:[%s3 + $0xa0] sm:$0xff]
    %v132 = vld [vmem:[%s3 + $0xa8] sm:$0xff]
    %v133 = vld [vmem:[%s3 + $0xb0] sm:$0xff]
    %v134 = vld [vmem:[%s3 + $0xb8] sm:$0xff]
    %v135 = vld [vmem:[%s3 + $0xc0] sm:$0xff]
    %v136 = vld [vmem:[%s3 + $0xc8] sm:$0xff]
    %v137 = vld [vmem:[%s3 + $0xd0] sm:$0xff]
    %v138 = vld [vmem:[%s3 + $0xd8] sm:$0xff]
    %v139 = vld [vmem:[%s3 + $0xe0] sm:$0xff]
    %v140 = vld [vmem:[%s3 + $0xe8] sm:$0xff]
    %v141 = vld [vmem:[%s3 + $0xf0] sm:$0xff]
    %v142 = vld [vmem:[%s3 + $0xf8] sm:$0xff]
    %v143 = vld [vmem:[%s5] sm:$0xff]
    %v144 = vld [vmem:[%s6] sm:$0x1]
    %v146 = vlaneseq
    %v147 = vshrl.u32 %v146, 7
    %v148 = vsub.s32 0, %v147
    %v149 = vrot.slane %v144, %v148
    %vm151 = vcmask 64512
    %v153 = vsel %vm151, %v111, 0
    %v156 = vsel %vm151, %v112, 0
    %v159 = vsel %vm151, %v113, 0
    %v162 = vsel %vm151, %v114, 0
    %v165 = vsel %vm151, %v115, 0
    %v168 = vsel %vm151, %v116, 0
    %v171 = vsel %vm151, %v117, 0
    %v174 = vsel %vm151, %v118, 0
    %v177 = vsel %vm151, %v119, 0
    %v180 = vsel %vm151, %v120, 0
    %v183 = vsel %vm151, %v121, 0
    %v186 = vsel %vm151, %v122, 0
    %v189 = vsel %vm151, %v123, 0
    %v192 = vsel %vm151, %v124, 0
    %v195 = vsel %vm151, %v125, 0
    %v198 = vsel %vm151, %v126, 0
    %v201 = vsel %vm151, %v127, 0
    %v204 = vsel %vm151, %v128, 0
    %v207 = vsel %vm151, %v129, 0
    %v210 = vsel %vm151, %v130, 0
    %v213 = vsel %vm151, %v131, 0
    %v216 = vsel %vm151, %v132, 0
    %v219 = vsel %vm151, %v133, 0
    %v222 = vsel %vm151, %v134, 0
    %v225 = vsel %vm151, %v135, 0
    %v228 = vsel %vm151, %v136, 0
    %v231 = vsel %vm151, %v137, 0
    %v234 = vsel %vm151, %v138, 0
    %v237 = vsel %vm151, %v139, 0
    %v240 = vsel %vm151, %v140, 0
    %v243 = vsel %vm151, %v141, 0
    %v246 = vsel %vm151, %v142, 0
    %248 = vmatprep.subr.mxu0 0.0
    %249 = vmatpush1.msra.mxu0 0.0
    %250 = vmatprep.subr.mxu0 0.0
    %251 = vmatpush1.msra.mxu0 0.0
    %252 = vmatprep.subr.mxu0 0.0
    %253 = vmatpush1.msra.mxu0 0.0
    %254 = vmatprep.subr.mxu0 0.0
    %255 = vmatpush1.msra.mxu0 0.0
    %256 = vmatprep.subr.mxu0 0.0
    %257 = vmatpush1.msra.mxu0 0.0
    %258 = vmatprep.subr.mxu0 0.0
    %259 = vmatpush1.msra.mxu0 0.0
    %260 = vmatprep.subr.mxu0 0.0
    %261 = vmatpush1.msra.mxu0 0.0
    %262 = vmatprep.subr.mxu0 0.0
    %263 = vmatpush1.msra.mxu0 0.0
    %264 = vmatprep.subr.mxu0 0.0
    %265 = vmatpush1.msra.mxu0 0.0
    %266 = vmatprep.subr.mxu0 0.0
    %267 = vmatpush1.msra.mxu0 0.0
    %268 = vmatprep.subr.mxu0 0.0
    %269 = vmatpush1.msra.mxu0 0.0
    %270 = vmatprep.subr.mxu0 0.0
    %271 = vmatpush1.msra.mxu0 0.0
    %272 = vmatprep.subr.mxu0 0.0
    %273 = vmatpush1.msra.mxu0 0.0
    %274 = vmatprep.subr.mxu0 0.0
    %275 = vmatpush1.msra.mxu0 0.0
    %276 = vmatprep.subr.mxu0 0.0
    %277 = vmatpush1.msra.mxu0 0.0
    %278 = vmatprep.subr.mxu0 0.0
    %279 = vmatpush1.msra.mxu0 %v143
    %280 = vmatprep.subr.mxu0 0.0
    %281 = vmatpush2.msra.mxu0 0.0
    %282 = vmatprep.subr.mxu0 0.0
    %283 = vmatpush2.msra.mxu0 0.0
    %284 = vmatprep.subr.mxu0 0.0
    %285 = vmatpush2.msra.mxu0 0.0
    %286 = vmatprep.subr.mxu0 0.0
    %287 = vmatpush2.msra.mxu0 0.0
    %288 = vmatprep.subr.mxu0 0.0
    %289 = vmatpush2.msra.mxu0 0.0
    %290 = vmatprep.subr.mxu0 0.0
    %291 = vmatpush2.msra.mxu0 0.0
    %292 = vmatprep.subr.mxu0 0.0
    %293 = vmatpush2.msra.mxu0 0.0
    %294 = vmatprep.subr.mxu0 0.0
    %295 = vmatpush2.msra.mxu0 0.0
    %296 = vmatprep.subr.mxu0 0.0
    %297 = vmatpush2.msra.mxu0 0.0
    %298 = vmatprep.subr.mxu0 0.0
    %299 = vmatpush2.msra.mxu0 0.0
    %300 = vmatprep.subr.mxu0 0.0
    %301 = vmatpush2.msra.mxu0 0.0
    %302 = vmatprep.subr.mxu0 0.0
    %303 = vmatpush2.msra.mxu0 0.0
    %304 = vmatprep.subr.mxu0 0.0
    %305 = vmatpush2.msra.mxu0 0.0
    %306 = vmatprep.subr.mxu0 0.0
    %307 = vmatpush2.msra.mxu0 0.0
    %308 = vmatprep.subr.mxu0 0.0
    %309 = vmatpush2.msra.mxu0 0.0
    %310 = vmatprep.subr.mxu0 0.0
    %311 = vmatpush2.msra.mxu0 0.0
    %312 = vmatprep.mubr.f32.mxu0 0.0
    %313 = vmatmul.mubr.f32.gmra.mxu0 %v153
    %v314 = vpop.f32.mrf.mxu0
    %v315 = vadd.f32 %v149, %v314
    %v316 = vpop.f32.mrf.mxu0
    %317 = vmatprep.mubr.f32.mxu0 0.0
    %318 = vmatmul.mubr.f32.gmra.mxu0 %v156
    %v319 = vpop.f32.mrf.mxu0
    %v320 = vadd.f32 %v149, %v319
    %v321 = vpop.f32.mrf.mxu0
    %322 = vmatprep.mubr.f32.mxu0 0.0
    %323 = vmatmul.mubr.f32.gmra.mxu0 %v159
    %v324 = vpop.f32.mrf.mxu0
    %v325 = vadd.f32 %v149, %v324
    %v326 = vpop.f32.mrf.mxu0
    %327 = vmatprep.mubr.f32.mxu0 0.0
    %328 = vmatmul.mubr.f32.gmra.mxu0 %v162
    %v329 = vpop.f32.mrf.mxu0
    %v330 = vadd.f32 %v149, %v329
    %v331 = vpop.f32.mrf.mxu0
    %332 = vmatprep.mubr.f32.mxu0 0.0
    %333 = vmatmul.mubr.f32.gmra.mxu0 %v165
    %v334 = vpop.f32.mrf.mxu0
    %v335 = vadd.f32 %v149, %v334
    %v336 = vpop.f32.mrf.mxu0
    %337 = vmatprep.mubr.f32.mxu0 0.0
    %338 = vmatmul.mubr.f32.gmra.mxu0 %v168
    %v339 = vpop.f32.mrf.mxu0
    %v340 = vadd.f32 %v149, %v339
    %v341 = vpop.f32.mrf.mxu0
    %342 = vmatprep.mubr.f32.mxu0 0.0
    %343 = vmatmul.mubr.f32.gmra.mxu0 %v171
    %v344 = vpop.f32.mrf.mxu0
    %v345 = vadd.f32 %v149, %v344
    %v346 = vpop.f32.mrf.mxu0
    %347 = vmatprep.mubr.f32.mxu0 0.0
    %348 = vmatmul.mubr.f32.gmra.mxu0 %v174
    %v349 = vpop.f32.mrf.mxu0
    %v350 = vadd.f32 %v149, %v349
    %v351 = vpop.f32.mrf.mxu0
    %352 = vmatprep.mubr.f32.mxu0 0.0
    %353 = vmatmul.mubr.f32.gmra.mxu0 %v177
    %v354 = vpop.f32.mrf.mxu0
    %v355 = vadd.f32 %v149, %v354
    %v356 = vpop.f32.mrf.mxu0
    %357 = vmatprep.mubr.f32.mxu0 0.0
    %358 = vmatmul.mubr.f32.gmra.mxu0 %v180
    %v359 = vpop.f32.mrf.mxu0
    %v360 = vadd.f32 %v149, %v359
    %v361 = vpop.f32.mrf.mxu0
    %362 = vmatprep.mubr.f32.mxu0 0.0
    %363 = vmatmul.mubr.f32.gmra.mxu0 %v183
    %v364 = vpop.f32.mrf.mxu0
    %v365 = vadd.f32 %v149, %v364
    %v366 = vpop.f32.mrf.mxu0
    %367 = vmatprep.mubr.f32.mxu0 0.0
    %368 = vmatmul.mubr.f32.gmra.mxu0 %v186
    %v369 = vpop.f32.mrf.mxu0
    %v370 = vadd.f32 %v149, %v369
    %v371 = vpop.f32.mrf.mxu0
    %372 = vmatprep.mubr.f32.mxu0 0.0
    %373 = vmatmul.mubr.f32.gmra.mxu0 %v189
    %v374 = vpop.f32.mrf.mxu0
    %v375 = vadd.f32 %v149, %v374
    %v376 = vpop.f32.mrf.mxu0
    %377 = vmatprep.mubr.f32.mxu0 0.0
    %378 = vmatmul.mubr.f32.gmra.mxu0 %v192
    %v379 = vpop.f32.mrf.mxu0
    %v380 = vadd.f32 %v149, %v379
    %v381 = vpop.f32.mrf.mxu0
    %382 = vmatprep.mubr.f32.mxu0 0.0
    %383 = vmatmul.mubr.f32.gmra.mxu0 %v195
    %v384 = vpop.f32.mrf.mxu0
    %v385 = vadd.f32 %v149, %v384
    %v386 = vpop.f32.mrf.mxu0
    %387 = vmatprep.mubr.f32.mxu0 0.0
    %388 = vmatmul.mubr.f32.gmra.mxu0 %v198
    %v389 = vpop.f32.mrf.mxu0
    %v390 = vadd.f32 %v149, %v389
    %v391 = vpop.f32.mrf.mxu0
    %392 = vmatprep.mubr.f32.mxu0 0.0
    %393 = vmatmul.mubr.f32.gmra.mxu0 %v201
    %v394 = vpop.f32.mrf.mxu0
    %v395 = vadd.f32 %v149, %v394
    %v396 = vpop.f32.mrf.mxu0
    %397 = vmatprep.mubr.f32.mxu0 0.0
    %398 = vmatmul.mubr.f32.gmra.mxu0 %v204
    %v399 = vpop.f32.mrf.mxu0
    %v400 = vadd.f32 %v149, %v399
    %v401 = vpop.f32.mrf.mxu0
    %402 = vmatprep.mubr.f32.mxu0 0.0
    %403 = vmatmul.mubr.f32.gmra.mxu0 %v207
    %v404 = vpop.f32.mrf.mxu0
    %v405 = vadd.f32 %v149, %v404
    %v406 = vpop.f32.mrf.mxu0
    %407 = vmatprep.mubr.f32.mxu0 0.0
    %408 = vmatmul.mubr.f32.gmra.mxu0 %v210
    %v409 = vpop.f32.mrf.mxu0
    %v410 = vadd.f32 %v149, %v409
    %v411 = vpop.f32.mrf.mxu0
    %412 = vmatprep.mubr.f32.mxu0 0.0
    %413 = vmatmul.mubr.f32.gmra.mxu0 %v213
    %v414 = vpop.f32.mrf.mxu0
    %v415 = vadd.f32 %v149, %v414
    %v416 = vpop.f32.mrf.mxu0
    %417 = vmatprep.mubr.f32.mxu0 0.0
    %418 = vmatmul.mubr.f32.gmra.mxu0 %v216
    %v419 = vpop.f32.mrf.mxu0
    %v420 = vadd.f32 %v149, %v419
    %v421 = vpop.f32.mrf.mxu0
    %422 = vmatprep.mubr.f32.mxu0 0.0
    %423 = vmatmul.mubr.f32.gmra.mxu0 %v219
    %v424 = vpop.f32.mrf.mxu0
    %v425 = vadd.f32 %v149, %v424
    %v426 = vpop.f32.mrf.mxu0
    %427 = vmatprep.mubr.f32.mxu0 0.0
    %428 = vmatmul.mubr.f32.gmra.mxu0 %v222
    %v429 = vpop.f32.mrf.mxu0
    %v430 = vadd.f32 %v149, %v429
    %v431 = vpop.f32.mrf.mxu0
    %432 = vmatprep.mubr.f32.mxu0 0.0
    %433 = vmatmul.mubr.f32.gmra.mxu0 %v225
    %v434 = vpop.f32.mrf.mxu0
    %v435 = vadd.f32 %v149, %v434
    %v436 = vpop.f32.mrf.mxu0
    %437 = vmatprep.mubr.f32.mxu0 0.0
    %438 = vmatmul.mubr.f32.gmra.mxu0 %v228
    %v439 = vpop.f32.mrf.mxu0
    %v440 = vadd.f32 %v149, %v439
    %v441 = vpop.f32.mrf.mxu0
    %442 = vmatprep.mubr.f32.mxu0 0.0
    %443 = vmatmul.mubr.f32.gmra.mxu0 %v231
    %v444 = vpop.f32.mrf.mxu0
    %v445 = vadd.f32 %v149, %v444
    %v446 = vpop.f32.mrf.mxu0
    %447 = vmatprep.mubr.f32.mxu0 0.0
    %448 = vmatmul.mubr.f32.gmra.mxu0 %v234
    %v449 = vpop.f32.mrf.mxu0
    %v450 = vadd.f32 %v149, %v449
    %v451 = vpop.f32.mrf.mxu0
    %452 = vmatprep.mubr.f32.mxu0 0.0
    %453 = vmatmul.mubr.f32.gmra.mxu0 %v237
    %v454 = vpop.f32.mrf.mxu0
    %v455 = vadd.f32 %v149, %v454
    %v456 = vpop.f32.mrf.mxu0
    %457 = vmatprep.mubr.f32.mxu0 0.0
    %458 = vmatmul.mubr.f32.gmra.mxu0 %v240
    %v459 = vpop.f32.mrf.mxu0
    %v460 = vadd.f32 %v149, %v459
    %v461 = vpop.f32.mrf.mxu0
    %462 = vmatprep.mubr.f32.mxu0 0.0
    %463 = vmatmul.mubr.f32.gmra.mxu0 %v243
    %v464 = vpop.f32.mrf.mxu0
    %v465 = vadd.f32 %v149, %v464
    %v466 = vpop.f32.mrf.mxu0
    %467 = vmatprep.mubr.f32.mxu0 0.0
    %468 = vmatmul.mubr.f32.gmra.mxu0 %v246
    %v469 = vpop.f32.mrf.mxu0
    %v470 = vadd.f32 %v149, %v469
    %v471 = vpop.f32.mrf.mxu0
    %472 = vdwg.mxu0
    %v505 = vunpack.c.l.b16 %v62
    %v506 = vunpack.c.l.b16 %v63
    %v507 = vunpack.c.l.b16 %v64
    %v508 = vunpack.c.l.b16 %v65
    %v509 = vunpack.c.l.b16 %v66
    %v510 = vunpack.c.l.b16 %v67
    %v511 = vunpack.c.l.b16 %v68
    %v512 = vunpack.c.l.b16 %v69
    %v513 = vunpack.c.l.b16 %v70
    %v514 = vunpack.c.l.b16 %v71
    %v515 = vunpack.c.l.b16 %v72
    %v516 = vunpack.c.l.b16 %v73
    %v517 = vunpack.c.l.b16 %v74
    %v518 = vunpack.c.l.b16 %v75
    %v519 = vunpack.c.l.b16 %v76
    %v520 = vunpack.c.l.b16 %v77
    %v521 = vunpack.c.l.b16 %v78
    %v522 = vunpack.c.l.b16 %v79
    %v523 = vunpack.c.l.b16 %v80
    %v524 = vunpack.c.l.b16 %v81
    %v525 = vunpack.c.l.b16 %v82
    %v526 = vunpack.c.l.b16 %v83
    %v527 = vunpack.c.l.b16 %v84
    %v528 = vunpack.c.l.b16 %v85
    %v529 = vunpack.c.l.b16 %v86
    %v530 = vunpack.c.l.b16 %v87
    %v531 = vunpack.c.l.b16 %v88
    %v532 = vunpack.c.l.b16 %v89
    %v533 = vunpack.c.l.b16 %v90
    %v534 = vunpack.c.l.b16 %v91
    %v535 = vunpack.c.l.b16 %v92
    %v536 = vunpack.c.l.b16 %v93
    %v537 = vpack.c.b16 %v506, %v505
    %v538 = vpack.c.b16 %v508, %v507
    %v539 = vpack.c.b16 %v510, %v509
    %v540 = vpack.c.b16 %v512, %v511
    %v541 = vpack.c.b16 %v514, %v513
    %v542 = vpack.c.b16 %v516, %v515
    %v543 = vpack.c.b16 %v518, %v517
    %v544 = vpack.c.b16 %v520, %v519
    %v545 = vpack.c.b16 %v522, %v521
    %v546 = vpack.c.b16 %v524, %v523
    %v547 = vpack.c.b16 %v526, %v525
    %v548 = vpack.c.b16 %v528, %v527
    %v549 = vpack.c.b16 %v530, %v529
    %v550 = vpack.c.b16 %v532, %v531
    %v551 = vpack.c.b16 %v534, %v533
    %v552 = vpack.c.b16 %v536, %v535
    %569 = vmatprep.subr.mxu0 0.0
    %570 = vmatpush1.msra.mxu0 %v61
    %571 = vmatprep.subr.mxu0 0.0
    %572 = vmatpush1.msra.mxu0 %v60
    %573 = vmatprep.subr.mxu0 0.0
    %574 = vmatpush1.msra.mxu0 %v59
    %575 = vmatprep.subr.mxu0 0.0
    %576 = vmatpush1.msra.mxu0 %v58
    %577 = vmatprep.subr.mxu0 0.0
    %578 = vmatpush1.msra.mxu0 %v57
    %579 = vmatprep.subr.mxu0 0.0
    %580 = vmatpush1.msra.mxu0 %v56
    %581 = vmatprep.subr.mxu0 0.0
    %582 = vmatpush1.msra.mxu0 %v55
    %583 = vmatprep.subr.mxu0 0.0
    %584 = vmatpush1.msra.mxu0 %v54
    %585 = vmatprep.subr.mxu0 0.0
    %586 = vmatpush1.msra.mxu0 %v53
    %587 = vmatprep.subr.mxu0 0.0
    %588 = vmatpush1.msra.mxu0 %v52
    %589 = vmatprep.subr.mxu0 0.0
    %590 = vmatpush1.msra.mxu0 %v51
    %591 = vmatprep.subr.mxu0 0.0
    %592 = vmatpush1.msra.mxu0 %v50
    %593 = vmatprep.subr.mxu0 0.0
    %594 = vmatpush1.msra.mxu0 %v49
    %595 = vmatprep.subr.mxu0 0.0
    %596 = vmatpush1.msra.mxu0 %v48
    %597 = vmatprep.subr.mxu0 0.0
    %598 = vmatpush1.msra.mxu0 %v47
    %599 = vmatprep.subr.mxu0 0.0
    %600 = vmatpush1.msra.mxu0 %v46
    %601 = vmatprep.subr.mxu0 0.0
    %602 = vmatpush2.msra.mxu0 0.0
    %603 = vmatprep.subr.mxu0 0.0
    %604 = vmatpush2.msra.mxu0 0.0
    %605 = vmatprep.subr.mxu0 0.0
    %606 = vmatpush2.msra.mxu0 0.0
    %607 = vmatprep.subr.mxu0 0.0
    %608 = vmatpush2.msra.mxu0 0.0
    %609 = vmatprep.subr.mxu0 0.0
    %610 = vmatpush2.msra.mxu0 0.0
    %611 = vmatprep.subr.mxu0 0.0
    %612 = vmatpush2.msra.mxu0 0.0
    %613 = vmatprep.subr.mxu0 0.0
    %614 = vmatpush2.msra.mxu0 0.0
    %615 = vmatprep.subr.mxu0 0.0
    %616 = vmatpush2.msra.mxu0 0.0
    %617 = vmatprep.subr.mxu0 0.0
    %618 = vmatpush2.msra.mxu0 0.0
    %619 = vmatprep.subr.mxu0 0.0
    %620 = vmatpush2.msra.mxu0 0.0
    %621 = vmatprep.subr.mxu0 0.0
    %622 = vmatpush2.msra.mxu0 0.0
    %623 = vmatprep.subr.mxu0 0.0
    %624 = vmatpush2.msra.mxu0 0.0
    %625 = vmatprep.subr.mxu0 0.0
    %626 = vmatpush2.msra.mxu0 0.0
    %627 = vmatprep.subr.mxu0 0.0
    %628 = vmatpush2.msra.mxu0 0.0
    %629 = vmatprep.subr.mxu0 0.0
    %630 = vmatpush2.msra.mxu0 0.0
    %631 = vmatprep.subr.mxu0 0.0
    %632 = vmatpush2.msra.mxu0 0.0
    %633 = vmatprep.mubr.bf16.mxu0 0
    %634 = vmatmul.mubr.bf16.gmra.mxu0 %v537
    %v635 = vpop.f32.mrf.mxu0
    %v636 = vadd.f32 %v315, %v635
    %v637 = vpop.f32.mrf.mxu0
    %v638 = vpop.f32.mrf.mxu0
    %v639 = vadd.f32 %v320, %v638
    %v640 = vpop.f32.mrf.mxu0
    %641 = vmatprep.mubr.bf16.mxu0 0
    %642 = vmatmul.mubr.bf16.gmra.mxu0 %v538
    %v643 = vpop.f32.mrf.mxu0
    %v644 = vadd.f32 %v325, %v643
    %v645 = vpop.f32.mrf.mxu0
    %v646 = vpop.f32.mrf.mxu0
    %v647 = vadd.f32 %v330, %v646
    %v648 = vpop.f32.mrf.mxu0
    %649 = vmatprep.mubr.bf16.mxu0 0
    %650 = vmatmul.mubr.bf16.gmra.mxu0 %v539
    %v651 = vpop.f32.mrf.mxu0
    %v652 = vadd.f32 %v335, %v651
    %v653 = vpop.f32.mrf.mxu0
    %v654 = vpop.f32.mrf.mxu0
    %v655 = vadd.f32 %v340, %v654
    %v656 = vpop.f32.mrf.mxu0
    %657 = vmatprep.mubr.bf16.mxu0 0
    %658 = vmatmul.mubr.bf16.gmra.mxu0 %v540
    %v659 = vpop.f32.mrf.mxu0
    %v660 = vadd.f32 %v345, %v659
    %v661 = vpop.f32.mrf.mxu0
    %v662 = vpop.f32.mrf.mxu0
    %v663 = vadd.f32 %v350, %v662
    %v664 = vpop.f32.mrf.mxu0
    %665 = vmatprep.mubr.bf16.mxu0 0
    %666 = vmatmul.mubr.bf16.gmra.mxu0 %v541
    %v667 = vpop.f32.mrf.mxu0
    %v668 = vadd.f32 %v355, %v667
    %v669 = vpop.f32.mrf.mxu0
    %v670 = vpop.f32.mrf.mxu0
    %v671 = vadd.f32 %v360, %v670
    %v672 = vpop.f32.mrf.mxu0
    %673 = vmatprep.mubr.bf16.mxu0 0
    %674 = vmatmul.mubr.bf16.gmra.mxu0 %v542
    %v675 = vpop.f32.mrf.mxu0
    %v676 = vadd.f32 %v365, %v675
    %v677 = vpop.f32.mrf.mxu0
    %v678 = vpop.f32.mrf.mxu0
    %v679 = vadd.f32 %v370, %v678
    %v680 = vpop.f32.mrf.mxu0
    %681 = vmatprep.mubr.bf16.mxu0 0
    %682 = vmatmul.mubr.bf16.gmra.mxu0 %v543
    %v683 = vpop.f32.mrf.mxu0
    %v684 = vadd.f32 %v375, %v683
    %v685 = vpop.f32.mrf.mxu0
    %v686 = vpop.f32.mrf.mxu0
    %v687 = vadd.f32 %v380, %v686
    %v688 = vpop.f32.mrf.mxu0
    %689 = vmatprep.mubr.bf16.mxu0 0
    %690 = vmatmul.mubr.bf16.gmra.mxu0 %v544
    %v691 = vpop.f32.mrf.mxu0
    %v692 = vadd.f32 %v385, %v691
    %v693 = vpop.f32.mrf.mxu0
    %v694 = vpop.f32.mrf.mxu0
    %v695 = vadd.f32 %v390, %v694
    %v696 = vpop.f32.mrf.mxu0
    %697 = vmatprep.mubr.bf16.mxu0 0
    %698 = vmatmul.mubr.bf16.gmra.mxu0 %v545
    %v699 = vpop.f32.mrf.mxu0
    %v700 = vadd.f32 %v395, %v699
    %v701 = vpop.f32.mrf.mxu0
    %v702 = vpop.f32.mrf.mxu0
    %v703 = vadd.f32 %v400, %v702
    %v704 = vpop.f32.mrf.mxu0
    %705 = vmatprep.mubr.bf16.mxu0 0
    %706 = vmatmul.mubr.bf16.gmra.mxu0 %v546
    %v707 = vpop.f32.mrf.mxu0
    %v708 = vadd.f32 %v405, %v707
    %v709 = vpop.f32.mrf.mxu0
    %v710 = vpop.f32.mrf.mxu0
    %v711 = vadd.f32 %v410, %v710
    %v712 = vpop.f32.mrf.mxu0
    %713 = vmatprep.mubr.bf16.mxu0 0
    %714 = vmatmul.mubr.bf16.gmra.mxu0 %v547
    %v715 = vpop.f32.mrf.mxu0
    %v716 = vadd.f32 %v415, %v715
    %v717 = vpop.f32.mrf.mxu0
    %v718 = vpop.f32.mrf.mxu0
    %v719 = vadd.f32 %v420, %v718
    %v720 = vpop.f32.mrf.mxu0
    %721 = vmatprep.mubr.bf16.mxu0 0
    %722 = vmatmul.mubr.bf16.gmra.mxu0 %v548
    %v723 = vpop.f32.mrf.mxu0
    %v724 = vadd.f32 %v425, %v723
    %v725 = vpop.f32.mrf.mxu0
    %v726 = vpop.f32.mrf.mxu0
    %v727 = vadd.f32 %v430, %v726
    %v728 = vpop.f32.mrf.mxu0
    %729 = vmatprep.mubr.bf16.mxu0 0
    %730 = vmatmul.mubr.bf16.gmra.mxu0 %v549
    %v731 = vpop.f32.mrf.mxu0
    %v732 = vadd.f32 %v435, %v731
    %v733 = vpop.f32.mrf.mxu0
    %v734 = vpop.f32.mrf.mxu0
    %v735 = vadd.f32 %v440, %v734
    %v736 = vpop.f32.mrf.mxu0
    %737 = vmatprep.mubr.bf16.mxu0 0
    %738 = vmatmul.mubr.bf16.gmra.mxu0 %v550
    %v739 = vpop.f32.mrf.mxu0
    %v740 = vadd.f32 %v445, %v739
    %v741 = vpop.f32.mrf.mxu0
    %v742 = vpop.f32.mrf.mxu0
    %v743 = vadd.f32 %v450, %v742
    %v744 = vpop.f32.mrf.mxu0
    %745 = vmatprep.mubr.bf16.mxu0 0
    %746 = vmatmul.mubr.bf16.gmra.mxu0 %v551
    %v747 = vpop.f32.mrf.mxu0
    %v748 = vadd.f32 %v455, %v747
    %v749 = vpop.f32.mrf.mxu0
    %v750 = vpop.f32.mrf.mxu0
    %v751 = vadd.f32 %v460, %v750
    %v752 = vpop.f32.mrf.mxu0
    %753 = vmatprep.mubr.bf16.mxu0 0
    %754 = vmatmul.mubr.bf16.gmra.mxu0 %v552
    %v755 = vpop.f32.mrf.mxu0
    %v756 = vadd.f32 %v465, %v755
    %v757 = vpop.f32.mrf.mxu0
    %v758 = vpop.f32.mrf.mxu0
    %v759 = vadd.f32 %v470, %v758
    %v760 = vpop.f32.mrf.mxu0
    %761 = vdwg.mxu0
    %v762 = vmax.f32 %v636, 0.0
    %v763 = vmax.f32 %v639, 0.0
    %v764 = vmax.f32 %v644, 0.0
    %v765 = vmax.f32 %v647, 0.0
    %v766 = vmax.f32 %v652, 0.0
    %v767 = vmax.f32 %v655, 0.0
    %v768 = vmax.f32 %v660, 0.0
    %v769 = vmax.f32 %v663, 0.0
    %v770 = vmax.f32 %v668, 0.0
    %v771 = vmax.f32 %v671, 0.0
    %v772 = vmax.f32 %v676, 0.0
    %v773 = vmax.f32 %v679, 0.0
    %v774 = vmax.f32 %v684, 0.0
    %v775 = vmax.f32 %v687, 0.0
    %v776 = vmax.f32 %v692, 0.0
    %v777 = vmax.f32 %v695, 0.0
    %v778 = vmax.f32 %v700, 0.0
    %v779 = vmax.f32 %v703, 0.0
    %v780 = vmax.f32 %v708, 0.0
    %v781 = vmax.f32 %v711, 0.0
    %v782 = vmax.f32 %v716, 0.0
    %v783 = vmax.f32 %v719, 0.0
    %v784 = vmax.f32 %v724, 0.0
    %v785 = vmax.f32 %v727, 0.0
    %v786 = vmax.f32 %v732, 0.0
    %v787 = vmax.f32 %v735, 0.0
    %v788 = vmax.f32 %v740, 0.0
    %v789 = vmax.f32 %v743, 0.0
    %v790 = vmax.f32 %v748, 0.0
    %v791 = vmax.f32 %v751, 0.0
    %v792 = vmax.f32 %v756, 0.0
    %v793 = vmax.f32 %v759, 0.0
    %v810 = vunpack.c.l.b16 %v94
    %v811 = vunpack.c.h.b16 %v94
    %v812 = vunpack.c.l.b16 %v95
    %v813 = vunpack.c.h.b16 %v95
    %v814 = vunpack.c.l.b16 %v96
    %v815 = vunpack.c.h.b16 %v96
    %v816 = vunpack.c.l.b16 %v97
    %v817 = vunpack.c.h.b16 %v97
    %v818 = vunpack.c.l.b16 %v98
    %v819 = vunpack.c.h.b16 %v98
    %v820 = vunpack.c.l.b16 %v99
    %v821 = vunpack.c.h.b16 %v99
    %v822 = vunpack.c.l.b16 %v100
    %v823 = vunpack.c.h.b16 %v100
    %v824 = vunpack.c.l.b16 %v101
    %v825 = vunpack.c.h.b16 %v101
    %v826 = vunpack.c.l.b16 %v102
    %v827 = vunpack.c.h.b16 %v102
    %v828 = vunpack.c.l.b16 %v103
    %v829 = vunpack.c.h.b16 %v103
    %v830 = vunpack.c.l.b16 %v104
    %v831 = vunpack.c.h.b16 %v104
    %v832 = vunpack.c.l.b16 %v105
    %v833 = vunpack.c.h.b16 %v105
    %v834 = vunpack.c.l.b16 %v106
    %v835 = vunpack.c.h.b16 %v106
    %v836 = vunpack.c.l.b16 %v107
    %v837 = vunpack.c.h.b16 %v107
    %v838 = vunpack.c.l.b16 %v108
    %v839 = vunpack.c.h.b16 %v108
    %v840 = vunpack.c.l.b16 %v109
    %v841 = vunpack.c.h.b16 %v109
    %v842 = vpack.c.b16 %v812, %v810
    %v843 = vpack.c.b16 %v813, %v811
    %v844 = vpack.c.b16 %v816, %v814
    %v845 = vpack.c.b16 %v817, %v815
    %v846 = vpack.c.b16 %v820, %v818
    %v847 = vpack.c.b16 %v821, %v819
    %v848 = vpack.c.b16 %v824, %v822
    %v849 = vpack.c.b16 %v825, %v823
    %v850 = vpack.c.b16 %v828, %v826
    %v851 = vpack.c.b16 %v829, %v827
    %v852 = vpack.c.b16 %v832, %v830
    %v853 = vpack.c.b16 %v833, %v831
    %v854 = vpack.c.b16 %v836, %v834
    %v855 = vpack.c.b16 %v837, %v835
    %v856 = vpack.c.b16 %v840, %v838
    %v857 = vpack.c.b16 %v841, %v839
    %874 = vmatprep.subr.mxu0 0.0
    %875 = vmatpush1.msra.mxu0 %v777
    %876 = vmatprep.subr.mxu0 0.0
    %877 = vmatpush1.msra.mxu0 %v776
    %878 = vmatprep.subr.mxu0 0.0
    %879 = vmatpush1.msra.mxu0 %v775
    %880 = vmatprep.subr.mxu0 0.0
    %881 = vmatpush1.msra.mxu0 %v774
    %882 = vmatprep.subr.mxu0 0.0
    %883 = vmatpush1.msra.mxu0 %v773
    %884 = vmatprep.subr.mxu0 0.0
    %885 = vmatpush1.msra.mxu0 %v772
    %886 = vmatprep.subr.mxu0 0.0
    %887 = vmatpush1.msra.mxu0 %v771
    %888 = vmatprep.subr.mxu0 0.0
    %889 = vmatpush1.msra.mxu0 %v770
    %890 = vmatprep.subr.mxu0 0.0
    %891 = vmatpush1.msra.mxu0 %v769
    %892 = vmatprep.subr.mxu0 0.0
    %893 = vmatpush1.msra.mxu0 %v768
    %894 = vmatprep.subr.mxu0 0.0
    %895 = vmatpush1.msra.mxu0 %v767
    %896 = vmatprep.subr.mxu0 0.0
    %897 = vmatpush1.msra.mxu0 %v766
    %898 = vmatprep.subr.mxu0 0.0
    %899 = vmatpush1.msra.mxu0 %v765
    %900 = vmatprep.subr.mxu0 0.0
    %901 = vmatpush1.msra.mxu0 %v764
    %902 = vmatprep.subr.mxu0 0.0
    %903 = vmatpush1.msra.mxu0 %v763
    %904 = vmatprep.subr.mxu0 0.0
    %905 = vmatpush1.msra.mxu0 %v762
    %906 = vmatprep.subr.mxu0 0.0
    %907 = vmatpush2.msra.mxu0 %v793
    %908 = vmatprep.subr.mxu0 0.0
    %909 = vmatpush2.msra.mxu0 %v792
    %910 = vmatprep.subr.mxu0 0.0
    %911 = vmatpush2.msra.mxu0 %v791
    %912 = vmatprep.subr.mxu0 0.0
    %913 = vmatpush2.msra.mxu0 %v790
    %914 = vmatprep.subr.mxu0 0.0
    %915 = vmatpush2.msra.mxu0 %v789
    %916 = vmatprep.subr.mxu0 0.0
    %917 = vmatpush2.msra.mxu0 %v788
    %918 = vmatprep.subr.mxu0 0.0
    %919 = vmatpush2.msra.mxu0 %v787
    %920 = vmatprep.subr.mxu0 0.0
    %921 = vmatpush2.msra.mxu0 %v786
    %922 = vmatprep.subr.mxu0 0.0
    %923 = vmatpush2.msra.mxu0 %v785
    %924 = vmatprep.subr.mxu0 0.0
    %925 = vmatpush2.msra.mxu0 %v784
    %926 = vmatprep.subr.mxu0 0.0
    %927 = vmatpush2.msra.mxu0 %v783
    %928 = vmatprep.subr.mxu0 0.0
    %929 = vmatpush2.msra.mxu0 %v782
    %930 = vmatprep.subr.mxu0 0.0
    %931 = vmatpush2.msra.mxu0 %v781
    %932 = vmatprep.subr.mxu0 0.0
    %933 = vmatpush2.msra.mxu0 %v780
    %934 = vmatprep.subr.mxu0 0.0
    %935 = vmatpush2.msra.mxu0 %v779
    %936 = vmatprep.subr.mxu0 0.0
    %937 = vmatpush2.msra.mxu0 %v778
    %938 = vmatprep.mubr.bf16.mxu0 %v843
    %939 = vmatmul.mubr.bf16.gmra.mxu0 %v842
    %v940 = vpop.f32.mrf.mxu0
    %v941 = vadd.f32 0.0, %v940
    %v942 = vpop.f32.mrf.mxu0
    %v943 = vpop.f32.mrf.mxu0
    %v944 = vadd.f32 0.0, %v943
    %v945 = vpop.f32.mrf.mxu0
    %946 = vmatprep.mubr.bf16.mxu0 %v845
    %947 = vmatmul.mubr.bf16.gmra.mxu0 %v844
    %v948 = vpop.f32.mrf.mxu0
    %v949 = vadd.f32 0.0, %v948
    %v950 = vpop.f32.mrf.mxu0
    %v951 = vpop.f32.mrf.mxu0
    %v952 = vadd.f32 0.0, %v951
    %v953 = vpop.f32.mrf.mxu0
    %954 = vmatprep.mubr.bf16.mxu0 %v847
    %955 = vmatmul.mubr.bf16.gmra.mxu0 %v846
    %v956 = vpop.f32.mrf.mxu0
    %v957 = vadd.f32 0.0, %v956
    %v958 = vpop.f32.mrf.mxu0
    %v959 = vpop.f32.mrf.mxu0
    %v960 = vadd.f32 0.0, %v959
    %v961 = vpop.f32.mrf.mxu0
    %962 = vmatprep.mubr.bf16.mxu0 %v849
    %963 = vmatmul.mubr.bf16.gmra.mxu0 %v848
    %v964 = vpop.f32.mrf.mxu0
    %v965 = vadd.f32 0.0, %v964
    %v966 = vpop.f32.mrf.mxu0
    %v967 = vpop.f32.mrf.mxu0
    %v968 = vadd.f32 0.0, %v967
    %v969 = vpop.f32.mrf.mxu0
    %970 = vmatprep.mubr.bf16.mxu0 %v851
    %971 = vmatmul.mubr.bf16.gmra.mxu0 %v850
    %v972 = vpop.f32.mrf.mxu0
    %v973 = vadd.f32 0.0, %v972
    %v974 = vpop.f32.mrf.mxu0
    %v975 = vpop.f32.mrf.mxu0
    %v976 = vadd.f32 0.0, %v975
    %v977 = vpop.f32.mrf.mxu0
    %978 = vmatprep.mubr.bf16.mxu0 %v853
    %979 = vmatmul.mubr.bf16.gmra.mxu0 %v852
    %v980 = vpop.f32.mrf.mxu0
    %v981 = vadd.f32 0.0, %v980
    %v982 = vpop.f32.mrf.mxu0
    %v983 = vpop.f32.mrf.mxu0
    %v984 = vadd.f32 0.0, %v983
    %v985 = vpop.f32.mrf.mxu0
    %986 = vmatprep.mubr.bf16.mxu0 %v855
    %987 = vmatmul.mubr.bf16.gmra.mxu0 %v854
    %v988 = vpop.f32.mrf.mxu0
    %v989 = vadd.f32 0.0, %v988
    %v990 = vpop.f32.mrf.mxu0
    %v991 = vpop.f32.mrf.mxu0
    %v992 = vadd.f32 0.0, %v991
    %v993 = vpop.f32.mrf.mxu0
    %994 = vmatprep.mubr.bf16.mxu0 %v857
    %995 = vmatmul.mubr.bf16.gmra.mxu0 %v856
    %v996 = vpop.f32.mrf.mxu0
    %v997 = vadd.f32 0.0, %v996
    %v998 = vpop.f32.mrf.mxu0
    %v999 = vpop.f32.mrf.mxu0
    %v1000 = vadd.f32 0.0, %v999
    %v1001 = vpop.f32.mrf.mxu0
    %1002 = vdwg.mxu0
    %v1003 = vadd.f32 %v46, %v941
    %v1004 = vadd.f32 %v47, %v944
    %v1005 = vadd.f32 %v48, %v949
    %v1006 = vadd.f32 %v49, %v952
    %v1007 = vadd.f32 %v50, %v957
    %v1008 = vadd.f32 %v51, %v960
    %v1009 = vadd.f32 %v52, %v965
    %v1010 = vadd.f32 %v53, %v968
    %v1011 = vadd.f32 %v54, %v973
    %v1012 = vadd.f32 %v55, %v976
    %v1013 = vadd.f32 %v56, %v981
    %v1014 = vadd.f32 %v57, %v984
    %v1015 = vadd.f32 %v58, %v989
    %v1016 = vadd.f32 %v59, %v992
    %v1017 = vadd.f32 %v60, %v997
    %v1018 = vadd.f32 %v61, %v1000
    %v1019 = vld [vmem:[%s7] sm:$0xff]
    %v1020 = vld [vmem:[%s7 + $0x8] sm:$0xff]
    %v1021 = vld [vmem:[%s7 + $0x10] sm:$0xff]
    %v1022 = vld [vmem:[%s7 + $0x18] sm:$0xff]
    %v1023 = vld [vmem:[%s8] sm:$0x1]
    %v1025 = vlaneseq
    %v1026 = vshrl.u32 %v1025, 7
    %v1027 = vsub.s32 0, %v1026
    %v1028 = vrot.slane %v1023, %v1027
    %vm1030 = vcmask 261120
    %v1032 = vsel %vm1030, %v1003, 0
    %v1035 = vsel %vm1030, %v1004, 0
    %v1038 = vsel %vm1030, %v1005, 0
    %v1041 = vsel %vm1030, %v1006, 0
    %v1044 = vsel %vm1030, %v1007, 0
    %v1047 = vsel %vm1030, %v1008, 0
    %v1050 = vsel %vm1030, %v1009, 0
    %v1053 = vsel %vm1030, %v1010, 0
    %v1056 = vsel %vm1030, %v1011, 0
    %v1059 = vsel %vm1030, %v1012, 0
    %v1062 = vsel %vm1030, %v1013, 0
    %v1065 = vsel %vm1030, %v1014, 0
    %v1068 = vsel %vm1030, %v1015, 0
    %v1071 = vsel %vm1030, %v1016, 0
    %v1074 = vsel %vm1030, %v1017, 0
    %v1077 = vsel %vm1030, %v1018, 0
    %1079 = vmatprep.subr.mxu0 0.0
    %1080 = vmatpush1.msra.mxu0 0.0
    %1081 = vmatprep.subr.mxu0 0.0
    %1082 = vmatpush1.msra.mxu0 0.0
    %1083 = vmatprep.subr.mxu0 0.0
    %1084 = vmatpush1.msra.mxu0 0.0
    %1085 = vmatprep.subr.mxu0 0.0
    %1086 = vmatpush1.msra.mxu0 0.0
    %1087 = vmatprep.subr.mxu0 0.0
    %1088 = vmatpush1.msra.mxu0 0.0
    %1089 = vmatprep.subr.mxu0 0.0
    %1090 = vmatpush1.msra.mxu0 0.0
    %1091 = vmatprep.subr.mxu0 0.0
    %1092 = vmatpush1.msra.mxu0 0.0
    %1093 = vmatprep.subr.mxu0 0.0
    %1094 = vmatpush1.msra.mxu0 0.0
    %1095 = vmatprep.subr.mxu0 0.0
    %1096 = vmatpush1.msra.mxu0 0.0
    %1097 = vmatprep.subr.mxu0 0.0
    %1098 = vmatpush1.msra.mxu0 0.0
    %1099 = vmatprep.subr.mxu0 0.0
    %1100 = vmatpush1.msra.mxu0 0.0
    %1101 = vmatprep.subr.mxu0 0.0
    %1102 = vmatpush1.msra.mxu0 0.0
    %1103 = vmatprep.subr.mxu0 0.0
    %1104 = vmatpush1.msra.mxu0 %v1022
    %1105 = vmatprep.subr.mxu0 0.0
    %1106 = vmatpush1.msra.mxu0 %v1021
    %1107 = vmatprep.subr.mxu0 0.0
    %1108 = vmatpush1.msra.mxu0 %v1020
    %1109 = vmatprep.subr.mxu0 0.0
    %1110 = vmatpush1.msra.mxu0 %v1019
    %1111 = vmatprep.subr.mxu0 0.0
    %1112 = vmatpush2.msra.mxu0 0.0
    %1113 = vmatprep.subr.mxu0 0.0
    %1114 = vmatpush2.msra.mxu0 0.0
    %1115 = vmatprep.subr.mxu0 0.0
    %1116 = vmatpush2.msra.mxu0 0.0
    %1117 = vmatprep.subr.mxu0 0.0
    %1118 = vmatpush2.msra.mxu0 0.0
    %1119 = vmatprep.subr.mxu0 0.0
    %1120 = vmatpush2.msra.mxu0 0.0
    %1121 = vmatprep.subr.mxu0 0.0
    %1122 = vmatpush2.msra.mxu0 0.0
    %1123 = vmatprep.subr.mxu0 0.0
    %1124 = vmatpush2.msra.mxu0 0.0
    %1125 = vmatprep.subr.mxu0 0.0
    %1126 = vmatpush2.msra.mxu0 0.0
    %1127 = vmatprep.subr.mxu0 0.0
    %1128 = vmatpush2.msra.mxu0 0.0
    %1129 = vmatprep.subr.mxu0 0.0
    %1130 = vmatpush2.msra.mxu0 0.0
    %1131 = vmatprep.subr.mxu0 0.0
    %1132 = vmatpush2.msra.mxu0 0.0
    %1133 = vmatprep.subr.mxu0 0.0
    %1134 = vmatpush2.msra.mxu0 0.0
    %1135 = vmatprep.subr.mxu0 0.0
    %1136 = vmatpush2.msra.mxu0 0.0
    %1137 = vmatprep.subr.mxu0 0.0
    %1138 = vmatpush2.msra.mxu0 0.0
    %1139 = vmatprep.subr.mxu0 0.0
    %1140 = vmatpush2.msra.mxu0 0.0
    %1141 = vmatprep.subr.mxu0 0.0
    %1142 = vmatpush2.msra.mxu0 0.0
    %1143 = vmatprep.mubr.f32.mxu0 0.0
    %1144 = vmatmul.mubr.f32.gmra.mxu0 %v1032
    %v1145 = vpop.f32.mrf.mxu0
    %v1146 = vadd.f32 %v1028, %v1145
    %v1147 = vpop.f32.mrf.mxu0
    %1148 = vmatprep.mubr.f32.mxu0 0.0
    %1149 = vmatmul.mubr.f32.gmra.mxu0 %v1035
    %v1150 = vpop.f32.mrf.mxu0
    %v1151 = vadd.f32 %v1028, %v1150
    %v1152 = vpop.f32.mrf.mxu0
    %1153 = vmatprep.mubr.f32.mxu0 0.0
    %1154 = vmatmul.mubr.f32.gmra.mxu0 %v1038
    %v1155 = vpop.f32.mrf.mxu0
    %v1156 = vadd.f32 %v1028, %v1155
    %v1157 = vpop.f32.mrf.mxu0
    %1158 = vmatprep.mubr.f32.mxu0 0.0
    %1159 = vmatmul.mubr.f32.gmra.mxu0 %v1041
    %v1160 = vpop.f32.mrf.mxu0
    %v1161 = vadd.f32 %v1028, %v1160
    %v1162 = vpop.f32.mrf.mxu0
    %1163 = vmatprep.mubr.f32.mxu0 0.0
    %1164 = vmatmul.mubr.f32.gmra.mxu0 %v1044
    %v1165 = vpop.f32.mrf.mxu0
    %v1166 = vadd.f32 %v1028, %v1165
    %v1167 = vpop.f32.mrf.mxu0
    %1168 = vmatprep.mubr.f32.mxu0 0.0
    %1169 = vmatmul.mubr.f32.gmra.mxu0 %v1047
    %v1170 = vpop.f32.mrf.mxu0
    %v1171 = vadd.f32 %v1028, %v1170
    %v1172 = vpop.f32.mrf.mxu0
    %1173 = vmatprep.mubr.f32.mxu0 0.0
    %1174 = vmatmul.mubr.f32.gmra.mxu0 %v1050
    %v1175 = vpop.f32.mrf.mxu0
    %v1176 = vadd.f32 %v1028, %v1175
    %v1177 = vpop.f32.mrf.mxu0
    %1178 = vmatprep.mubr.f32.mxu0 0.0
    %1179 = vmatmul.mubr.f32.gmra.mxu0 %v1053
    %v1180 = vpop.f32.mrf.mxu0
    %v1181 = vadd.f32 %v1028, %v1180
    %v1182 = vpop.f32.mrf.mxu0
    %1183 = vmatprep.mubr.f32.mxu0 0.0
    %1184 = vmatmul.mubr.f32.gmra.mxu0 %v1056
    %v1185 = vpop.f32.mrf.mxu0
    %v1186 = vadd.f32 %v1028, %v1185
    %v1187 = vpop.f32.mrf.mxu0
    %1188 = vmatprep.mubr.f32.mxu0 0.0
    %1189 = vmatmul.mubr.f32.gmra.mxu0 %v1059
    %v1190 = vpop.f32.mrf.mxu0
    %v1191 = vadd.f32 %v1028, %v1190
    %v1192 = vpop.f32.mrf.mxu0
    %1193 = vmatprep.mubr.f32.mxu0 0.0
    %1194 = vmatmul.mubr.f32.gmra.mxu0 %v1062
    %v1195 = vpop.f32.mrf.mxu0
    %v1196 = vadd.f32 %v1028, %v1195
    %v1197 = vpop.f32.mrf.mxu0
    %1198 = vmatprep.mubr.f32.mxu0 0.0
    %1199 = vmatmul.mubr.f32.gmra.mxu0 %v1065
    %v1200 = vpop.f32.mrf.mxu0
    %v1201 = vadd.f32 %v1028, %v1200
    %v1202 = vpop.f32.mrf.mxu0
    %1203 = vmatprep.mubr.f32.mxu0 0.0
    %1204 = vmatmul.mubr.f32.gmra.mxu0 %v1068
    %v1205 = vpop.f32.mrf.mxu0
    %v1206 = vadd.f32 %v1028, %v1205
    %v1207 = vpop.f32.mrf.mxu0
    %1208 = vmatprep.mubr.f32.mxu0 0.0
    %1209 = vmatmul.mubr.f32.gmra.mxu0 %v1071
    %v1210 = vpop.f32.mrf.mxu0
    %v1211 = vadd.f32 %v1028, %v1210
    %v1212 = vpop.f32.mrf.mxu0
    %1213 = vmatprep.mubr.f32.mxu0 0.0
    %1214 = vmatmul.mubr.f32.gmra.mxu0 %v1074
    %v1215 = vpop.f32.mrf.mxu0
    %v1216 = vadd.f32 %v1028, %v1215
    %v1217 = vpop.f32.mrf.mxu0
    %1218 = vmatprep.mubr.f32.mxu0 0.0
    %1219 = vmatmul.mubr.f32.gmra.mxu0 %v1077
    %v1220 = vpop.f32.mrf.mxu0
    %v1221 = vadd.f32 %v1028, %v1220
    %v1222 = vpop.f32.mrf.mxu0
    %1223 = vdwg.mxu0
    %v1224 = vmax.f32 %v1146, 0.0
    %v1225 = vmax.f32 %v1151, 0.0
    %v1226 = vmax.f32 %v1156, 0.0
    %v1227 = vmax.f32 %v1161, 0.0
    %v1228 = vmax.f32 %v1166, 0.0
    %v1229 = vmax.f32 %v1171, 0.0
    %v1230 = vmax.f32 %v1176, 0.0
    %v1231 = vmax.f32 %v1181, 0.0
    %v1232 = vmax.f32 %v1186, 0.0
    %v1233 = vmax.f32 %v1191, 0.0
    %v1234 = vmax.f32 %v1196, 0.0
    %v1235 = vmax.f32 %v1201, 0.0
    %v1236 = vmax.f32 %v1206, 0.0
    %v1237 = vmax.f32 %v1211, 0.0
    %v1238 = vmax.f32 %v1216, 0.0
    %v1239 = vmax.f32 %v1221, 0.0
    %v1240 = vld [vmem:[%s9] sm:$0xff]
    %v1241 = vld [vmem:[%s9 + $0x8] sm:$0xff]
    %v1242 = vld [vmem:[%s9 + $0x10] sm:$0xff]
    %v1243 = vld [vmem:[%s9 + $0x18] sm:$0xff]
    %v1244 = vld [vmem:[%s9 + $0x20] sm:$0xff]
    %v1245 = vld [vmem:[%s9 + $0x28] sm:$0xff]
    %v1246 = vld [vmem:[%s9 + $0x30] sm:$0xff]
    %v1247 = vld [vmem:[%s9 + $0x38] sm:$0xff]
    %v1248 = vld [vmem:[%s10] sm:$0x1]
    %v1250 = vlaneseq
    %v1251 = vshrl.u32 %v1250, 7
    %v1252 = vsub.s32 0, %v1251
    %v1253 = vrot.slane %v1248, %v1252
    %vm1255 = vcmask 523264
    %v1257 = vsel %vm1255, %v1224, 0
    %v1260 = vsel %vm1255, %v1225, 0
    %v1263 = vsel %vm1255, %v1226, 0
    %v1266 = vsel %vm1255, %v1227, 0
    %v1269 = vsel %vm1255, %v1228, 0
    %v1272 = vsel %vm1255, %v1229, 0
    %v1275 = vsel %vm1255, %v1230, 0
    %v1278 = vsel %vm1255, %v1231, 0
    %v1281 = vsel %vm1255, %v1232, 0
    %v1284 = vsel %vm1255, %v1233, 0
    %v1287 = vsel %vm1255, %v1234, 0
    %v1290 = vsel %vm1255, %v1235, 0
    %v1293 = vsel %vm1255, %v1236, 0
    %v1296 = vsel %vm1255, %v1237, 0
    %v1299 = vsel %vm1255, %v1238, 0
    %v1302 = vsel %vm1255, %v1239, 0
    %1304 = vmatprep.subr.mxu0 0.0
    %1305 = vmatpush1.msra.mxu0 0.0
    %1306 = vmatprep.subr.mxu0 0.0
    %1307 = vmatpush1.msra.mxu0 0.0
    %1308 = vmatprep.subr.mxu0 0.0
    %1309 = vmatpush1.msra.mxu0 0.0
    %1310 = vmatprep.subr.mxu0 0.0
    %1311 = vmatpush1.msra.mxu0 0.0
    %1312 = vmatprep.subr.mxu0 0.0
    %1313 = vmatpush1.msra.mxu0 0.0
    %1314 = vmatprep.subr.mxu0 0.0
    %1315 = vmatpush1.msra.mxu0 0.0
    %1316 = vmatprep.subr.mxu0 0.0
    %1317 = vmatpush1.msra.mxu0 0.0
    %1318 = vmatprep.subr.mxu0 0.0
    %1319 = vmatpush1.msra.mxu0 0.0
    %1320 = vmatprep.subr.mxu0 0.0
    %1321 = vmatpush1.msra.mxu0 %v1247
    %1322 = vmatprep.subr.mxu0 0.0
    %1323 = vmatpush1.msra.mxu0 %v1246
    %1324 = vmatprep.subr.mxu0 0.0
    %1325 = vmatpush1.msra.mxu0 %v1245
    %1326 = vmatprep.subr.mxu0 0.0
    %1327 = vmatpush1.msra.mxu0 %v1244
    %1328 = vmatprep.subr.mxu0 0.0
    %1329 = vmatpush1.msra.mxu0 %v1243
    %1330 = vmatprep.subr.mxu0 0.0
    %1331 = vmatpush1.msra.mxu0 %v1242
    %1332 = vmatprep.subr.mxu0 0.0
    %1333 = vmatpush1.msra.mxu0 %v1241
    %1334 = vmatprep.subr.mxu0 0.0
    %1335 = vmatpush1.msra.mxu0 %v1240
    %1336 = vmatprep.subr.mxu0 0.0
    %1337 = vmatpush2.msra.mxu0 0.0
    %1338 = vmatprep.subr.mxu0 0.0
    %1339 = vmatpush2.msra.mxu0 0.0
    %1340 = vmatprep.subr.mxu0 0.0
    %1341 = vmatpush2.msra.mxu0 0.0
    %1342 = vmatprep.subr.mxu0 0.0
    %1343 = vmatpush2.msra.mxu0 0.0
    %1344 = vmatprep.subr.mxu0 0.0
    %1345 = vmatpush2.msra.mxu0 0.0
    %1346 = vmatprep.subr.mxu0 0.0
    %1347 = vmatpush2.msra.mxu0 0.0
    %1348 = vmatprep.subr.mxu0 0.0
    %1349 = vmatpush2.msra.mxu0 0.0
    %1350 = vmatprep.subr.mxu0 0.0
    %1351 = vmatpush2.msra.mxu0 0.0
    %1352 = vmatprep.subr.mxu0 0.0
    %1353 = vmatpush2.msra.mxu0 0.0
    %1354 = vmatprep.subr.mxu0 0.0
    %1355 = vmatpush2.msra.mxu0 0.0
    %1356 = vmatprep.subr.mxu0 0.0
    %1357 = vmatpush2.msra.mxu0 0.0
    %1358 = vmatprep.subr.mxu0 0.0
    %1359 = vmatpush2.msra.mxu0 0.0
    %1360 = vmatprep.subr.mxu0 0.0
    %1361 = vmatpush2.msra.mxu0 0.0
    %1362 = vmatprep.subr.mxu0 0.0
    %1363 = vmatpush2.msra.mxu0 0.0
    %1364 = vmatprep.subr.mxu0 0.0
    %1365 = vmatpush2.msra.mxu0 0.0
    %1366 = vmatprep.subr.mxu0 0.0
    %1367 = vmatpush2.msra.mxu0 0.0
    %1368 = vmatprep.mubr.f32.mxu0 0.0
    %1369 = vmatmul.mubr.f32.gmra.mxu0 %v1257
    %v1370 = vpop.f32.mrf.mxu0
    %v1371 = vadd.f32 %v1253, %v1370
    %v1372 = vpop.f32.mrf.mxu0
    %1373 = vmatprep.mubr.f32.mxu0 0.0
    %1374 = vmatmul.mubr.f32.gmra.mxu0 %v1260
    %v1375 = vpop.f32.mrf.mxu0
    %v1376 = vadd.f32 %v1253, %v1375
    %v1377 = vpop.f32.mrf.mxu0
    %1378 = vmatprep.mubr.f32.mxu0 0.0
    %1379 = vmatmul.mubr.f32.gmra.mxu0 %v1263
    %v1380 = vpop.f32.mrf.mxu0
    %v1381 = vadd.f32 %v1253, %v1380
    %v1382 = vpop.f32.mrf.mxu0
    %1383 = vmatprep.mubr.f32.mxu0 0.0
    %1384 = vmatmul.mubr.f32.gmra.mxu0 %v1266
    %v1385 = vpop.f32.mrf.mxu0
    %v1386 = vadd.f32 %v1253, %v1385
    %v1387 = vpop.f32.mrf.mxu0
    %1388 = vmatprep.mubr.f32.mxu0 0.0
    %1389 = vmatmul.mubr.f32.gmra.mxu0 %v1269
    %v1390 = vpop.f32.mrf.mxu0
    %v1391 = vadd.f32 %v1253, %v1390
    %v1392 = vpop.f32.mrf.mxu0
    %1393 = vmatprep.mubr.f32.mxu0 0.0
    %1394 = vmatmul.mubr.f32.gmra.mxu0 %v1272
    %v1395 = vpop.f32.mrf.mxu0
    %v1396 = vadd.f32 %v1253, %v1395
    %v1397 = vpop.f32.mrf.mxu0
    %1398 = vmatprep.mubr.f32.mxu0 0.0
    %1399 = vmatmul.mubr.f32.gmra.mxu0 %v1275
    %v1400 = vpop.f32.mrf.mxu0
    %v1401 = vadd.f32 %v1253, %v1400
    %v1402 = vpop.f32.mrf.mxu0
    %1403 = vmatprep.mubr.f32.mxu0 0.0
    %1404 = vmatmul.mubr.f32.gmra.mxu0 %v1278
    %v1405 = vpop.f32.mrf.mxu0
    %v1406 = vadd.f32 %v1253, %v1405
    %v1407 = vpop.f32.mrf.mxu0
    %1408 = vmatprep.mubr.f32.mxu0 0.0
    %1409 = vmatmul.mubr.f32.gmra.mxu0 %v1281
    %v1410 = vpop.f32.mrf.mxu0
    %v1411 = vadd.f32 %v1253, %v1410
    %v1412 = vpop.f32.mrf.mxu0
    %1413 = vmatprep.mubr.f32.mxu0 0.0
    %1414 = vmatmul.mubr.f32.gmra.mxu0 %v1284
    %v1415 = vpop.f32.mrf.mxu0
    %v1416 = vadd.f32 %v1253, %v1415
    %v1417 = vpop.f32.mrf.mxu0
    %1418 = vmatprep.mubr.f32.mxu0 0.0
    %1419 = vmatmul.mubr.f32.gmra.mxu0 %v1287
    %v1420 = vpop.f32.mrf.mxu0
    %v1421 = vadd.f32 %v1253, %v1420
    %v1422 = vpop.f32.mrf.mxu0
    %1423 = vmatprep.mubr.f32.mxu0 0.0
    %1424 = vmatmul.mubr.f32.gmra.mxu0 %v1290
    %v1425 = vpop.f32.mrf.mxu0
    %v1426 = vadd.f32 %v1253, %v1425
    %v1427 = vpop.f32.mrf.mxu0
    %1428 = vmatprep.mubr.f32.mxu0 0.0
    %1429 = vmatmul.mubr.f32.gmra.mxu0 %v1293
    %v1430 = vpop.f32.mrf.mxu0
    %v1431 = vadd.f32 %v1253, %v1430
    %v1432 = vpop.f32.mrf.mxu0
    %1433 = vmatprep.mubr.f32.mxu0 0.0
    %1434 = vmatmul.mubr.f32.gmra.mxu0 %v1296
    %v1435 = vpop.f32.mrf.mxu0
    %v1436 = vadd.f32 %v1253, %v1435
    %v1437 = vpop.f32.mrf.mxu0
    %1438 = vmatprep.mubr.f32.mxu0 0.0
    %1439 = vmatmul.mubr.f32.gmra.mxu0 %v1299
    %v1440 = vpop.f32.mrf.mxu0
    %v1441 = vadd.f32 %v1253, %v1440
    %v1442 = vpop.f32.mrf.mxu0
    %1443 = vmatprep.mubr.f32.mxu0 0.0
    %1444 = vmatmul.mubr.f32.gmra.mxu0 %v1302
    %v1445 = vpop.f32.mrf.mxu0
    %v1446 = vadd.f32 %v1253, %v1445
    %v1447 = vpop.f32.mrf.mxu0
    %1448 = vdwg.mxu0
    %1481 = vrot.lane.b32.xlu0 %v315, 96
    %v1482 = vpop.permute.xlu0 %1481
    %1483 = vrot.lane.b32.xlu0 %v320, 96
    %v1484 = vpop.permute.xlu0 %1483
    %1485 = vrot.lane.b32.xlu0 %v325, 96
    %v1486 = vpop.permute.xlu0 %1485
    %1487 = vrot.lane.b32.xlu0 %v330, 96
    %v1488 = vpop.permute.xlu0 %1487
    %1489 = vrot.lane.b32.xlu0 %v335, 96
    %v1490 = vpop.permute.xlu0 %1489
    %1491 = vrot.lane.b32.xlu0 %v340, 96
    %v1492 = vpop.permute.xlu0 %1491
    %1493 = vrot.lane.b32.xlu0 %v345, 96
    %v1494 = vpop.permute.xlu0 %1493
    %1495 = vrot.lane.b32.xlu0 %v350, 96
    %v1496 = vpop.permute.xlu0 %1495
    %1497 = vrot.lane.b32.xlu0 %v355, 96
    %v1498 = vpop.permute.xlu0 %1497
    %1499 = vrot.lane.b32.xlu0 %v360, 96
    %v1500 = vpop.permute.xlu0 %1499
    %1501 = vrot.lane.b32.xlu0 %v365, 96
    %v1502 = vpop.permute.xlu0 %1501
    %1503 = vrot.lane.b32.xlu0 %v370, 96
    %v1504 = vpop.permute.xlu0 %1503
    %1505 = vrot.lane.b32.xlu0 %v375, 96
    %v1506 = vpop.permute.xlu0 %1505
    %1507 = vrot.lane.b32.xlu0 %v380, 96
    %v1508 = vpop.permute.xlu0 %1507
    %1509 = vrot.lane.b32.xlu0 %v385, 96
    %v1510 = vpop.permute.xlu0 %1509
    %1511 = vrot.lane.b32.xlu0 %v390, 96
    %v1512 = vpop.permute.xlu0 %1511
    %1513 = vrot.lane.b32.xlu0 %v395, 96
    %v1514 = vpop.permute.xlu0 %1513
    %1515 = vrot.lane.b32.xlu0 %v400, 96
    %v1516 = vpop.permute.xlu0 %1515
    %1517 = vrot.lane.b32.xlu0 %v405, 96
    %v1518 = vpop.permute.xlu0 %1517
    %1519 = vrot.lane.b32.xlu0 %v410, 96
    %v1520 = vpop.permute.xlu0 %1519
    %1521 = vrot.lane.b32.xlu0 %v415, 96
    %v1522 = vpop.permute.xlu0 %1521
    %1523 = vrot.lane.b32.xlu0 %v420, 96
    %v1524 = vpop.permute.xlu0 %1523
    %1525 = vrot.lane.b32.xlu0 %v425, 96
    %v1526 = vpop.permute.xlu0 %1525
    %1527 = vrot.lane.b32.xlu0 %v430, 96
    %v1528 = vpop.permute.xlu0 %1527
    %1529 = vrot.lane.b32.xlu0 %v435, 96
    %v1530 = vpop.permute.xlu0 %1529
    %1531 = vrot.lane.b32.xlu0 %v440, 96
    %v1532 = vpop.permute.xlu0 %1531
    %1533 = vrot.lane.b32.xlu0 %v445, 96
    %v1534 = vpop.permute.xlu0 %1533
    %1535 = vrot.lane.b32.xlu0 %v450, 96
    %v1536 = vpop.permute.xlu0 %1535
    %1537 = vrot.lane.b32.xlu0 %v455, 96
    %v1538 = vpop.permute.xlu0 %1537
    %1539 = vrot.lane.b32.xlu0 %v460, 96
    %v1540 = vpop.permute.xlu0 %1539
    %1541 = vrot.lane.b32.xlu0 %v465, 96
    %v1542 = vpop.permute.xlu0 %1541
    %1543 = vrot.lane.b32.xlu0 %v470, 96
    %v1544 = vpop.permute.xlu0 %1543
    %1577 = vmatprep.subr.mxu0 0.0
    %1578 = vmatpush1.msra.mxu0 %v1446
    %1579 = vmatprep.subr.mxu0 0.0
    %1580 = vmatpush1.msra.mxu0 %v1441
    %1581 = vmatprep.subr.mxu0 0.0
    %1582 = vmatpush1.msra.mxu0 %v1436
    %1583 = vmatprep.subr.mxu0 0.0
    %1584 = vmatpush1.msra.mxu0 %v1431
    %1585 = vmatprep.subr.mxu0 0.0
    %1586 = vmatpush1.msra.mxu0 %v1426
    %1587 = vmatprep.subr.mxu0 0.0
    %1588 = vmatpush1.msra.mxu0 %v1421
    %1589 = vmatprep.subr.mxu0 0.0
    %1590 = vmatpush1.msra.mxu0 %v1416
    %1591 = vmatprep.subr.mxu0 0.0
    %1592 = vmatpush1.msra.mxu0 %v1411
    %1593 = vmatprep.subr.mxu0 0.0
    %1594 = vmatpush1.msra.mxu0 %v1406
    %1595 = vmatprep.subr.mxu0 0.0
    %1596 = vmatpush1.msra.mxu0 %v1401
    %1597 = vmatprep.subr.mxu0 0.0
    %1598 = vmatpush1.msra.mxu0 %v1396
    %1599 = vmatprep.subr.mxu0 0.0
    %1600 = vmatpush1.msra.mxu0 %v1391
    %1601 = vmatprep.subr.mxu0 0.0
    %1602 = vmatpush1.msra.mxu0 %v1386
    %1603 = vmatprep.subr.mxu0 0.0
    %1604 = vmatpush1.msra.mxu0 %v1381
    %1605 = vmatprep.subr.mxu0 0.0
    %1606 = vmatpush1.msra.mxu0 %v1376
    %1607 = vmatprep.subr.mxu0 0.0
    %1608 = vmatpush1.msra.mxu0 %v1371
    %1609 = vmatprep.subr.mxu0 0.0
    %1610 = vmatpush2.msra.mxu0 0.0
    %1611 = vmatprep.subr.mxu0 0.0
    %1612 = vmatpush2.msra.mxu0 0.0
    %1613 = vmatprep.subr.mxu0 0.0
    %1614 = vmatpush2.msra.mxu0 0.0
    %1615 = vmatprep.subr.mxu0 0.0
    %1616 = vmatpush2.msra.mxu0 0.0
    %1617 = vmatprep.subr.mxu0 0.0
    %1618 = vmatpush2.msra.mxu0 0.0
    %1619 = vmatprep.subr.mxu0 0.0
    %1620 = vmatpush2.msra.mxu0 0.0
    %1621 = vmatprep.subr.mxu0 0.0
    %1622 = vmatpush2.msra.mxu0 0.0
    %1623 = vmatprep.subr.mxu0 0.0
    %1624 = vmatpush2.msra.mxu0 0.0
    %1625 = vmatprep.subr.mxu0 0.0
    %1626 = vmatpush2.msra.mxu0 0.0
    %1627 = vmatprep.subr.mxu0 0.0
    %1628 = vmatpush2.msra.mxu0 0.0
    %1629 = vmatprep.subr.mxu0 0.0
    %1630 = vmatpush2.msra.mxu0 0.0
    %1631 = vmatprep.subr.mxu0 0.0
    %1632 = vmatpush2.msra.mxu0 0.0
    %1633 = vmatprep.subr.mxu0 0.0
    %1634 = vmatpush2.msra.mxu0 0.0
    %1635 = vmatprep.subr.mxu0 0.0
    %1636 = vmatpush2.msra.mxu0 0.0
    %1637 = vmatprep.subr.mxu0 0.0
    %1638 = vmatpush2.msra.mxu0 0.0
    %1639 = vmatprep.subr.mxu0 0.0
    %1640 = vmatpush2.msra.mxu0 0.0
    %1641 = vmatprep.mubr.bf16.mxu0 0
    %1642 = vmatmul.mubr.bf16.gmra.mxu0 %v537
    %v1643 = vpop.f32.mrf.mxu0
    %v1644 = vadd.f32 %v1482, %v1643
    %v1645 = vpop.f32.mrf.mxu0
    %v1646 = vpop.f32.mrf.mxu0
    %v1647 = vadd.f32 %v1484, %v1646
    %v1648 = vpop.f32.mrf.mxu0
    %1649 = vmatprep.mubr.bf16.mxu0 0
    %1650 = vmatmul.mubr.bf16.gmra.mxu0 %v538
    %v1651 = vpop.f32.mrf.mxu0
    %v1652 = vadd.f32 %v1486, %v1651
    %v1653 = vpop.f32.mrf.mxu0
    %v1654 = vpop.f32.mrf.mxu0
    %v1655 = vadd.f32 %v1488, %v1654
    %v1656 = vpop.f32.mrf.mxu0
    %1657 = vmatprep.mubr.bf16.mxu0 0
    %1658 = vmatmul.mubr.bf16.gmra.mxu0 %v539
    %v1659 = vpop.f32.mrf.mxu0
    %v1660 = vadd.f32 %v1490, %v1659
    %v1661 = vpop.f32.mrf.mxu0
    %v1662 = vpop.f32.mrf.mxu0
    %v1663 = vadd.f32 %v1492, %v1662
    %v1664 = vpop.f32.mrf.mxu0
    %1665 = vmatprep.mubr.bf16.mxu0 0
    %1666 = vmatmul.mubr.bf16.gmra.mxu0 %v540
    %v1667 = vpop.f32.mrf.mxu0
    %v1668 = vadd.f32 %v1494, %v1667
    %v1669 = vpop.f32.mrf.mxu0
    %v1670 = vpop.f32.mrf.mxu0
    %v1671 = vadd.f32 %v1496, %v1670
    %v1672 = vpop.f32.mrf.mxu0
    %1673 = vmatprep.mubr.bf16.mxu0 0
    %1674 = vmatmul.mubr.bf16.gmra.mxu0 %v541
    %v1675 = vpop.f32.mrf.mxu0
    %v1676 = vadd.f32 %v1498, %v1675
    %v1677 = vpop.f32.mrf.mxu0
    %v1678 = vpop.f32.mrf.mxu0
    %v1679 = vadd.f32 %v1500, %v1678
    %v1680 = vpop.f32.mrf.mxu0
    %1681 = vmatprep.mubr.bf16.mxu0 0
    %1682 = vmatmul.mubr.bf16.gmra.mxu0 %v542
    %v1683 = vpop.f32.mrf.mxu0
    %v1684 = vadd.f32 %v1502, %v1683
    %v1685 = vpop.f32.mrf.mxu0
    %v1686 = vpop.f32.mrf.mxu0
    %v1687 = vadd.f32 %v1504, %v1686
    %v1688 = vpop.f32.mrf.mxu0
    %1689 = vmatprep.mubr.bf16.mxu0 0
    %1690 = vmatmul.mubr.bf16.gmra.mxu0 %v543
    %v1691 = vpop.f32.mrf.mxu0
    %v1692 = vadd.f32 %v1506, %v1691
    %v1693 = vpop.f32.mrf.mxu0
    %v1694 = vpop.f32.mrf.mxu0
    %v1695 = vadd.f32 %v1508, %v1694
    %v1696 = vpop.f32.mrf.mxu0
    %1697 = vmatprep.mubr.bf16.mxu0 0
    %1698 = vmatmul.mubr.bf16.gmra.mxu0 %v544
    %v1699 = vpop.f32.mrf.mxu0
    %v1700 = vadd.f32 %v1510, %v1699
    %v1701 = vpop.f32.mrf.mxu0
    %v1702 = vpop.f32.mrf.mxu0
    %v1703 = vadd.f32 %v1512, %v1702
    %v1704 = vpop.f32.mrf.mxu0
    %1705 = vmatprep.mubr.bf16.mxu0 0
    %1706 = vmatmul.mubr.bf16.gmra.mxu0 %v545
    %v1707 = vpop.f32.mrf.mxu0
    %v1708 = vadd.f32 %v1514, %v1707
    %v1709 = vpop.f32.mrf.mxu0
    %v1710 = vpop.f32.mrf.mxu0
    %v1711 = vadd.f32 %v1516, %v1710
    %v1712 = vpop.f32.mrf.mxu0
    %1713 = vmatprep.mubr.bf16.mxu0 0
    %1714 = vmatmul.mubr.bf16.gmra.mxu0 %v546
    %v1715 = vpop.f32.mrf.mxu0
    %v1716 = vadd.f32 %v1518, %v1715
    %v1717 = vpop.f32.mrf.mxu0
    %v1718 = vpop.f32.mrf.mxu0
    %v1719 = vadd.f32 %v1520, %v1718
    %v1720 = vpop.f32.mrf.mxu0
    %1721 = vmatprep.mubr.bf16.mxu0 0
    %1722 = vmatmul.mubr.bf16.gmra.mxu0 %v547
    %v1723 = vpop.f32.mrf.mxu0
    %v1724 = vadd.f32 %v1522, %v1723
    %v1725 = vpop.f32.mrf.mxu0
    %v1726 = vpop.f32.mrf.mxu0
    %v1727 = vadd.f32 %v1524, %v1726
    %v1728 = vpop.f32.mrf.mxu0
    %1729 = vmatprep.mubr.bf16.mxu0 0
    %1730 = vmatmul.mubr.bf16.gmra.mxu0 %v548
    %v1731 = vpop.f32.mrf.mxu0
    %v1732 = vadd.f32 %v1526, %v1731
    %v1733 = vpop.f32.mrf.mxu0
    %v1734 = vpop.f32.mrf.mxu0
    %v1735 = vadd.f32 %v1528, %v1734
    %v1736 = vpop.f32.mrf.mxu0
    %1737 = vmatprep.mubr.bf16.mxu0 0
    %1738 = vmatmul.mubr.bf16.gmra.mxu0 %v549
    %v1739 = vpop.f32.mrf.mxu0
    %v1740 = vadd.f32 %v1530, %v1739
    %v1741 = vpop.f32.mrf.mxu0
    %v1742 = vpop.f32.mrf.mxu0
    %v1743 = vadd.f32 %v1532, %v1742
    %v1744 = vpop.f32.mrf.mxu0
    %1745 = vmatprep.mubr.bf16.mxu0 0
    %1746 = vmatmul.mubr.bf16.gmra.mxu0 %v550
    %v1747 = vpop.f32.mrf.mxu0
    %v1748 = vadd.f32 %v1534, %v1747
    %v1749 = vpop.f32.mrf.mxu0
    %v1750 = vpop.f32.mrf.mxu0
    %v1751 = vadd.f32 %v1536, %v1750
    %v1752 = vpop.f32.mrf.mxu0
    %1753 = vmatprep.mubr.bf16.mxu0 0
    %1754 = vmatmul.mubr.bf16.gmra.mxu0 %v551
    %v1755 = vpop.f32.mrf.mxu0
    %v1756 = vadd.f32 %v1538, %v1755
    %v1757 = vpop.f32.mrf.mxu0
    %v1758 = vpop.f32.mrf.mxu0
    %v1759 = vadd.f32 %v1540, %v1758
    %v1760 = vpop.f32.mrf.mxu0
    %1761 = vmatprep.mubr.bf16.mxu0 0
    %1762 = vmatmul.mubr.bf16.gmra.mxu0 %v552
    %v1763 = vpop.f32.mrf.mxu0
    %v1764 = vadd.f32 %v1542, %v1763
    %v1765 = vpop.f32.mrf.mxu0
    %v1766 = vpop.f32.mrf.mxu0
    %v1767 = vadd.f32 %v1544, %v1766
    %v1768 = vpop.f32.mrf.mxu0
    %1769 = vdwg.mxu0
    %v1770 = vmax.f32 %v1644, 0.0
    %v1771 = vmax.f32 %v1647, 0.0
    %v1772 = vmax.f32 %v1652, 0.0
    %v1773 = vmax.f32 %v1655, 0.0
    %v1774 = vmax.f32 %v1660, 0.0
    %v1775 = vmax.f32 %v1663, 0.0
    %v1776 = vmax.f32 %v1668, 0.0
    %v1777 = vmax.f32 %v1671, 0.0
    %v1778 = vmax.f32 %v1676, 0.0
    %v1779 = vmax.f32 %v1679, 0.0
    %v1780 = vmax.f32 %v1684, 0.0
    %v1781 = vmax.f32 %v1687, 0.0
    %v1782 = vmax.f32 %v1692, 0.0
    %v1783 = vmax.f32 %v1695, 0.0
    %v1784 = vmax.f32 %v1700, 0.0
    %v1785 = vmax.f32 %v1703, 0.0
    %v1786 = vmax.f32 %v1708, 0.0
    %v1787 = vmax.f32 %v1711, 0.0
    %v1788 = vmax.f32 %v1716, 0.0
    %v1789 = vmax.f32 %v1719, 0.0
    %v1790 = vmax.f32 %v1724, 0.0
    %v1791 = vmax.f32 %v1727, 0.0
    %v1792 = vmax.f32 %v1732, 0.0
    %v1793 = vmax.f32 %v1735, 0.0
    %v1794 = vmax.f32 %v1740, 0.0
    %v1795 = vmax.f32 %v1743, 0.0
    %v1796 = vmax.f32 %v1748, 0.0
    %v1797 = vmax.f32 %v1751, 0.0
    %v1798 = vmax.f32 %v1756, 0.0
    %v1799 = vmax.f32 %v1759, 0.0
    %v1800 = vmax.f32 %v1764, 0.0
    %v1801 = vmax.f32 %v1767, 0.0
    %1802 = vmatprep.subr.mxu0 0.0
    %1803 = vmatpush1.msra.mxu0 %v1785
    %1804 = vmatprep.subr.mxu0 0.0
    %1805 = vmatpush1.msra.mxu0 %v1784
    %1806 = vmatprep.subr.mxu0 0.0
    %1807 = vmatpush1.msra.mxu0 %v1783
    %1808 = vmatprep.subr.mxu0 0.0
    %1809 = vmatpush1.msra.mxu0 %v1782
    %1810 = vmatprep.subr.mxu0 0.0
    %1811 = vmatpush1.msra.mxu0 %v1781
    %1812 = vmatprep.subr.mxu0 0.0
    %1813 = vmatpush1.msra.mxu0 %v1780
    %1814 = vmatprep.subr.mxu0 0.0
    %1815 = vmatpush1.msra.mxu0 %v1779
    %1816 = vmatprep.subr.mxu0 0.0
    %1817 = vmatpush1.msra.mxu0 %v1778
    %1818 = vmatprep.subr.mxu0 0.0
    %1819 = vmatpush1.msra.mxu0 %v1777
    %1820 = vmatprep.subr.mxu0 0.0
    %1821 = vmatpush1.msra.mxu0 %v1776
    %1822 = vmatprep.subr.mxu0 0.0
    %1823 = vmatpush1.msra.mxu0 %v1775
    %1824 = vmatprep.subr.mxu0 0.0
    %1825 = vmatpush1.msra.mxu0 %v1774
    %1826 = vmatprep.subr.mxu0 0.0
    %1827 = vmatpush1.msra.mxu0 %v1773
    %1828 = vmatprep.subr.mxu0 0.0
    %1829 = vmatpush1.msra.mxu0 %v1772
    %1830 = vmatprep.subr.mxu0 0.0
    %1831 = vmatpush1.msra.mxu0 %v1771
    %1832 = vmatprep.subr.mxu0 0.0
    %1833 = vmatpush1.msra.mxu0 %v1770
    %1834 = vmatprep.subr.mxu0 0.0
    %1835 = vmatpush2.msra.mxu0 %v1801
    %1836 = vmatprep.subr.mxu0 0.0
    %1837 = vmatpush2.msra.mxu0 %v1800
    %1838 = vmatprep.subr.mxu0 0.0
    %1839 = vmatpush2.msra.mxu0 %v1799
    %1840 = vmatprep.subr.mxu0 0.0
    %1841 = vmatpush2.msra.mxu0 %v1798
    %1842 = vmatprep.subr.mxu0 0.0
    %1843 = vmatpush2.msra.mxu0 %v1797
    %1844 = vmatprep.subr.mxu0 0.0
    %1845 = vmatpush2.msra.mxu0 %v1796
    %1846 = vmatprep.subr.mxu0 0.0
    %1847 = vmatpush2.msra.mxu0 %v1795
    %1848 = vmatprep.subr.mxu0 0.0
    %1849 = vmatpush2.msra.mxu0 %v1794
    %1850 = vmatprep.subr.mxu0 0.0
    %1851 = vmatpush2.msra.mxu0 %v1793
    %1852 = vmatprep.subr.mxu0 0.0
    %1853 = vmatpush2.msra.mxu0 %v1792
    %1854 = vmatprep.subr.mxu0 0.0
    %1855 = vmatpush2.msra.mxu0 %v1791
    %1856 = vmatprep.subr.mxu0 0.0
    %1857 = vmatpush2.msra.mxu0 %v1790
    %1858 = vmatprep.subr.mxu0 0.0
    %1859 = vmatpush2.msra.mxu0 %v1789
    %1860 = vmatprep.subr.mxu0 0.0
    %1861 = vmatpush2.msra.mxu0 %v1788
    %1862 = vmatprep.subr.mxu0 0.0
    %1863 = vmatpush2.msra.mxu0 %v1787
    %1864 = vmatprep.subr.mxu0 0.0
    %1865 = vmatpush2.msra.mxu0 %v1786
    %1866 = vmatprep.mubr.bf16.mxu0 %v843
    %1867 = vmatmul.mubr.bf16.gmra.mxu0 %v842
    %v1868 = vpop.f32.mrf.mxu0
    %v1869 = vadd.f32 0.0, %v1868
    %v1870 = vpop.f32.mrf.mxu0
    %v1871 = vpop.f32.mrf.mxu0
    %v1872 = vadd.f32 0.0, %v1871
    %v1873 = vpop.f32.mrf.mxu0
    %1874 = vmatprep.mubr.bf16.mxu0 %v845
    %1875 = vmatmul.mubr.bf16.gmra.mxu0 %v844
    %v1876 = vpop.f32.mrf.mxu0
    %v1877 = vadd.f32 0.0, %v1876
    %v1878 = vpop.f32.mrf.mxu0
    %v1879 = vpop.f32.mrf.mxu0
    %v1880 = vadd.f32 0.0, %v1879
    %v1881 = vpop.f32.mrf.mxu0
    %1882 = vmatprep.mubr.bf16.mxu0 %v847
    %1883 = vmatmul.mubr.bf16.gmra.mxu0 %v846
    %v1884 = vpop.f32.mrf.mxu0
    %v1885 = vadd.f32 0.0, %v1884
    %v1886 = vpop.f32.mrf.mxu0
    %v1887 = vpop.f32.mrf.mxu0
    %v1888 = vadd.f32 0.0, %v1887
    %v1889 = vpop.f32.mrf.mxu0
    %1890 = vmatprep.mubr.bf16.mxu0 %v849
    %1891 = vmatmul.mubr.bf16.gmra.mxu0 %v848
    %v1892 = vpop.f32.mrf.mxu0
    %v1893 = vadd.f32 0.0, %v1892
    %v1894 = vpop.f32.mrf.mxu0
    %v1895 = vpop.f32.mrf.mxu0
    %v1896 = vadd.f32 0.0, %v1895
    %v1897 = vpop.f32.mrf.mxu0
    %1898 = vmatprep.mubr.bf16.mxu0 %v851
    %1899 = vmatmul.mubr.bf16.gmra.mxu0 %v850
    %v1900 = vpop.f32.mrf.mxu0
    %v1901 = vadd.f32 0.0, %v1900
    %v1902 = vpop.f32.mrf.mxu0
    %v1903 = vpop.f32.mrf.mxu0
    %v1904 = vadd.f32 0.0, %v1903
    %v1905 = vpop.f32.mrf.mxu0
    %1906 = vmatprep.mubr.bf16.mxu0 %v853
    %1907 = vmatmul.mubr.bf16.gmra.mxu0 %v852
    %v1908 = vpop.f32.mrf.mxu0
    %v1909 = vadd.f32 0.0, %v1908
    %v1910 = vpop.f32.mrf.mxu0
    %v1911 = vpop.f32.mrf.mxu0
    %v1912 = vadd.f32 0.0, %v1911
    %v1913 = vpop.f32.mrf.mxu0
    %1914 = vmatprep.mubr.bf16.mxu0 %v855
    %1915 = vmatmul.mubr.bf16.gmra.mxu0 %v854
    %v1916 = vpop.f32.mrf.mxu0
    %v1917 = vadd.f32 0.0, %v1916
    %v1918 = vpop.f32.mrf.mxu0
    %v1919 = vpop.f32.mrf.mxu0
    %v1920 = vadd.f32 0.0, %v1919
    %v1921 = vpop.f32.mrf.mxu0
    %1922 = vmatprep.mubr.bf16.mxu0 %v857
    %1923 = vmatmul.mubr.bf16.gmra.mxu0 %v856
    %v1924 = vpop.f32.mrf.mxu0
    %v1925 = vadd.f32 0.0, %v1924
    %v1926 = vpop.f32.mrf.mxu0
    %v1927 = vpop.f32.mrf.mxu0
    %v1928 = vadd.f32 0.0, %v1927
    %v1929 = vpop.f32.mrf.mxu0
    %1930 = vdwg.mxu0
    %v1931 = vadd.f32 %v1371, %v1869
    %v1932 = vadd.f32 %v1376, %v1872
    %v1933 = vadd.f32 %v1381, %v1877
    %v1934 = vadd.f32 %v1386, %v1880
    %v1935 = vadd.f32 %v1391, %v1885
    %v1936 = vadd.f32 %v1396, %v1888
    %v1937 = vadd.f32 %v1401, %v1893
    %v1938 = vadd.f32 %v1406, %v1896
    %v1939 = vadd.f32 %v1411, %v1901
    %v1940 = vadd.f32 %v1416, %v1904
    %v1941 = vadd.f32 %v1421, %v1909
    %v1942 = vadd.f32 %v1426, %v1912
    %v1943 = vadd.f32 %v1431, %v1917
    %v1944 = vadd.f32 %v1436, %v1920
    %v1945 = vadd.f32 %v1441, %v1925
    %v1946 = vadd.f32 %v1446, %v1928
    %s1947 = scalar_lea.vmem %s7, 32
    %v1948 = vld [vmem:[%s1947] sm:$0xff]
    %v1949 = vld [vmem:[%s1947 + $0x8] sm:$0xff]
    %v1950 = vld [vmem:[%s1947 + $0x10] sm:$0xff]
    %v1951 = vld [vmem:[%s1947 + $0x18] sm:$0xff]
    %s1952 = scalar_lea.vmem %s8, 1
    %v1953 = vld [vmem:[%s1952] sm:$0x1]
    %v1955 = vlaneseq
    %v1956 = vshrl.u32 %v1955, 7
    %v1957 = vsub.s32 0, %v1956
    %v1958 = vrot.slane %v1953, %v1957
    %v1961 = vsel %vm1030, %v1931, 0
    %v1964 = vsel %vm1030, %v1932, 0
    %v1967 = vsel %vm1030, %v1933, 0
    %v1970 = vsel %vm1030, %v1934, 0
    %v1973 = vsel %vm1030, %v1935, 0
    %v1976 = vsel %vm1030, %v1936, 0
    %v1979 = vsel %vm1030, %v1937, 0
    %v1982 = vsel %vm1030, %v1938, 0
    %v1985 = vsel %vm1030, %v1939, 0
    %v1988 = vsel %vm1030, %v1940, 0
    %v1991 = vsel %vm1030, %v1941, 0
    %v1994 = vsel %vm1030, %v1942, 0
    %v1997 = vsel %vm1030, %v1943, 0
    %v2000 = vsel %vm1030, %v1944, 0
    %v2003 = vsel %vm1030, %v1945, 0
    %v2006 = vsel %vm1030, %v1946, 0
    %2008 = vmatprep.subr.mxu0 0.0
    %2009 = vmatpush1.msra.mxu0 0.0
    %2010 = vmatprep.subr.mxu0 0.0
    %2011 = vmatpush1.msra.mxu0 0.0
    %2012 = vmatprep.subr.mxu0 0.0
    %2013 = vmatpush1.msra.mxu0 0.0
    %2014 = vmatprep.subr.mxu0 0.0
    %2015 = vmatpush1.msra.mxu0 0.0
    %2016 = vmatprep.subr.mxu0 0.0
    %2017 = vmatpush1.msra.mxu0 0.0
    %2018 = vmatprep.subr.mxu0 0.0
    %2019 = vmatpush1.msra.mxu0 0.0
    %2020 = vmatprep.subr.mxu0 0.0
    %2021 = vmatpush1.msra.mxu0 0.0
    %2022 = vmatprep.subr.mxu0 0.0
    %2023 = vmatpush1.msra.mxu0 0.0
    %2024 = vmatprep.subr.mxu0 0.0
    %2025 = vmatpush1.msra.mxu0 0.0
    %2026 = vmatprep.subr.mxu0 0.0
    %2027 = vmatpush1.msra.mxu0 0.0
    %2028 = vmatprep.subr.mxu0 0.0
    %2029 = vmatpush1.msra.mxu0 0.0
    %2030 = vmatprep.subr.mxu0 0.0
    %2031 = vmatpush1.msra.mxu0 0.0
    %2032 = vmatprep.subr.mxu0 0.0
    %2033 = vmatpush1.msra.mxu0 %v1951
    %2034 = vmatprep.subr.mxu0 0.0
    %2035 = vmatpush1.msra.mxu0 %v1950
    %2036 = vmatprep.subr.mxu0 0.0
    %2037 = vmatpush1.msra.mxu0 %v1949
    %2038 = vmatprep.subr.mxu0 0.0
    %2039 = vmatpush1.msra.mxu0 %v1948
    %2040 = vmatprep.subr.mxu0 0.0
    %2041 = vmatpush2.msra.mxu0 0.0
    %2042 = vmatprep.subr.mxu0 0.0
    %2043 = vmatpush2.msra.mxu0 0.0
    %2044 = vmatprep.subr.mxu0 0.0
    %2045 = vmatpush2.msra.mxu0 0.0
    %2046 = vmatprep.subr.mxu0 0.0
    %2047 = vmatpush2.msra.mxu0 0.0
    %2048 = vmatprep.subr.mxu0 0.0
    %2049 = vmatpush2.msra.mxu0 0.0
    %2050 = vmatprep.subr.mxu0 0.0
    %2051 = vmatpush2.msra.mxu0 0.0
    %2052 = vmatprep.subr.mxu0 0.0
    %2053 = vmatpush2.msra.mxu0 0.0
    %2054 = vmatprep.subr.mxu0 0.0
    %2055 = vmatpush2.msra.mxu0 0.0
    %2056 = vmatprep.subr.mxu0 0.0
    %2057 = vmatpush2.msra.mxu0 0.0
    %2058 = vmatprep.subr.mxu0 0.0
    %2059 = vmatpush2.msra.mxu0 0.0
    %2060 = vmatprep.subr.mxu0 0.0
    %2061 = vmatpush2.msra.mxu0 0.0
    %2062 = vmatprep.subr.mxu0 0.0
    %2063 = vmatpush2.msra.mxu0 0.0
    %2064 = vmatprep.subr.mxu0 0.0
    %2065 = vmatpush2.msra.mxu0 0.0
    %2066 = vmatprep.subr.mxu0 0.0
    %2067 = vmatpush2.msra.mxu0 0.0
    %2068 = vmatprep.subr.mxu0 0.0
    %2069 = vmatpush2.msra.mxu0 0.0
    %2070 = vmatprep.subr.mxu0 0.0
    %2071 = vmatpush2.msra.mxu0 0.0
    %2072 = vmatprep.mubr.f32.mxu0 0.0
    %2073 = vmatmul.mubr.f32.gmra.mxu0 %v1961
    %v2074 = vpop.f32.mrf.mxu0
    %v2075 = vadd.f32 %v1958, %v2074
    %v2076 = vpop.f32.mrf.mxu0
    %2077 = vmatprep.mubr.f32.mxu0 0.0
    %2078 = vmatmul.mubr.f32.gmra.mxu0 %v1964
    %v2079 = vpop.f32.mrf.mxu0
    %v2080 = vadd.f32 %v1958, %v2079
    %v2081 = vpop.f32.mrf.mxu0
    %2082 = vmatprep.mubr.f32.mxu0 0.0
    %2083 = vmatmul.mubr.f32.gmra.mxu0 %v1967
    %v2084 = vpop.f32.mrf.mxu0
    %v2085 = vadd.f32 %v1958, %v2084
    %v2086 = vpop.f32.mrf.mxu0
    %2087 = vmatprep.mubr.f32.mxu0 0.0
    %2088 = vmatmul.mubr.f32.gmra.mxu0 %v1970
    %v2089 = vpop.f32.mrf.mxu0
    %v2090 = vadd.f32 %v1958, %v2089
    %v2091 = vpop.f32.mrf.mxu0
    %2092 = vmatprep.mubr.f32.mxu0 0.0
    %2093 = vmatmul.mubr.f32.gmra.mxu0 %v1973
    %v2094 = vpop.f32.mrf.mxu0
    %v2095 = vadd.f32 %v1958, %v2094
    %v2096 = vpop.f32.mrf.mxu0
    %2097 = vmatprep.mubr.f32.mxu0 0.0
    %2098 = vmatmul.mubr.f32.gmra.mxu0 %v1976
    %v2099 = vpop.f32.mrf.mxu0
    %v2100 = vadd.f32 %v1958, %v2099
    %v2101 = vpop.f32.mrf.mxu0
    %2102 = vmatprep.mubr.f32.mxu0 0.0
    %2103 = vmatmul.mubr.f32.gmra.mxu0 %v1979
    %v2104 = vpop.f32.mrf.mxu0
    %v2105 = vadd.f32 %v1958, %v2104
    %v2106 = vpop.f32.mrf.mxu0
    %2107 = vmatprep.mubr.f32.mxu0 0.0
    %2108 = vmatmul.mubr.f32.gmra.mxu0 %v1982
    %v2109 = vpop.f32.mrf.mxu0
    %v2110 = vadd.f32 %v1958, %v2109
    %v2111 = vpop.f32.mrf.mxu0
    %2112 = vmatprep.mubr.f32.mxu0 0.0
    %2113 = vmatmul.mubr.f32.gmra.mxu0 %v1985
    %v2114 = vpop.f32.mrf.mxu0
    %v2115 = vadd.f32 %v1958, %v2114
    %v2116 = vpop.f32.mrf.mxu0
    %2117 = vmatprep.mubr.f32.mxu0 0.0
    %2118 = vmatmul.mubr.f32.gmra.mxu0 %v1988
    %v2119 = vpop.f32.mrf.mxu0
    %v2120 = vadd.f32 %v1958, %v2119
    %v2121 = vpop.f32.mrf.mxu0
    %2122 = vmatprep.mubr.f32.mxu0 0.0
    %2123 = vmatmul.mubr.f32.gmra.mxu0 %v1991
    %v2124 = vpop.f32.mrf.mxu0
    %v2125 = vadd.f32 %v1958, %v2124
    %v2126 = vpop.f32.mrf.mxu0
    %2127 = vmatprep.mubr.f32.mxu0 0.0
    %2128 = vmatmul.mubr.f32.gmra.mxu0 %v1994
    %v2129 = vpop.f32.mrf.mxu0
    %v2130 = vadd.f32 %v1958, %v2129
    %v2131 = vpop.f32.mrf.mxu0
    %2132 = vmatprep.mubr.f32.mxu0 0.0
    %2133 = vmatmul.mubr.f32.gmra.mxu0 %v1997
    %v2134 = vpop.f32.mrf.mxu0
    %v2135 = vadd.f32 %v1958, %v2134
    %v2136 = vpop.f32.mrf.mxu0
    %2137 = vmatprep.mubr.f32.mxu0 0.0
    %2138 = vmatmul.mubr.f32.gmra.mxu0 %v2000
    %v2139 = vpop.f32.mrf.mxu0
    %v2140 = vadd.f32 %v1958, %v2139
    %v2141 = vpop.f32.mrf.mxu0
    %2142 = vmatprep.mubr.f32.mxu0 0.0
    %2143 = vmatmul.mubr.f32.gmra.mxu0 %v2003
    %v2144 = vpop.f32.mrf.mxu0
    %v2145 = vadd.f32 %v1958, %v2144
    %v2146 = vpop.f32.mrf.mxu0
    %2147 = vmatprep.mubr.f32.mxu0 0.0
    %2148 = vmatmul.mubr.f32.gmra.mxu0 %v2006
    %v2149 = vpop.f32.mrf.mxu0
    %v2150 = vadd.f32 %v1958, %v2149
    %v2151 = vpop.f32.mrf.mxu0
    %2152 = vdwg.mxu0
    %v2153 = vmax.f32 %v2075, 0.0
    %v2154 = vmax.f32 %v2080, 0.0
    %v2155 = vmax.f32 %v2085, 0.0
    %v2156 = vmax.f32 %v2090, 0.0
    %v2157 = vmax.f32 %v2095, 0.0
    %v2158 = vmax.f32 %v2100, 0.0
    %v2159 = vmax.f32 %v2105, 0.0
    %v2160 = vmax.f32 %v2110, 0.0
    %v2161 = vmax.f32 %v2115, 0.0
    %v2162 = vmax.f32 %v2120, 0.0
    %v2163 = vmax.f32 %v2125, 0.0
    %v2164 = vmax.f32 %v2130, 0.0
    %v2165 = vmax.f32 %v2135, 0.0
    %v2166 = vmax.f32 %v2140, 0.0
    %v2167 = vmax.f32 %v2145, 0.0
    %v2168 = vmax.f32 %v2150, 0.0
    %s2169 = scalar_lea.vmem %s9, 64
    %v2170 = vld [vmem:[%s2169] sm:$0xff]
    %v2171 = vld [vmem:[%s2169 + $0x8] sm:$0xff]
    %v2172 = vld [vmem:[%s2169 + $0x10] sm:$0xff]
    %v2173 = vld [vmem:[%s2169 + $0x18] sm:$0xff]
    %v2174 = vld [vmem:[%s2169 + $0x20] sm:$0xff]
    %v2175 = vld [vmem:[%s2169 + $0x28] sm:$0xff]
    %v2176 = vld [vmem:[%s2169 + $0x30] sm:$0xff]
    %v2177 = vld [vmem:[%s2169 + $0x38] sm:$0xff]
    %s2178 = scalar_lea.vmem %s10, 1
    %v2179 = vld [vmem:[%s2178] sm:$0x1]
    %v2181 = vlaneseq
    %v2182 = vshrl.u32 %v2181, 7
    %v2183 = vsub.s32 0, %v2182
    %v2184 = vrot.slane %v2179, %v2183
    %v2187 = vsel %vm1255, %v2153, 0
    %v2190 = vsel %vm1255, %v2154, 0
    %v2193 = vsel %vm1255, %v2155, 0
    %v2196 = vsel %vm1255, %v2156, 0
    %v2199 = vsel %vm1255, %v2157, 0
    %v2202 = vsel %vm1255, %v2158, 0
    %v2205 = vsel %vm1255, %v2159, 0
    %v2208 = vsel %vm1255, %v2160, 0
    %v2211 = vsel %vm1255, %v2161, 0
    %v2214 = vsel %vm1255, %v2162, 0
    %v2217 = vsel %vm1255, %v2163, 0
    %v2220 = vsel %vm1255, %v2164, 0
    %v2223 = vsel %vm1255, %v2165, 0
    %v2226 = vsel %vm1255, %v2166, 0
    %v2229 = vsel %vm1255, %v2167, 0
    %v2232 = vsel %vm1255, %v2168, 0
    %2234 = vmatprep.subr.mxu0 0.0
    %2235 = vmatpush1.msra.mxu0 0.0
    %2236 = vmatprep.subr.mxu0 0.0
    %2237 = vmatpush1.msra.mxu0 0.0
    %2238 = vmatprep.subr.mxu0 0.0
    %2239 = vmatpush1.msra.mxu0 0.0
    %2240 = vmatprep.subr.mxu0 0.0
    %2241 = vmatpush1.msra.mxu0 0.0
    %2242 = vmatprep.subr.mxu0 0.0
    %2243 = vmatpush1.msra.mxu0 0.0
    %2244 = vmatprep.subr.mxu0 0.0
    %2245 = vmatpush1.msra.mxu0 0.0
    %2246 = vmatprep.subr.mxu0 0.0
    %2247 = vmatpush1.msra.mxu0 0.0
    %2248 = vmatprep.subr.mxu0 0.0
    %2249 = vmatpush1.msra.mxu0 0.0
    %2250 = vmatprep.subr.mxu0 0.0
    %2251 = vmatpush1.msra.mxu0 %v2177
    %2252 = vmatprep.subr.mxu0 0.0
    %2253 = vmatpush1.msra.mxu0 %v2176
    %2254 = vmatprep.subr.mxu0 0.0
    %2255 = vmatpush1.msra.mxu0 %v2175
    %2256 = vmatprep.subr.mxu0 0.0
    %2257 = vmatpush1.msra.mxu0 %v2174
    %2258 = vmatprep.subr.mxu0 0.0
    %2259 = vmatpush1.msra.mxu0 %v2173
    %2260 = vmatprep.subr.mxu0 0.0
    %2261 = vmatpush1.msra.mxu0 %v2172
    %2262 = vmatprep.subr.mxu0 0.0
    %2263 = vmatpush1.msra.mxu0 %v2171
    %2264 = vmatprep.subr.mxu0 0.0
    %2265 = vmatpush1.msra.mxu0 %v2170
    %2266 = vmatprep.subr.mxu0 0.0
    %2267 = vmatpush2.msra.mxu0 0.0
    %2268 = vmatprep.subr.mxu0 0.0
    %2269 = vmatpush2.msra.mxu0 0.0
    %2270 = vmatprep.subr.mxu0 0.0
    %2271 = vmatpush2.msra.mxu0 0.0
    %2272 = vmatprep.subr.mxu0 0.0
    %2273 = vmatpush2.msra.mxu0 0.0
    %2274 = vmatprep.subr.mxu0 0.0
    %2275 = vmatpush2.msra.mxu0 0.0
    %2276 = vmatprep.subr.mxu0 0.0
    %2277 = vmatpush2.msra.mxu0 0.0
    %2278 = vmatprep.subr.mxu0 0.0
    %2279 = vmatpush2.msra.mxu0 0.0
    %2280 = vmatprep.subr.mxu0 0.0
    %2281 = vmatpush2.msra.mxu0 0.0
    %2282 = vmatprep.subr.mxu0 0.0
    %2283 = vmatpush2.msra.mxu0 0.0
    %2284 = vmatprep.subr.mxu0 0.0
    %2285 = vmatpush2.msra.mxu0 0.0
    %2286 = vmatprep.subr.mxu0 0.0
    %2287 = vmatpush2.msra.mxu0 0.0
    %2288 = vmatprep.subr.mxu0 0.0
    %2289 = vmatpush2.msra.mxu0 0.0
    %2290 = vmatprep.subr.mxu0 0.0
    %2291 = vmatpush2.msra.mxu0 0.0
    %2292 = vmatprep.subr.mxu0 0.0
    %2293 = vmatpush2.msra.mxu0 0.0
    %2294 = vmatprep.subr.mxu0 0.0
    %2295 = vmatpush2.msra.mxu0 0.0
    %2296 = vmatprep.subr.mxu0 0.0
    %2297 = vmatpush2.msra.mxu0 0.0
    %2298 = vmatprep.mubr.f32.mxu0 0.0
    %2299 = vmatmul.mubr.f32.gmra.mxu0 %v2187
    %v2300 = vpop.f32.mrf.mxu0
    %v2301 = vadd.f32 %v2184, %v2300
    %v2302 = vpop.f32.mrf.mxu0
    %2303 = vmatprep.mubr.f32.mxu0 0.0
    %2304 = vmatmul.mubr.f32.gmra.mxu0 %v2190
    %v2305 = vpop.f32.mrf.mxu0
    %v2306 = vadd.f32 %v2184, %v2305
    %v2307 = vpop.f32.mrf.mxu0
    %2308 = vmatprep.mubr.f32.mxu0 0.0
    %2309 = vmatmul.mubr.f32.gmra.mxu0 %v2193
    %v2310 = vpop.f32.mrf.mxu0
    %v2311 = vadd.f32 %v2184, %v2310
    %v2312 = vpop.f32.mrf.mxu0
    %2313 = vmatprep.mubr.f32.mxu0 0.0
    %2314 = vmatmul.mubr.f32.gmra.mxu0 %v2196
    %v2315 = vpop.f32.mrf.mxu0
    %v2316 = vadd.f32 %v2184, %v2315
    %v2317 = vpop.f32.mrf.mxu0
    %2318 = vmatprep.mubr.f32.mxu0 0.0
    %2319 = vmatmul.mubr.f32.gmra.mxu0 %v2199
    %v2320 = vpop.f32.mrf.mxu0
    %v2321 = vadd.f32 %v2184, %v2320
    %v2322 = vpop.f32.mrf.mxu0
    %2323 = vmatprep.mubr.f32.mxu0 0.0
    %2324 = vmatmul.mubr.f32.gmra.mxu0 %v2202
    %v2325 = vpop.f32.mrf.mxu0
    %v2326 = vadd.f32 %v2184, %v2325
    %v2327 = vpop.f32.mrf.mxu0
    %2328 = vmatprep.mubr.f32.mxu0 0.0
    %2329 = vmatmul.mubr.f32.gmra.mxu0 %v2205
    %v2330 = vpop.f32.mrf.mxu0
    %v2331 = vadd.f32 %v2184, %v2330
    %v2332 = vpop.f32.mrf.mxu0
    %2333 = vmatprep.mubr.f32.mxu0 0.0
    %2334 = vmatmul.mubr.f32.gmra.mxu0 %v2208
    %v2335 = vpop.f32.mrf.mxu0
    %v2336 = vadd.f32 %v2184, %v2335
    %v2337 = vpop.f32.mrf.mxu0
    %2338 = vmatprep.mubr.f32.mxu0 0.0
    %2339 = vmatmul.mubr.f32.gmra.mxu0 %v2211
    %v2340 = vpop.f32.mrf.mxu0
    %v2341 = vadd.f32 %v2184, %v2340
    %v2342 = vpop.f32.mrf.mxu0
    %2343 = vmatprep.mubr.f32.mxu0 0.0
    %2344 = vmatmul.mubr.f32.gmra.mxu0 %v2214
    %v2345 = vpop.f32.mrf.mxu0
    %v2346 = vadd.f32 %v2184, %v2345
    %v2347 = vpop.f32.mrf.mxu0
    %2348 = vmatprep.mubr.f32.mxu0 0.0
    %2349 = vmatmul.mubr.f32.gmra.mxu0 %v2217
    %v2350 = vpop.f32.mrf.mxu0
    %v2351 = vadd.f32 %v2184, %v2350
    %v2352 = vpop.f32.mrf.mxu0
    %2353 = vmatprep.mubr.f32.mxu0 0.0
    %2354 = vmatmul.mubr.f32.gmra.mxu0 %v2220
    %v2355 = vpop.f32.mrf.mxu0
    %v2356 = vadd.f32 %v2184, %v2355
    %v2357 = vpop.f32.mrf.mxu0
    %2358 = vmatprep.mubr.f32.mxu0 0.0
    %2359 = vmatmul.mubr.f32.gmra.mxu0 %v2223
    %v2360 = vpop.f32.mrf.mxu0
    %v2361 = vadd.f32 %v2184, %v2360
    %v2362 = vpop.f32.mrf.mxu0
    %2363 = vmatprep.mubr.f32.mxu0 0.0
    %2364 = vmatmul.mubr.f32.gmra.mxu0 %v2226
    %v2365 = vpop.f32.mrf.mxu0
    %v2366 = vadd.f32 %v2184, %v2365
    %v2367 = vpop.f32.mrf.mxu0
    %2368 = vmatprep.mubr.f32.mxu0 0.0
    %2369 = vmatmul.mubr.f32.gmra.mxu0 %v2229
    %v2370 = vpop.f32.mrf.mxu0
    %v2371 = vadd.f32 %v2184, %v2370
    %v2372 = vpop.f32.mrf.mxu0
    %2373 = vmatprep.mubr.f32.mxu0 0.0
    %2374 = vmatmul.mubr.f32.gmra.mxu0 %v2232
    %v2375 = vpop.f32.mrf.mxu0
    %v2376 = vadd.f32 %v2184, %v2375
    %v2377 = vpop.f32.mrf.mxu0
    %2378 = vdwg.mxu0
    %2379 = vrot.lane.b32.xlu0 %v315, 64
    %v2380 = vpop.permute.xlu0 %2379
    %2381 = vrot.lane.b32.xlu0 %v320, 64
    %v2382 = vpop.permute.xlu0 %2381
    %2383 = vrot.lane.b32.xlu0 %v325, 64
    %v2384 = vpop.permute.xlu0 %2383
    %2385 = vrot.lane.b32.xlu0 %v330, 64
    %v2386 = vpop.permute.xlu0 %2385
    %2387 = vrot.lane.b32.xlu0 %v335, 64
    %v2388 = vpop.permute.xlu0 %2387
    %2389 = vrot.lane.b32.xlu0 %v340, 64
    %v2390 = vpop.permute.xlu0 %2389
    %2391 = vrot.lane.b32.xlu0 %v345, 64
    %v2392 = vpop.permute.xlu0 %2391
    %2393 = vrot.lane.b32.xlu0 %v350, 64
    %v2394 = vpop.permute.xlu0 %2393
    %2395 = vrot.lane.b32.xlu0 %v355, 64
    %v2396 = vpop.permute.xlu0 %2395
    %2397 = vrot.lane.b32.xlu0 %v360, 64
    %v2398 = vpop.permute.xlu0 %2397
    %2399 = vrot.lane.b32.xlu0 %v365, 64
    %v2400 = vpop.permute.xlu0 %2399
    %2401 = vrot.lane.b32.xlu0 %v370, 64
    %v2402 = vpop.permute.xlu0 %2401
    %2403 = vrot.lane.b32.xlu0 %v375, 64
    %v2404 = vpop.permute.xlu0 %2403
    %2405 = vrot.lane.b32.xlu0 %v380, 64
    %v2406 = vpop.permute.xlu0 %2405
    %2407 = vrot.lane.b32.xlu0 %v385, 64
    %v2408 = vpop.permute.xlu0 %2407
    %2409 = vrot.lane.b32.xlu0 %v390, 64
    %v2410 = vpop.permute.xlu0 %2409
    %2411 = vrot.lane.b32.xlu0 %v395, 64
    %v2412 = vpop.permute.xlu0 %2411
    %2413 = vrot.lane.b32.xlu0 %v400, 64
    %v2414 = vpop.permute.xlu0 %2413
    %2415 = vrot.lane.b32.xlu0 %v405, 64
    %v2416 = vpop.permute.xlu0 %2415
    %2417 = vrot.lane.b32.xlu0 %v410, 64
    %v2418 = vpop.permute.xlu0 %2417
    %2419 = vrot.lane.b32.xlu0 %v415, 64
    %v2420 = vpop.permute.xlu0 %2419
    %2421 = vrot.lane.b32.xlu0 %v420, 64
    %v2422 = vpop.permute.xlu0 %2421
    %2423 = vrot.lane.b32.xlu0 %v425, 64
    %v2424 = vpop.permute.xlu0 %2423
    %2425 = vrot.lane.b32.xlu0 %v430, 64
    %v2426 = vpop.permute.xlu0 %2425
    %2427 = vrot.lane.b32.xlu0 %v435, 64
    %v2428 = vpop.permute.xlu0 %2427
    %2429 = vrot.lane.b32.xlu0 %v440, 64
    %v2430 = vpop.permute.xlu0 %2429
    %2431 = vrot.lane.b32.xlu0 %v445, 64
    %v2432 = vpop.permute.xlu0 %2431
    %2433 = vrot.lane.b32.xlu0 %v450, 64
    %v2434 = vpop.permute.xlu0 %2433
    %2435 = vrot.lane.b32.xlu0 %v455, 64
    %v2436 = vpop.permute.xlu0 %2435
    %2437 = vrot.lane.b32.xlu0 %v460, 64
    %v2438 = vpop.permute.xlu0 %2437
    %2439 = vrot.lane.b32.xlu0 %v465, 64
    %v2440 = vpop.permute.xlu0 %2439
    %2441 = vrot.lane.b32.xlu0 %v470, 64
    %v2442 = vpop.permute.xlu0 %2441
    %2475 = vmatprep.subr.mxu0 0.0
    %2476 = vmatpush1.msra.mxu0 %v2376
    %2477 = vmatprep.subr.mxu0 0.0
    %2478 = vmatpush1.msra.mxu0 %v2371
    %2479 = vmatprep.subr.mxu0 0.0
    %2480 = vmatpush1.msra.mxu0 %v2366
    %2481 = vmatprep.subr.mxu0 0.0
    %2482 = vmatpush1.msra.mxu0 %v2361
    %2483 = vmatprep.subr.mxu0 0.0
    %2484 = vmatpush1.msra.mxu0 %v2356
    %2485 = vmatprep.subr.mxu0 0.0
    %2486 = vmatpush1.msra.mxu0 %v2351
    %2487 = vmatprep.subr.mxu0 0.0
    %2488 = vmatpush1.msra.mxu0 %v2346
    %2489 = vmatprep.subr.mxu0 0.0
    %2490 = vmatpush1.msra.mxu0 %v2341
    %2491 = vmatprep.subr.mxu0 0.0
    %2492 = vmatpush1.msra.mxu0 %v2336
    %2493 = vmatprep.subr.mxu0 0.0
    %2494 = vmatpush1.msra.mxu0 %v2331
    %2495 = vmatprep.subr.mxu0 0.0
    %2496 = vmatpush1.msra.mxu0 %v2326
    %2497 = vmatprep.subr.mxu0 0.0
    %2498 = vmatpush1.msra.mxu0 %v2321
    %2499 = vmatprep.subr.mxu0 0.0
    %2500 = vmatpush1.msra.mxu0 %v2316
    %2501 = vmatprep.subr.mxu0 0.0
    %2502 = vmatpush1.msra.mxu0 %v2311
    %2503 = vmatprep.subr.mxu0 0.0
    %2504 = vmatpush1.msra.mxu0 %v2306
    %2505 = vmatprep.subr.mxu0 0.0
    %2506 = vmatpush1.msra.mxu0 %v2301
    %2507 = vmatprep.subr.mxu0 0.0
    %2508 = vmatpush2.msra.mxu0 0.0
    %2509 = vmatprep.subr.mxu0 0.0
    %2510 = vmatpush2.msra.mxu0 0.0
    %2511 = vmatprep.subr.mxu0 0.0
    %2512 = vmatpush2.msra.mxu0 0.0
    %2513 = vmatprep.subr.mxu0 0.0
    %2514 = vmatpush2.msra.mxu0 0.0
    %2515 = vmatprep.subr.mxu0 0.0
    %2516 = vmatpush2.msra.mxu0 0.0
    %2517 = vmatprep.subr.mxu0 0.0
    %2518 = vmatpush2.msra.mxu0 0.0
    %2519 = vmatprep.subr.mxu0 0.0
    %2520 = vmatpush2.msra.mxu0 0.0
    %2521 = vmatprep.subr.mxu0 0.0
    %2522 = vmatpush2.msra.mxu0 0.0
    %2523 = vmatprep.subr.mxu0 0.0
    %2524 = vmatpush2.msra.mxu0 0.0
    %2525 = vmatprep.subr.mxu0 0.0
    %2526 = vmatpush2.msra.mxu0 0.0
    %2527 = vmatprep.subr.mxu0 0.0
    %2528 = vmatpush2.msra.mxu0 0.0
    %2529 = vmatprep.subr.mxu0 0.0
    %2530 = vmatpush2.msra.mxu0 0.0
    %2531 = vmatprep.subr.mxu0 0.0
    %2532 = vmatpush2.msra.mxu0 0.0
    %2533 = vmatprep.subr.mxu0 0.0
    %2534 = vmatpush2.msra.mxu0 0.0
    %2535 = vmatprep.subr.mxu0 0.0
    %2536 = vmatpush2.msra.mxu0 0.0
    %2537 = vmatprep.subr.mxu0 0.0
    %2538 = vmatpush2.msra.mxu0 0.0
    %2539 = vmatprep.mubr.bf16.mxu0 0
    %2540 = vmatmul.mubr.bf16.gmra.mxu0 %v537
    %v2541 = vpop.f32.mrf.mxu0
    %v2542 = vadd.f32 %v2380, %v2541
    %v2543 = vpop.f32.mrf.mxu0
    %v2544 = vpop.f32.mrf.mxu0
    %v2545 = vadd.f32 %v2382, %v2544
    %v2546 = vpop.f32.mrf.mxu0
    %2547 = vmatprep.mubr.bf16.mxu0 0
    %2548 = vmatmul.mubr.bf16.gmra.mxu0 %v538
    %v2549 = vpop.f32.mrf.mxu0
    %v2550 = vadd.f32 %v2384, %v2549
    %v2551 = vpop.f32.mrf.mxu0
    %v2552 = vpop.f32.mrf.mxu0
    %v2553 = vadd.f32 %v2386, %v2552
    %v2554 = vpop.f32.mrf.mxu0
    %2555 = vmatprep.mubr.bf16.mxu0 0
    %2556 = vmatmul.mubr.bf16.gmra.mxu0 %v539
    %v2557 = vpop.f32.mrf.mxu0
    %v2558 = vadd.f32 %v2388, %v2557
    %v2559 = vpop.f32.mrf.mxu0
    %v2560 = vpop.f32.mrf.mxu0
    %v2561 = vadd.f32 %v2390, %v2560
    %v2562 = vpop.f32.mrf.mxu0
    %2563 = vmatprep.mubr.bf16.mxu0 0
    %2564 = vmatmul.mubr.bf16.gmra.mxu0 %v540
    %v2565 = vpop.f32.mrf.mxu0
    %v2566 = vadd.f32 %v2392, %v2565
    %v2567 = vpop.f32.mrf.mxu0
    %v2568 = vpop.f32.mrf.mxu0
    %v2569 = vadd.f32 %v2394, %v2568
    %v2570 = vpop.f32.mrf.mxu0
    %2571 = vmatprep.mubr.bf16.mxu0 0
    %2572 = vmatmul.mubr.bf16.gmra.mxu0 %v541
    %v2573 = vpop.f32.mrf.mxu0
    %v2574 = vadd.f32 %v2396, %v2573
    %v2575 = vpop.f32.mrf.mxu0
    %v2576 = vpop.f32.mrf.mxu0
    %v2577 = vadd.f32 %v2398, %v2576
    %v2578 = vpop.f32.mrf.mxu0
    %2579 = vmatprep.mubr.bf16.mxu0 0
    %2580 = vmatmul.mubr.bf16.gmra.mxu0 %v542
    %v2581 = vpop.f32.mrf.mxu0
    %v2582 = vadd.f32 %v2400, %v2581
    %v2583 = vpop.f32.mrf.mxu0
    %v2584 = vpop.f32.mrf.mxu0
    %v2585 = vadd.f32 %v2402, %v2584
    %v2586 = vpop.f32.mrf.mxu0
    %2587 = vmatprep.mubr.bf16.mxu0 0
    %2588 = vmatmul.mubr.bf16.gmra.mxu0 %v543
    %v2589 = vpop.f32.mrf.mxu0
    %v2590 = vadd.f32 %v2404, %v2589
    %v2591 = vpop.f32.mrf.mxu0
    %v2592 = vpop.f32.mrf.mxu0
    %v2593 = vadd.f32 %v2406, %v2592
    %v2594 = vpop.f32.mrf.mxu0
    %2595 = vmatprep.mubr.bf16.mxu0 0
    %2596 = vmatmul.mubr.bf16.gmra.mxu0 %v544
    %v2597 = vpop.f32.mrf.mxu0
    %v2598 = vadd.f32 %v2408, %v2597
    %v2599 = vpop.f32.mrf.mxu0
    %v2600 = vpop.f32.mrf.mxu0
    %v2601 = vadd.f32 %v2410, %v2600
    %v2602 = vpop.f32.mrf.mxu0
    %2603 = vmatprep.mubr.bf16.mxu0 0
    %2604 = vmatmul.mubr.bf16.gmra.mxu0 %v545
    %v2605 = vpop.f32.mrf.mxu0
    %v2606 = vadd.f32 %v2412, %v2605
    %v2607 = vpop.f32.mrf.mxu0
    %v2608 = vpop.f32.mrf.mxu0
    %v2609 = vadd.f32 %v2414, %v2608
    %v2610 = vpop.f32.mrf.mxu0
    %2611 = vmatprep.mubr.bf16.mxu0 0
    %2612 = vmatmul.mubr.bf16.gmra.mxu0 %v546
    %v2613 = vpop.f32.mrf.mxu0
    %v2614 = vadd.f32 %v2416, %v2613
    %v2615 = vpop.f32.mrf.mxu0
    %v2616 = vpop.f32.mrf.mxu0
    %v2617 = vadd.f32 %v2418, %v2616
    %v2618 = vpop.f32.mrf.mxu0
    %2619 = vmatprep.mubr.bf16.mxu0 0
    %2620 = vmatmul.mubr.bf16.gmra.mxu0 %v547
    %v2621 = vpop.f32.mrf.mxu0
    %v2622 = vadd.f32 %v2420, %v2621
    %v2623 = vpop.f32.mrf.mxu0
    %v2624 = vpop.f32.mrf.mxu0
    %v2625 = vadd.f32 %v2422, %v2624
    %v2626 = vpop.f32.mrf.mxu0
    %2627 = vmatprep.mubr.bf16.mxu0 0
    %2628 = vmatmul.mubr.bf16.gmra.mxu0 %v548
    %v2629 = vpop.f32.mrf.mxu0
    %v2630 = vadd.f32 %v2424, %v2629
    %v2631 = vpop.f32.mrf.mxu0
    %v2632 = vpop.f32.mrf.mxu0
    %v2633 = vadd.f32 %v2426, %v2632
    %v2634 = vpop.f32.mrf.mxu0
    %2635 = vmatprep.mubr.bf16.mxu0 0
    %2636 = vmatmul.mubr.bf16.gmra.mxu0 %v549
    %v2637 = vpop.f32.mrf.mxu0
    %v2638 = vadd.f32 %v2428, %v2637
    %v2639 = vpop.f32.mrf.mxu0
    %v2640 = vpop.f32.mrf.mxu0
    %v2641 = vadd.f32 %v2430, %v2640
    %v2642 = vpop.f32.mrf.mxu0
    %2643 = vmatprep.mubr.bf16.mxu0 0
    %2644 = vmatmul.mubr.bf16.gmra.mxu0 %v550
    %v2645 = vpop.f32.mrf.mxu0
    %v2646 = vadd.f32 %v2432, %v2645
    %v2647 = vpop.f32.mrf.mxu0
    %v2648 = vpop.f32.mrf.mxu0
    %v2649 = vadd.f32 %v2434, %v2648
    %v2650 = vpop.f32.mrf.mxu0
    %2651 = vmatprep.mubr.bf16.mxu0 0
    %2652 = vmatmul.mubr.bf16.gmra.mxu0 %v551
    %v2653 = vpop.f32.mrf.mxu0
    %v2654 = vadd.f32 %v2436, %v2653
    %v2655 = vpop.f32.mrf.mxu0
    %v2656 = vpop.f32.mrf.mxu0
    %v2657 = vadd.f32 %v2438, %v2656
    %v2658 = vpop.f32.mrf.mxu0
    %2659 = vmatprep.mubr.bf16.mxu0 0
    %2660 = vmatmul.mubr.bf16.gmra.mxu0 %v552
    %v2661 = vpop.f32.mrf.mxu0
    %v2662 = vadd.f32 %v2440, %v2661
    %v2663 = vpop.f32.mrf.mxu0
    %v2664 = vpop.f32.mrf.mxu0
    %v2665 = vadd.f32 %v2442, %v2664
    %v2666 = vpop.f32.mrf.mxu0
    %2667 = vdwg.mxu0
    %v2668 = vmax.f32 %v2542, 0.0
    %v2669 = vmax.f32 %v2545, 0.0
    %v2670 = vmax.f32 %v2550, 0.0
    %v2671 = vmax.f32 %v2553, 0.0
    %v2672 = vmax.f32 %v2558, 0.0
    %v2673 = vmax.f32 %v2561, 0.0
    %v2674 = vmax.f32 %v2566, 0.0
    %v2675 = vmax.f32 %v2569, 0.0
    %v2676 = vmax.f32 %v2574, 0.0
    %v2677 = vmax.f32 %v2577, 0.0
    %v2678 = vmax.f32 %v2582, 0.0
    %v2679 = vmax.f32 %v2585, 0.0
    %v2680 = vmax.f32 %v2590, 0.0
    %v2681 = vmax.f32 %v2593, 0.0
    %v2682 = vmax.f32 %v2598, 0.0
    %v2683 = vmax.f32 %v2601, 0.0
    %v2684 = vmax.f32 %v2606, 0.0
    %v2685 = vmax.f32 %v2609, 0.0
    %v2686 = vmax.f32 %v2614, 0.0
    %v2687 = vmax.f32 %v2617, 0.0
    %v2688 = vmax.f32 %v2622, 0.0
    %v2689 = vmax.f32 %v2625, 0.0
    %v2690 = vmax.f32 %v2630, 0.0
    %v2691 = vmax.f32 %v2633, 0.0
    %v2692 = vmax.f32 %v2638, 0.0
    %v2693 = vmax.f32 %v2641, 0.0
    %v2694 = vmax.f32 %v2646, 0.0
    %v2695 = vmax.f32 %v2649, 0.0
    %v2696 = vmax.f32 %v2654, 0.0
    %v2697 = vmax.f32 %v2657, 0.0
    %v2698 = vmax.f32 %v2662, 0.0
    %v2699 = vmax.f32 %v2665, 0.0
    %2700 = vmatprep.subr.mxu0 0.0
    %2701 = vmatpush1.msra.mxu0 %v2683
    %2702 = vmatprep.subr.mxu0 0.0
    %2703 = vmatpush1.msra.mxu0 %v2682
    %2704 = vmatprep.subr.mxu0 0.0
    %2705 = vmatpush1.msra.mxu0 %v2681
    %2706 = vmatprep.subr.mxu0 0.0
    %2707 = vmatpush1.msra.mxu0 %v2680
    %2708 = vmatprep.subr.mxu0 0.0
    %2709 = vmatpush1.msra.mxu0 %v2679
    %2710 = vmatprep.subr.mxu0 0.0
    %2711 = vmatpush1.msra.mxu0 %v2678
    %2712 = vmatprep.subr.mxu0 0.0
    %2713 = vmatpush1.msra.mxu0 %v2677
    %2714 = vmatprep.subr.mxu0 0.0
    %2715 = vmatpush1.msra.mxu0 %v2676
    %2716 = vmatprep.subr.mxu0 0.0
    %2717 = vmatpush1.msra.mxu0 %v2675
    %2718 = vmatprep.subr.mxu0 0.0
    %2719 = vmatpush1.msra.mxu0 %v2674
    %2720 = vmatprep.subr.mxu0 0.0
    %2721 = vmatpush1.msra.mxu0 %v2673
    %2722 = vmatprep.subr.mxu0 0.0
    %2723 = vmatpush1.msra.mxu0 %v2672
    %2724 = vmatprep.subr.mxu0 0.0
    %2725 = vmatpush1.msra.mxu0 %v2671
    %2726 = vmatprep.subr.mxu0 0.0
    %2727 = vmatpush1.msra.mxu0 %v2670
    %2728 = vmatprep.subr.mxu0 0.0
    %2729 = vmatpush1.msra.mxu0 %v2669
    %2730 = vmatprep.subr.mxu0 0.0
    %2731 = vmatpush1.msra.mxu0 %v2668
    %2732 = vmatprep.subr.mxu0 0.0
    %2733 = vmatpush2.msra.mxu0 %v2699
    %2734 = vmatprep.subr.mxu0 0.0
    %2735 = vmatpush2.msra.mxu0 %v2698
    %2736 = vmatprep.subr.mxu0 0.0
    %2737 = vmatpush2.msra.mxu0 %v2697
    %2738 = vmatprep.subr.mxu0 0.0
    %2739 = vmatpush2.msra.mxu0 %v2696
    %2740 = vmatprep.subr.mxu0 0.0
    %2741 = vmatpush2.msra.mxu0 %v2695
    %2742 = vmatprep.subr.mxu0 0.0
    %2743 = vmatpush2.msra.mxu0 %v2694
    %2744 = vmatprep.subr.mxu0 0.0
    %2745 = vmatpush2.msra.mxu0 %v2693
    %2746 = vmatprep.subr.mxu0 0.0
    %2747 = vmatpush2.msra.mxu0 %v2692
    %2748 = vmatprep.subr.mxu0 0.0
    %2749 = vmatpush2.msra.mxu0 %v2691
    %2750 = vmatprep.subr.mxu0 0.0
    %2751 = vmatpush2.msra.mxu0 %v2690
    %2752 = vmatprep.subr.mxu0 0.0
    %2753 = vmatpush2.msra.mxu0 %v2689
    %2754 = vmatprep.subr.mxu0 0.0
    %2755 = vmatpush2.msra.mxu0 %v2688
    %2756 = vmatprep.subr.mxu0 0.0
    %2757 = vmatpush2.msra.mxu0 %v2687
    %2758 = vmatprep.subr.mxu0 0.0
    %2759 = vmatpush2.msra.mxu0 %v2686
    %2760 = vmatprep.subr.mxu0 0.0
    %2761 = vmatpush2.msra.mxu0 %v2685
    %2762 = vmatprep.subr.mxu0 0.0
    %2763 = vmatpush2.msra.mxu0 %v2684
    %2764 = vmatprep.mubr.bf16.mxu0 %v843
    %2765 = vmatmul.mubr.bf16.gmra.mxu0 %v842
    %v2766 = vpop.f32.mrf.mxu0
    %v2767 = vadd.f32 0.0, %v2766
    %v2768 = vpop.f32.mrf.mxu0
    %v2769 = vpop.f32.mrf.mxu0
    %v2770 = vadd.f32 0.0, %v2769
    %v2771 = vpop.f32.mrf.mxu0
    %2772 = vmatprep.mubr.bf16.mxu0 %v845
    %2773 = vmatmul.mubr.bf16.gmra.mxu0 %v844
    %v2774 = vpop.f32.mrf.mxu0
    %v2775 = vadd.f32 0.0, %v2774
    %v2776 = vpop.f32.mrf.mxu0
    %v2777 = vpop.f32.mrf.mxu0
    %v2778 = vadd.f32 0.0, %v2777
    %v2779 = vpop.f32.mrf.mxu0
    %2780 = vmatprep.mubr.bf16.mxu0 %v847
    %2781 = vmatmul.mubr.bf16.gmra.mxu0 %v846
    %v2782 = vpop.f32.mrf.mxu0
    %v2783 = vadd.f32 0.0, %v2782
    %v2784 = vpop.f32.mrf.mxu0
    %v2785 = vpop.f32.mrf.mxu0
    %v2786 = vadd.f32 0.0, %v2785
    %v2787 = vpop.f32.mrf.mxu0
    %2788 = vmatprep.mubr.bf16.mxu0 %v849
    %2789 = vmatmul.mubr.bf16.gmra.mxu0 %v848
    %v2790 = vpop.f32.mrf.mxu0
    %v2791 = vadd.f32 0.0, %v2790
    %v2792 = vpop.f32.mrf.mxu0
    %v2793 = vpop.f32.mrf.mxu0
    %v2794 = vadd.f32 0.0, %v2793
    %v2795 = vpop.f32.mrf.mxu0
    %2796 = vmatprep.mubr.bf16.mxu0 %v851
    %2797 = vmatmul.mubr.bf16.gmra.mxu0 %v850
    %v2798 = vpop.f32.mrf.mxu0
    %v2799 = vadd.f32 0.0, %v2798
    %v2800 = vpop.f32.mrf.mxu0
    %v2801 = vpop.f32.mrf.mxu0
    %v2802 = vadd.f32 0.0, %v2801
    %v2803 = vpop.f32.mrf.mxu0
    %2804 = vmatprep.mubr.bf16.mxu0 %v853
    %2805 = vmatmul.mubr.bf16.gmra.mxu0 %v852
    %v2806 = vpop.f32.mrf.mxu0
    %v2807 = vadd.f32 0.0, %v2806
    %v2808 = vpop.f32.mrf.mxu0
    %v2809 = vpop.f32.mrf.mxu0
    %v2810 = vadd.f32 0.0, %v2809
    %v2811 = vpop.f32.mrf.mxu0
    %2812 = vmatprep.mubr.bf16.mxu0 %v855
    %2813 = vmatmul.mubr.bf16.gmra.mxu0 %v854
    %v2814 = vpop.f32.mrf.mxu0
    %v2815 = vadd.f32 0.0, %v2814
    %v2816 = vpop.f32.mrf.mxu0
    %v2817 = vpop.f32.mrf.mxu0
    %v2818 = vadd.f32 0.0, %v2817
    %v2819 = vpop.f32.mrf.mxu0
    %2820 = vmatprep.mubr.bf16.mxu0 %v857
    %2821 = vmatmul.mubr.bf16.gmra.mxu0 %v856
    %v2822 = vpop.f32.mrf.mxu0
    %v2823 = vadd.f32 0.0, %v2822
    %v2824 = vpop.f32.mrf.mxu0
    %v2825 = vpop.f32.mrf.mxu0
    %v2826 = vadd.f32 0.0, %v2825
    %v2827 = vpop.f32.mrf.mxu0
    %2828 = vdwg.mxu0
    %v2829 = vadd.f32 %v2301, %v2767
    %v2830 = vadd.f32 %v2306, %v2770
    %v2831 = vadd.f32 %v2311, %v2775
    %v2832 = vadd.f32 %v2316, %v2778
    %v2833 = vadd.f32 %v2321, %v2783
    %v2834 = vadd.f32 %v2326, %v2786
    %v2835 = vadd.f32 %v2331, %v2791
    %v2836 = vadd.f32 %v2336, %v2794
    %v2837 = vadd.f32 %v2341, %v2799
    %v2838 = vadd.f32 %v2346, %v2802
    %v2839 = vadd.f32 %v2351, %v2807
    %v2840 = vadd.f32 %v2356, %v2810
    %v2841 = vadd.f32 %v2361, %v2815
    %v2842 = vadd.f32 %v2366, %v2818
    %v2843 = vadd.f32 %v2371, %v2823
    %v2844 = vadd.f32 %v2376, %v2826
    %s2845 = scalar_lea.vmem %s7, 64
    %v2846 = vld [vmem:[%s2845] sm:$0xff]
    %v2847 = vld [vmem:[%s2845 + $0x8] sm:$0xff]
    %v2848 = vld [vmem:[%s2845 + $0x10] sm:$0xff]
    %v2849 = vld [vmem:[%s2845 + $0x18] sm:$0xff]
    %s2850 = scalar_lea.vmem %s8, 2
    %v2851 = vld [vmem:[%s2850] sm:$0x1]
    %v2853 = vlaneseq
    %v2854 = vshrl.u32 %v2853, 7
    %v2855 = vsub.s32 0, %v2854
    %v2856 = vrot.slane %v2851, %v2855
    %v2859 = vsel %vm1030, %v2829, 0
    %v2862 = vsel %vm1030, %v2830, 0
    %v2865 = vsel %vm1030, %v2831, 0
    %v2868 = vsel %vm1030, %v2832, 0
    %v2871 = vsel %vm1030, %v2833, 0
    %v2874 = vsel %vm1030, %v2834, 0
    %v2877 = vsel %vm1030, %v2835, 0
    %v2880 = vsel %vm1030, %v2836, 0
    %v2883 = vsel %vm1030, %v2837, 0
    %v2886 = vsel %vm1030, %v2838, 0
    %v2889 = vsel %vm1030, %v2839, 0
    %v2892 = vsel %vm1030, %v2840, 0
    %v2895 = vsel %vm1030, %v2841, 0
    %v2898 = vsel %vm1030, %v2842, 0
    %v2901 = vsel %vm1030, %v2843, 0
    %v2904 = vsel %vm1030, %v2844, 0
    %2906 = vmatprep.subr.mxu0 0.0
    %2907 = vmatpush1.msra.mxu0 0.0
    %2908 = vmatprep.subr.mxu0 0.0
    %2909 = vmatpush1.msra.mxu0 0.0
    %2910 = vmatprep.subr.mxu0 0.0
    %2911 = vmatpush1.msra.mxu0 0.0
    %2912 = vmatprep.subr.mxu0 0.0
    %2913 = vmatpush1.msra.mxu0 0.0
    %2914 = vmatprep.subr.mxu0 0.0
    %2915 = vmatpush1.msra.mxu0 0.0
    %2916 = vmatprep.subr.mxu0 0.0
    %2917 = vmatpush1.msra.mxu0 0.0
    %2918 = vmatprep.subr.mxu0 0.0
    %2919 = vmatpush1.msra.mxu0 0.0
    %2920 = vmatprep.subr.mxu0 0.0
    %2921 = vmatpush1.msra.mxu0 0.0
    %2922 = vmatprep.subr.mxu0 0.0
    %2923 = vmatpush1.msra.mxu0 0.0
    %2924 = vmatprep.subr.mxu0 0.0
    %2925 = vmatpush1.msra.mxu0 0.0
    %2926 = vmatprep.subr.mxu0 0.0
    %2927 = vmatpush1.msra.mxu0 0.0
    %2928 = vmatprep.subr.mxu0 0.0
    %2929 = vmatpush1.msra.mxu0 0.0
    %2930 = vmatprep.subr.mxu0 0.0
    %2931 = vmatpush1.msra.mxu0 %v2849
    %2932 = vmatprep.subr.mxu0 0.0
    %2933 = vmatpush1.msra.mxu0 %v2848
    %2934 = vmatprep.subr.mxu0 0.0
    %2935 = vmatpush1.msra.mxu0 %v2847
    %2936 = vmatprep.subr.mxu0 0.0
    %2937 = vmatpush1.msra.mxu0 %v2846
    %2938 = vmatprep.subr.mxu0 0.0
    %2939 = vmatpush2.msra.mxu0 0.0
    %2940 = vmatprep.subr.mxu0 0.0
    %2941 = vmatpush2.msra.mxu0 0.0
    %2942 = vmatprep.subr.mxu0 0.0
    %2943 = vmatpush2.msra.mxu0 0.0
    %2944 = vmatprep.subr.mxu0 0.0
    %2945 = vmatpush2.msra.mxu0 0.0
    %2946 = vmatprep.subr.mxu0 0.0
    %2947 = vmatpush2.msra.mxu0 0.0
    %2948 = vmatprep.subr.mxu0 0.0
    %2949 = vmatpush2.msra.mxu0 0.0
    %2950 = vmatprep.subr.mxu0 0.0
    %2951 = vmatpush2.msra.mxu0 0.0
    %2952 = vmatprep.subr.mxu0 0.0
    %2953 = vmatpush2.msra.mxu0 0.0
    %2954 = vmatprep.subr.mxu0 0.0
    %2955 = vmatpush2.msra.mxu0 0.0
    %2956 = vmatprep.subr.mxu0 0.0
    %2957 = vmatpush2.msra.mxu0 0.0
    %2958 = vmatprep.subr.mxu0 0.0
    %2959 = vmatpush2.msra.mxu0 0.0
    %2960 = vmatprep.subr.mxu0 0.0
    %2961 = vmatpush2.msra.mxu0 0.0
    %2962 = vmatprep.subr.mxu0 0.0
    %2963 = vmatpush2.msra.mxu0 0.0
    %2964 = vmatprep.subr.mxu0 0.0
    %2965 = vmatpush2.msra.mxu0 0.0
    %2966 = vmatprep.subr.mxu0 0.0
    %2967 = vmatpush2.msra.mxu0 0.0
    %2968 = vmatprep.subr.mxu0 0.0
    %2969 = vmatpush2.msra.mxu0 0.0
    %2970 = vmatprep.mubr.f32.mxu0 0.0
    %2971 = vmatmul.mubr.f32.gmra.mxu0 %v2859
    %v2972 = vpop.f32.mrf.mxu0
    %v2973 = vadd.f32 %v2856, %v2972
    %v2974 = vpop.f32.mrf.mxu0
    %2975 = vmatprep.mubr.f32.mxu0 0.0
    %2976 = vmatmul.mubr.f32.gmra.mxu0 %v2862
    %v2977 = vpop.f32.mrf.mxu0
    %v2978 = vadd.f32 %v2856, %v2977
    %v2979 = vpop.f32.mrf.mxu0
    %2980 = vmatprep.mubr.f32.mxu0 0.0
    %2981 = vmatmul.mubr.f32.gmra.mxu0 %v2865
    %v2982 = vpop.f32.mrf.mxu0
    %v2983 = vadd.f32 %v2856, %v2982
    %v2984 = vpop.f32.mrf.mxu0
    %2985 = vmatprep.mubr.f32.mxu0 0.0
    %2986 = vmatmul.mubr.f32.gmra.mxu0 %v2868
    %v2987 = vpop.f32.mrf.mxu0
    %v2988 = vadd.f32 %v2856, %v2987
    %v2989 = vpop.f32.mrf.mxu0
    %2990 = vmatprep.mubr.f32.mxu0 0.0
    %2991 = vmatmul.mubr.f32.gmra.mxu0 %v2871
    %v2992 = vpop.f32.mrf.mxu0
    %v2993 = vadd.f32 %v2856, %v2992
    %v2994 = vpop.f32.mrf.mxu0
    %2995 = vmatprep.mubr.f32.mxu0 0.0
    %2996 = vmatmul.mubr.f32.gmra.mxu0 %v2874
    %v2997 = vpop.f32.mrf.mxu0
    %v2998 = vadd.f32 %v2856, %v2997
    %v2999 = vpop.f32.mrf.mxu0
    %3000 = vmatprep.mubr.f32.mxu0 0.0
    %3001 = vmatmul.mubr.f32.gmra.mxu0 %v2877
    %v3002 = vpop.f32.mrf.mxu0
    %v3003 = vadd.f32 %v2856, %v3002
    %v3004 = vpop.f32.mrf.mxu0
    %3005 = vmatprep.mubr.f32.mxu0 0.0
    %3006 = vmatmul.mubr.f32.gmra.mxu0 %v2880
    %v3007 = vpop.f32.mrf.mxu0
    %v3008 = vadd.f32 %v2856, %v3007
    %v3009 = vpop.f32.mrf.mxu0
    %3010 = vmatprep.mubr.f32.mxu0 0.0
    %3011 = vmatmul.mubr.f32.gmra.mxu0 %v2883
    %v3012 = vpop.f32.mrf.mxu0
    %v3013 = vadd.f32 %v2856, %v3012
    %v3014 = vpop.f32.mrf.mxu0
    %3015 = vmatprep.mubr.f32.mxu0 0.0
    %3016 = vmatmul.mubr.f32.gmra.mxu0 %v2886
    %v3017 = vpop.f32.mrf.mxu0
    %v3018 = vadd.f32 %v2856, %v3017
    %v3019 = vpop.f32.mrf.mxu0
    %3020 = vmatprep.mubr.f32.mxu0 0.0
    %3021 = vmatmul.mubr.f32.gmra.mxu0 %v2889
    %v3022 = vpop.f32.mrf.mxu0
    %v3023 = vadd.f32 %v2856, %v3022
    %v3024 = vpop.f32.mrf.mxu0
    %3025 = vmatprep.mubr.f32.mxu0 0.0
    %3026 = vmatmul.mubr.f32.gmra.mxu0 %v2892
    %v3027 = vpop.f32.mrf.mxu0
    %v3028 = vadd.f32 %v2856, %v3027
    %v3029 = vpop.f32.mrf.mxu0
    %3030 = vmatprep.mubr.f32.mxu0 0.0
    %3031 = vmatmul.mubr.f32.gmra.mxu0 %v2895
    %v3032 = vpop.f32.mrf.mxu0
    %v3033 = vadd.f32 %v2856, %v3032
    %v3034 = vpop.f32.mrf.mxu0
    %3035 = vmatprep.mubr.f32.mxu0 0.0
    %3036 = vmatmul.mubr.f32.gmra.mxu0 %v2898
    %v3037 = vpop.f32.mrf.mxu0
    %v3038 = vadd.f32 %v2856, %v3037
    %v3039 = vpop.f32.mrf.mxu0
    %3040 = vmatprep.mubr.f32.mxu0 0.0
    %3041 = vmatmul.mubr.f32.gmra.mxu0 %v2901
    %v3042 = vpop.f32.mrf.mxu0
    %v3043 = vadd.f32 %v2856, %v3042
    %v3044 = vpop.f32.mrf.mxu0
    %3045 = vmatprep.mubr.f32.mxu0 0.0
    %3046 = vmatmul.mubr.f32.gmra.mxu0 %v2904
    %v3047 = vpop.f32.mrf.mxu0
    %v3048 = vadd.f32 %v2856, %v3047
    %v3049 = vpop.f32.mrf.mxu0
    %3050 = vdwg.mxu0
    %v3051 = vmax.f32 %v2973, 0.0
    %v3052 = vmax.f32 %v2978, 0.0
    %v3053 = vmax.f32 %v2983, 0.0
    %v3054 = vmax.f32 %v2988, 0.0
    %v3055 = vmax.f32 %v2993, 0.0
    %v3056 = vmax.f32 %v2998, 0.0
    %v3057 = vmax.f32 %v3003, 0.0
    %v3058 = vmax.f32 %v3008, 0.0
    %v3059 = vmax.f32 %v3013, 0.0
    %v3060 = vmax.f32 %v3018, 0.0
    %v3061 = vmax.f32 %v3023, 0.0
    %v3062 = vmax.f32 %v3028, 0.0
    %v3063 = vmax.f32 %v3033, 0.0
    %v3064 = vmax.f32 %v3038, 0.0
    %v3065 = vmax.f32 %v3043, 0.0
    %v3066 = vmax.f32 %v3048, 0.0
    %s3067 = scalar_lea.vmem %s9, 128
    %v3068 = vld [vmem:[%s3067] sm:$0xff]
    %v3069 = vld [vmem:[%s3067 + $0x8] sm:$0xff]
    %v3070 = vld [vmem:[%s3067 + $0x10] sm:$0xff]
    %v3071 = vld [vmem:[%s3067 + $0x18] sm:$0xff]
    %v3072 = vld [vmem:[%s3067 + $0x20] sm:$0xff]
    %v3073 = vld [vmem:[%s3067 + $0x28] sm:$0xff]
    %v3074 = vld [vmem:[%s3067 + $0x30] sm:$0xff]
    %v3075 = vld [vmem:[%s3067 + $0x38] sm:$0xff]
    %s3076 = scalar_lea.vmem %s10, 2
    %v3077 = vld [vmem:[%s3076] sm:$0x1]
    %v3079 = vlaneseq
    %v3080 = vshrl.u32 %v3079, 7
    %v3081 = vsub.s32 0, %v3080
    %v3082 = vrot.slane %v3077, %v3081
    %v3085 = vsel %vm1255, %v3051, 0
    %v3088 = vsel %vm1255, %v3052, 0
    %v3091 = vsel %vm1255, %v3053, 0
    %v3094 = vsel %vm1255, %v3054, 0
    %v3097 = vsel %vm1255, %v3055, 0
    %v3100 = vsel %vm1255, %v3056, 0
    %v3103 = vsel %vm1255, %v3057, 0
    %v3106 = vsel %vm1255, %v3058, 0
    %v3109 = vsel %vm1255, %v3059, 0
    %v3112 = vsel %vm1255, %v3060, 0
    %v3115 = vsel %vm1255, %v3061, 0
    %v3118 = vsel %vm1255, %v3062, 0
    %v3121 = vsel %vm1255, %v3063, 0
    %v3124 = vsel %vm1255, %v3064, 0
    %v3127 = vsel %vm1255, %v3065, 0
    %v3130 = vsel %vm1255, %v3066, 0
    %3132 = vmatprep.subr.mxu0 0.0
    %3133 = vmatpush1.msra.mxu0 0.0
    %3134 = vmatprep.subr.mxu0 0.0
    %3135 = vmatpush1.msra.mxu0 0.0
    %3136 = vmatprep.subr.mxu0 0.0
    %3137 = vmatpush1.msra.mxu0 0.0
    %3138 = vmatprep.subr.mxu0 0.0
    %3139 = vmatpush1.msra.mxu0 0.0
    %3140 = vmatprep.subr.mxu0 0.0
    %3141 = vmatpush1.msra.mxu0 0.0
    %3142 = vmatprep.subr.mxu0 0.0
    %3143 = vmatpush1.msra.mxu0 0.0
    %3144 = vmatprep.subr.mxu0 0.0
    %3145 = vmatpush1.msra.mxu0 0.0
    %3146 = vmatprep.subr.mxu0 0.0
    %3147 = vmatpush1.msra.mxu0 0.0
    %3148 = vmatprep.subr.mxu0 0.0
    %3149 = vmatpush1.msra.mxu0 %v3075
    %3150 = vmatprep.subr.mxu0 0.0
    %3151 = vmatpush1.msra.mxu0 %v3074
    %3152 = vmatprep.subr.mxu0 0.0
    %3153 = vmatpush1.msra.mxu0 %v3073
    %3154 = vmatprep.subr.mxu0 0.0
    %3155 = vmatpush1.msra.mxu0 %v3072
    %3156 = vmatprep.subr.mxu0 0.0
    %3157 = vmatpush1.msra.mxu0 %v3071
    %3158 = vmatprep.subr.mxu0 0.0
    %3159 = vmatpush1.msra.mxu0 %v3070
    %3160 = vmatprep.subr.mxu0 0.0
    %3161 = vmatpush1.msra.mxu0 %v3069
    %3162 = vmatprep.subr.mxu0 0.0
    %3163 = vmatpush1.msra.mxu0 %v3068
    %3164 = vmatprep.subr.mxu0 0.0
    %3165 = vmatpush2.msra.mxu0 0.0
    %3166 = vmatprep.subr.mxu0 0.0
    %3167 = vmatpush2.msra.mxu0 0.0
    %3168 = vmatprep.subr.mxu0 0.0
    %3169 = vmatpush2.msra.mxu0 0.0
    %3170 = vmatprep.subr.mxu0 0.0
    %3171 = vmatpush2.msra.mxu0 0.0
    %3172 = vmatprep.subr.mxu0 0.0
    %3173 = vmatpush2.msra.mxu0 0.0
    %3174 = vmatprep.subr.mxu0 0.0
    %3175 = vmatpush2.msra.mxu0 0.0
    %3176 = vmatprep.subr.mxu0 0.0
    %3177 = vmatpush2.msra.mxu0 0.0
    %3178 = vmatprep.subr.mxu0 0.0
    %3179 = vmatpush2.msra.mxu0 0.0
    %3180 = vmatprep.subr.mxu0 0.0
    %3181 = vmatpush2.msra.mxu0 0.0
    %3182 = vmatprep.subr.mxu0 0.0
    %3183 = vmatpush2.msra.mxu0 0.0
    %3184 = vmatprep.subr.mxu0 0.0
    %3185 = vmatpush2.msra.mxu0 0.0
    %3186 = vmatprep.subr.mxu0 0.0
    %3187 = vmatpush2.msra.mxu0 0.0
    %3188 = vmatprep.subr.mxu0 0.0
    %3189 = vmatpush2.msra.mxu0 0.0
    %3190 = vmatprep.subr.mxu0 0.0
    %3191 = vmatpush2.msra.mxu0 0.0
    %3192 = vmatprep.subr.mxu0 0.0
    %3193 = vmatpush2.msra.mxu0 0.0
    %3194 = vmatprep.subr.mxu0 0.0
    %3195 = vmatpush2.msra.mxu0 0.0
    %3196 = vmatprep.mubr.f32.mxu0 0.0
    %3197 = vmatmul.mubr.f32.gmra.mxu0 %v3085
    %v3198 = vpop.f32.mrf.mxu0
    %v3199 = vadd.f32 %v3082, %v3198
    %v3200 = vpop.f32.mrf.mxu0
    %3201 = vmatprep.mubr.f32.mxu0 0.0
    %3202 = vmatmul.mubr.f32.gmra.mxu0 %v3088
    %v3203 = vpop.f32.mrf.mxu0
    %v3204 = vadd.f32 %v3082, %v3203
    %v3205 = vpop.f32.mrf.mxu0
    %3206 = vmatprep.mubr.f32.mxu0 0.0
    %3207 = vmatmul.mubr.f32.gmra.mxu0 %v3091
    %v3208 = vpop.f32.mrf.mxu0
    %v3209 = vadd.f32 %v3082, %v3208
    %v3210 = vpop.f32.mrf.mxu0
    %3211 = vmatprep.mubr.f32.mxu0 0.0
    %3212 = vmatmul.mubr.f32.gmra.mxu0 %v3094
    %v3213 = vpop.f32.mrf.mxu0
    %v3214 = vadd.f32 %v3082, %v3213
    %v3215 = vpop.f32.mrf.mxu0
    %3216 = vmatprep.mubr.f32.mxu0 0.0
    %3217 = vmatmul.mubr.f32.gmra.mxu0 %v3097
    %v3218 = vpop.f32.mrf.mxu0
    %v3219 = vadd.f32 %v3082, %v3218
    %v3220 = vpop.f32.mrf.mxu0
    %3221 = vmatprep.mubr.f32.mxu0 0.0
    %3222 = vmatmul.mubr.f32.gmra.mxu0 %v3100
    %v3223 = vpop.f32.mrf.mxu0
    %v3224 = vadd.f32 %v3082, %v3223
    %v3225 = vpop.f32.mrf.mxu0
    %3226 = vmatprep.mubr.f32.mxu0 0.0
    %3227 = vmatmul.mubr.f32.gmra.mxu0 %v3103
    %v3228 = vpop.f32.mrf.mxu0
    %v3229 = vadd.f32 %v3082, %v3228
    %v3230 = vpop.f32.mrf.mxu0
    %3231 = vmatprep.mubr.f32.mxu0 0.0
    %3232 = vmatmul.mubr.f32.gmra.mxu0 %v3106
    %v3233 = vpop.f32.mrf.mxu0
    %v3234 = vadd.f32 %v3082, %v3233
    %v3235 = vpop.f32.mrf.mxu0
    %3236 = vmatprep.mubr.f32.mxu0 0.0
    %3237 = vmatmul.mubr.f32.gmra.mxu0 %v3109
    %v3238 = vpop.f32.mrf.mxu0
    %v3239 = vadd.f32 %v3082, %v3238
    %v3240 = vpop.f32.mrf.mxu0
    %3241 = vmatprep.mubr.f32.mxu0 0.0
    %3242 = vmatmul.mubr.f32.gmra.mxu0 %v3112
    %v3243 = vpop.f32.mrf.mxu0
    %v3244 = vadd.f32 %v3082, %v3243
    %v3245 = vpop.f32.mrf.mxu0
    %3246 = vmatprep.mubr.f32.mxu0 0.0
    %3247 = vmatmul.mubr.f32.gmra.mxu0 %v3115
    %v3248 = vpop.f32.mrf.mxu0
    %v3249 = vadd.f32 %v3082, %v3248
    %v3250 = vpop.f32.mrf.mxu0
    %3251 = vmatprep.mubr.f32.mxu0 0.0
    %3252 = vmatmul.mubr.f32.gmra.mxu0 %v3118
    %v3253 = vpop.f32.mrf.mxu0
    %v3254 = vadd.f32 %v3082, %v3253
    %v3255 = vpop.f32.mrf.mxu0
    %3256 = vmatprep.mubr.f32.mxu0 0.0
    %3257 = vmatmul.mubr.f32.gmra.mxu0 %v3121
    %v3258 = vpop.f32.mrf.mxu0
    %v3259 = vadd.f32 %v3082, %v3258
    %v3260 = vpop.f32.mrf.mxu0
    %3261 = vmatprep.mubr.f32.mxu0 0.0
    %3262 = vmatmul.mubr.f32.gmra.mxu0 %v3124
    %v3263 = vpop.f32.mrf.mxu0
    %v3264 = vadd.f32 %v3082, %v3263
    %v3265 = vpop.f32.mrf.mxu0
    %3266 = vmatprep.mubr.f32.mxu0 0.0
    %3267 = vmatmul.mubr.f32.gmra.mxu0 %v3127
    %v3268 = vpop.f32.mrf.mxu0
    %v3269 = vadd.f32 %v3082, %v3268
    %v3270 = vpop.f32.mrf.mxu0
    %3271 = vmatprep.mubr.f32.mxu0 0.0
    %3272 = vmatmul.mubr.f32.gmra.mxu0 %v3130
    %v3273 = vpop.f32.mrf.mxu0
    %v3274 = vadd.f32 %v3082, %v3273
    %v3275 = vpop.f32.mrf.mxu0
    %3276 = vdwg.mxu0
    %3277 = vmatprep.subr.mxu0 0.0
    %3278 = vmatpush1.msra.mxu0 %v3274
    %3279 = vmatprep.subr.mxu0 0.0
    %3280 = vmatpush1.msra.mxu0 %v3269
    %3281 = vmatprep.subr.mxu0 0.0
    %3282 = vmatpush1.msra.mxu0 %v3264
    %3283 = vmatprep.subr.mxu0 0.0
    %3284 = vmatpush1.msra.mxu0 %v3259
    %3285 = vmatprep.subr.mxu0 0.0
    %3286 = vmatpush1.msra.mxu0 %v3254
    %3287 = vmatprep.subr.mxu0 0.0
    %3288 = vmatpush1.msra.mxu0 %v3249
    %3289 = vmatprep.subr.mxu0 0.0
    %3290 = vmatpush1.msra.mxu0 %v3244
    %3291 = vmatprep.subr.mxu0 0.0
    %3292 = vmatpush1.msra.mxu0 %v3239
    %3293 = vmatprep.subr.mxu0 0.0
    %3294 = vmatpush1.msra.mxu0 %v3234
    %3295 = vmatprep.subr.mxu0 0.0
    %3296 = vmatpush1.msra.mxu0 %v3229
    %3297 = vmatprep.subr.mxu0 0.0
    %3298 = vmatpush1.msra.mxu0 %v3224
    %3299 = vmatprep.subr.mxu0 0.0
    %3300 = vmatpush1.msra.mxu0 %v3219
    %3301 = vmatprep.subr.mxu0 0.0
    %3302 = vmatpush1.msra.mxu0 %v3214
    %3303 = vmatprep.subr.mxu0 0.0
    %3304 = vmatpush1.msra.mxu0 %v3209
    %3305 = vmatprep.subr.mxu0 0.0
    %3306 = vmatpush1.msra.mxu0 %v3204
    %3307 = vmatprep.subr.mxu0 0.0
    %3308 = vmatpush1.msra.mxu0 %v3199
    %3309 = vmatprep.subr.mxu0 0.0
    %3310 = vmatpush2.msra.mxu0 0.0
    %3311 = vmatprep.subr.mxu0 0.0
    %3312 = vmatpush2.msra.mxu0 0.0
    %3313 = vmatprep.subr.mxu0 0.0
    %3314 = vmatpush2.msra.mxu0 0.0
    %3315 = vmatprep.subr.mxu0 0.0
    %3316 = vmatpush2.msra.mxu0 0.0
    %3317 = vmatprep.subr.mxu0 0.0
    %3318 = vmatpush2.msra.mxu0 0.0
    %3319 = vmatprep.subr.mxu0 0.0
    %3320 = vmatpush2.msra.mxu0 0.0
    %3321 = vmatprep.subr.mxu0 0.0
    %3322 = vmatpush2.msra.mxu0 0.0
    %3323 = vmatprep.subr.mxu0 0.0
    %3324 = vmatpush2.msra.mxu0 0.0
    %3325 = vmatprep.subr.mxu0 0.0
    %3326 = vmatpush2.msra.mxu0 0.0
    %3327 = vmatprep.subr.mxu0 0.0
    %3328 = vmatpush2.msra.mxu0 0.0
    %3329 = vmatprep.subr.mxu0 0.0
    %3330 = vmatpush2.msra.mxu0 0.0
    %3331 = vmatprep.subr.mxu0 0.0
    %3332 = vmatpush2.msra.mxu0 0.0
    %3333 = vmatprep.subr.mxu0 0.0
    %3334 = vmatpush2.msra.mxu0 0.0
    %3335 = vmatprep.subr.mxu0 0.0
    %3336 = vmatpush2.msra.mxu0 0.0
    %3337 = vmatprep.subr.mxu0 0.0
    %3338 = vmatpush2.msra.mxu0 0.0
    %3339 = vmatprep.subr.mxu0 0.0
    %3340 = vmatpush2.msra.mxu0 0.0
    %3341 = vmatprep.mubr.bf16.mxu0 0
    %3342 = vmatmul.mubr.bf16.gmra.mxu0 %v110
    %v3343 = vpop.f32.mrf.mxu0
    %v3344 = vadd.f32 0.0, %v3343
    %v3345 = vpop.f32.mrf.mxu0
    %v3346 = vpop.f32.mrf.mxu0
    %v3347 = vpop.f32.mrf.mxu0
    %3348 = vdwg.mxu0
    %v3349 = vld [vmem:[%s11] sm:$0xff]
    %v3350 = vld [vmem:[%s11 + $0x8] sm:$0xff]
    %v3351 = vld [vmem:[%s11 + $0x10] sm:$0xff]
    %v3352 = vld [vmem:[%s11 + $0x18] sm:$0xff]
    %v3353 = vld [vmem:[%s12] sm:$0x1]
    %v3355 = vlaneseq
    %v3356 = vshrl.u32 %v3355, 7
    %v3357 = vsub.s32 0, %v3356
    %v3358 = vrot.slane %v3353, %v3357
    %v3361 = vsel %vm1030, %v3344, 0
    %3363 = vmatprep.subr.mxu0 0.0
    %3364 = vmatpush1.msra.mxu0 0.0
    %3365 = vmatprep.subr.mxu0 0.0
    %3366 = vmatpush1.msra.mxu0 0.0
    %3367 = vmatprep.subr.mxu0 0.0
    %3368 = vmatpush1.msra.mxu0 0.0
    %3369 = vmatprep.subr.mxu0 0.0
    %3370 = vmatpush1.msra.mxu0 0.0
    %3371 = vmatprep.subr.mxu0 0.0
    %3372 = vmatpush1.msra.mxu0 0.0
    %3373 = vmatprep.subr.mxu0 0.0
    %3374 = vmatpush1.msra.mxu0 0.0
    %3375 = vmatprep.subr.mxu0 0.0
    %3376 = vmatpush1.msra.mxu0 0.0
    %3377 = vmatprep.subr.mxu0 0.0
    %3378 = vmatpush1.msra.mxu0 0.0
    %3379 = vmatprep.subr.mxu0 0.0
    %3380 = vmatpush1.msra.mxu0 0.0
    %3381 = vmatprep.subr.mxu0 0.0
    %3382 = vmatpush1.msra.mxu0 0.0
    %3383 = vmatprep.subr.mxu0 0.0
    %3384 = vmatpush1.msra.mxu0 0.0
    %3385 = vmatprep.subr.mxu0 0.0
    %3386 = vmatpush1.msra.mxu0 0.0
    %3387 = vmatprep.subr.mxu0 0.0
    %3388 = vmatpush1.msra.mxu0 %v3352
    %3389 = vmatprep.subr.mxu0 0.0
    %3390 = vmatpush1.msra.mxu0 %v3351
    %3391 = vmatprep.subr.mxu0 0.0
    %3392 = vmatpush1.msra.mxu0 %v3350
    %3393 = vmatprep.subr.mxu0 0.0
    %3394 = vmatpush1.msra.mxu0 %v3349
    %3395 = vmatprep.subr.mxu0 0.0
    %3396 = vmatpush2.msra.mxu0 0.0
    %3397 = vmatprep.subr.mxu0 0.0
    %3398 = vmatpush2.msra.mxu0 0.0
    %3399 = vmatprep.subr.mxu0 0.0
    %3400 = vmatpush2.msra.mxu0 0.0
    %3401 = vmatprep.subr.mxu0 0.0
    %3402 = vmatpush2.msra.mxu0 0.0
    %3403 = vmatprep.subr.mxu0 0.0
    %3404 = vmatpush2.msra.mxu0 0.0
    %3405 = vmatprep.subr.mxu0 0.0
    %3406 = vmatpush2.msra.mxu0 0.0
    %3407 = vmatprep.subr.mxu0 0.0
    %3408 = vmatpush2.msra.mxu0 0.0
    %3409 = vmatprep.subr.mxu0 0.0
    %3410 = vmatpush2.msra.mxu0 0.0
    %3411 = vmatprep.subr.mxu0 0.0
    %3412 = vmatpush2.msra.mxu0 0.0
    %3413 = vmatprep.subr.mxu0 0.0
    %3414 = vmatpush2.msra.mxu0 0.0
    %3415 = vmatprep.subr.mxu0 0.0
    %3416 = vmatpush2.msra.mxu0 0.0
    %3417 = vmatprep.subr.mxu0 0.0
    %3418 = vmatpush2.msra.mxu0 0.0
    %3419 = vmatprep.subr.mxu0 0.0
    %3420 = vmatpush2.msra.mxu0 0.0
    %3421 = vmatprep.subr.mxu0 0.0
    %3422 = vmatpush2.msra.mxu0 0.0
    %3423 = vmatprep.subr.mxu0 0.0
    %3424 = vmatpush2.msra.mxu0 0.0
    %3425 = vmatprep.subr.mxu0 0.0
    %3426 = vmatpush2.msra.mxu0 0.0
    %3427 = vmatprep.mubr.f32.mxu0 0.0
    %3428 = vmatmul.mubr.f32.gmra.mxu0 %v3361
    %v3429 = vpop.f32.mrf.mxu0
    %v3430 = vadd.f32 %v3358, %v3429
    %v3431 = vpop.f32.mrf.mxu0
    %3432 = vdwg.mxu0
    %3433 = vst [vmem:[#allocation2] sm:$0xff] %v3430
    // Predicated region
    $region54: #{tpu_custom_call.1} parent=1 // pred_check
      _
    $region55: #{tpu_custom_call.1} parent=1 // pred_check_branch
      %3435 = sbr.rel (0) target = $region57
    $region56: #{tpu_custom_call.1} parent=1 // pred_region
      %s3437 = ssub.s32 128, 128
      %3438 = vsyncadd [#allocation3], %s3437
      %s3440 = sshll.u32 [#allocation2], 4
      %s3441 = int_to_ptr.vmem [resolvable:$true] %s3440
      %3443 = dma.vmem_to_hbm [thread:$0]  %s3441, 128, %s13, [#allocation3]
    $region57: #{tpu_custom_call.1} parent=1 // pred_fallthru
      _
    // Predicated region
    $region58: #{tpu_custom_call.1} parent=1 // pred_check
      _
    $region59: #{tpu_custom_call.1} parent=1 // pred_check_branch
      %3445 = sbr.rel (0) target = $region61
    $region60: #{tpu_custom_call.1} parent=1 // pred_region
      %3446 = dma.done [#allocation3], 128
    $region61: #{tpu_custom_call.1} parent=1 // pred_fallthru
      _
    %3447 = vsyncpa [#allocation3], 1

</llo_original>
